<compile_context>
chip_gen: v7x
topology: tpu7x:2x2x1
jax: 0.10.0
libtpu: 0.0.40
codegen_flags: <defaults>
</compile_context>

<pallas_src>
import math
import functools

import jax
import jax.numpy as jnp
from jax import lax
from jax.experimental import pallas as pl
from jax.experimental.pallas import tpu as pltpu


# ----------------------------------------------------------------------------
# Small deterministic config (scaled-down GemmaConfig)
# ----------------------------------------------------------------------------
class Cfg:
    vocab_size = 256
    hidden_size = 128
    intermediate_size = 256
    num_hidden_layers = 2
    num_attention_heads = 2
    num_key_value_heads = 1
    head_dim = 64
    max_position_embeddings = 64
    rope_theta = 10000.0
    rms_norm_eps = 1e-6


def _lambda_init(layer_idx):
    # Matches reference: depth = layer_idx - 1 (layer 0 -> depth -1).
    depth = layer_idx - 1
    return 0.8 - 0.6 * math.exp(-0.3 * depth)


# ----------------------------------------------------------------------------
# Fused decoder-layer kernel (one pallas_call per layer)
# ----------------------------------------------------------------------------
def _decoder_layer_kernel(x_ref, lam_ref, ln1_ref, wqkv_ref, cos_ref, sin_ref,
                          subw_ref, wo_ref, ln2_ref, wgu_ref, wd_ref, o_ref,
                          *, H, KV, D, I, eps, input_scale):
    S = x_ref.shape[1]
    HD = H * D
    KD = KV * D
    n_rep = H // KV

    # Residual stream (sqrt(hidden_size) embedding scale folded in for layer 0
    # only — static python guard, so later layers emit no multiply).
    x = x_ref[0]
    if input_scale != 1.0:
        x = x * input_scale

    # --- input RMSNorm (Gemma style: (1 + w) scaling) ---
    h = x * lax.rsqrt(jnp.mean(x * x, axis=-1, keepdims=True) + eps)
    h = h * (1.0 + ln1_ref[...])                                  # (1, Hd) bcast

    # --- fused projection: columns are [Q | Q_rot | K | K_rot | V] ---
    # Q/Q_rot carry the folded 1/sqrt(D) scale; *_rot columns are the signed
    # rotate_half permutation folded into the weights at init, so RoPE below is
    # two full-width VPU FMAs with zero lane relayouts.
    qkv = jnp.dot(h, wqkv_ref[...], preferred_element_type=jnp.float32)

    cos_q = cos_ref[...]                                          # (S, H*D)
    sin_q = sin_ref[...]
    cos_k = cos_q[:, :KD]                                         # per-position, head-tiled
    sin_k = sin_q[:, :KD]

    q = qkv[:, :HD] * cos_q + qkv[:, HD:2 * HD] * sin_q           # RoPE'd, pre-scaled
    k = (qkv[:, 2 * HD:2 * HD + KD] * cos_k
         + qkv[:, 2 * HD + KD:2 * HD + 2 * KD] * sin_k)
    v = qkv[:, 2 * HD + 2 * KD:2 * HD + 3 * KD]

    one_minus_lf = 1.0 - lam_ref[0]                               # SMEM scalar
    subw = subw_ref[...]                                          # (1, D): subln_w*(1-lambda_init)

    # Causal additive mask for head-stacked rows: row r = (head r//S, token r%S).
    # TODO(synk): arbitrary external attention_mask (padding) not threaded into
    #             the fused kernel; only the causal prefill case.
    row_tok = lax.broadcasted_iota(jnp.int32, (n_rep * S, S), 0) % S
    col = lax.broadcasted_iota(jnp.int32, (n_rep * S, S), 1)
    bias = jnp.where(row_tok >= col, 0.0, -1e9).astype(jnp.float32)

    attn_out = jnp.zeros((S, x.shape[-1]), jnp.float32)
    for kv in range(KV):
        # Stack this kv-group's query heads on the sublane axis -> one score
        # matmul and one AV matmul per kv head (no repeat_kv materialization).
        q_stack = jnp.concatenate(
            [q[:, (kv * n_rep + r) * D:(kv * n_rep + r + 1) * D]
             for r in range(n_rep)], axis=0)                      # (n_rep*S, D)
        k_h = k[:, kv * D:(kv + 1) * D]                           # (S, D)
        v_h = v[:, kv * D:(kv + 1) * D]

        s = lax.dot_general(q_stack, k_h, (((1,), (1,)), ((), ())),
                            preferred_element_type=jnp.float32)   # (n_rep*S, S)
        # TODO(synk): torch.nan_to_num on scores elided (identity for finite
        #             f32 inputs); reinstate if NaN/inf inputs must be tolerated.
        s = s + bias
        s = s - jnp.max(s, axis=-1, keepdims=True)                # stable softmax
        p = jnp.exp(s)
        p = p / jnp.sum(p, axis=-1, keepdims=True)                # exact divide (f32 ref)

        a = jnp.dot(p, v_h, preferred_element_type=jnp.float32)   # (n_rep*S, D)
        # differential attention: attn - lambda_full*attn == attn*(1 - lambda_full)
        a = a * one_minus_lf
        # subln: plain RMSNorm over head_dim (each row is one (head, token) pair)
        a = a * lax.rsqrt(jnp.mean(a * a, axis=-1, keepdims=True) + 1e-5)
        a = a * subw                                              # weight * (1-lambda_init) folded

        # o_proj as per-head partial sums (absorbs the head/token layout change;
        # mathematically identical to concat(heads) @ Wo^T).
        for r in range(n_rep):
            hq = kv * n_rep + r
            attn_out = attn_out + jnp.dot(
                a[r * S:(r + 1) * S, :], wo_ref[hq * D:(hq + 1) * D, :],
                preferred_element_type=jnp.float32)

    x1 = x + attn_out

    # --- post-attention RMSNorm + fused SwiGLU MLP ---
    h2 = x1 * lax.rsqrt(jnp.mean(x1 * x1, axis=-1, keepdims=True) + eps)
    h2 = h2 * (1.0 + ln2_ref[...])
    gu = jnp.dot(h2, wgu_ref[...], preferred_element_type=jnp.float32)   # (S, 2I)
    g = gu[:, :I]
    u = gu[:, I:]
    # gelu(approximate='tanh')
    act = 0.5 * g * (1.0 + jnp.tanh(0.7978845608028654 * (g + 0.044715 * g * g * g)))
    mlp = jnp.dot(act * u, wd_ref[...], preferred_element_type=jnp.float32)

    o_ref[0] = x1 + mlp


def decoder_layer(p, cfg, x, cos_t, sin_t, lambda_full, input_scale):
    B, S, Hd = x.shape
    H, KV, D, I = (cfg.num_attention_heads, cfg.num_key_value_heads,
                   cfg.head_dim, cfg.intermediate_size)
    HD, KD = H * D, KV * D
    qkv_out = 2 * HD + 3 * KD

    kernel = functools.partial(
        _decoder_layer_kernel, H=H, KV=KV, D=D, I=I, eps=cfg.rms_norm_eps,
        input_scale=input_scale)

    # TODO(synk): at real Gemma sizes, K/N-tile the weight BlockSpecs and mark
    #             grid-invariant weights pipeline_mode=pl.Buffered(1) to stay
    #             inside v7x's 64 MiB VMEM.
    return pl.pallas_call(
        kernel,
        grid=(B,),
        out_shape=jax.ShapeDtypeStruct((B, S, Hd), jnp.float32),
        in_specs=[
            pl.BlockSpec((1, S, Hd), lambda b: (b, 0, 0)),      # hidden states
            pl.BlockSpec(memory_space=pltpu.MemorySpace.SMEM),  # lambda_full scalar
            pl.BlockSpec((1, Hd), lambda b: (0, 0)),            # input_layernorm w
            pl.BlockSpec((Hd, qkv_out), lambda b: (0, 0)),      # [Q|Qrot|K|Krot|V] (in,out)
            pl.BlockSpec((S, HD), lambda b: (0, 0)),            # cos table (batch-invariant)
            pl.BlockSpec((S, HD), lambda b: (0, 0)),            # sin table (batch-invariant)
            pl.BlockSpec((1, D), lambda b: (0, 0)),             # subln_w * (1-lambda_init)
            pl.BlockSpec((HD, Hd), lambda b: (0, 0)),           # Wo^T (in,out)
            pl.BlockSpec((1, Hd), lambda b: (0, 0)),            # post_attn ln w
            pl.BlockSpec((Hd, 2 * I), lambda b: (0, 0)),        # [gate|up]^T (in,out)
            pl.BlockSpec((I, Hd), lambda b: (0, 0)),            # Wdown^T (in,out)
        ],
        out_specs=pl.BlockSpec((1, S, Hd), lambda b: (b, 0, 0)),
        compiler_params=pltpu.CompilerParams(
            dimension_semantics=("parallel",)),
    )(x, lambda_full, p['input_ln'], p['wqkv_t'], cos_t, sin_t, p['subw'],
      p['wo_t'], p['post_ln'], p['wgu_t'], p['wd_t'])


# ----------------------------------------------------------------------------
# Final norm + lm_head kernel
# ----------------------------------------------------------------------------
def _final_head_kernel(x_ref, lnf_ref, wlm_ref, o_ref, *, eps):
    x = x_ref[0]
    h = x * lax.rsqrt(jnp.mean(x * x, axis=-1, keepdims=True) + eps)
    h = h * (1.0 + lnf_ref[...])
    o_ref[0] = jnp.dot(h, wlm_ref[...], preferred_element_type=jnp.float32)


def lm_head_call(params, cfg, x):
    # TODO(synk): at real Gemma sizes (vocab 257k), tile over an (M, N, K) grid
    #             with a VMEM f32 accumulator instead of full-array BlockSpecs.
    B, S, Hd = x.shape
    V = cfg.vocab_size
    kernel = functools.partial(_final_head_kernel, eps=cfg.rms_norm_eps)
    return pl.pallas_call(
        kernel,
        grid=(B,),
        out_shape=jax.ShapeDtypeStruct((B, S, V), jnp.float32),
        in_specs=[
            pl.BlockSpec((1, S, Hd), lambda b: (b, 0, 0)),
            pl.BlockSpec((1, Hd), lambda b: (0, 0)),
            pl.BlockSpec((Hd, V), lambda b: (0, 0)),
        ],
        out_specs=pl.BlockSpec((1, S, V), lambda b: (b, 0, 0)),
        compiler_params=pltpu.CompilerParams(
            dimension_semantics=("parallel",)),
    )(x, params['final_norm'], params['lm_head_t'])


# ----------------------------------------------------------------------------
# JAX glue: RoPE tables + model composition
# ----------------------------------------------------------------------------
def rope_tables(position_ids, head_dim, base, num_q_heads):
    # Tables are batch-invariant here (positions identical across batch rows).
    # TODO(synk): per-batch position_ids would need a batch-indexed BlockSpec.
    pos = position_ids[0].astype(jnp.float32)                                  # (S,)
    inv_freq = 1.0 / (base ** (jnp.arange(0, head_dim, 2, dtype=jnp.float32) / head_dim))
    freqs = pos[:, None] * inv_freq[None, :]                                   # (S, D/2)
    emb = jnp.concatenate([freqs, freqs], axis=-1)                             # (S, D)
    cos = jnp.cos(emb)
    sin = jnp.sin(emb)
    # Tile per query head so the kernel's RoPE runs on a 128-lane-dense block.
    return jnp.tile(cos, (1, num_q_heads)), jnp.tile(sin, (1, num_q_heads))


def gemma_forward(params, cfg, inputs_embeds, position_ids):
    # TODO(synk): KVCache incremental decoding path not implemented (kv_cache=None).
    cos_t, sin_t = rope_tables(position_ids, cfg.head_dim, cfg.rope_theta,
                               cfg.num_attention_heads)
    h = inputs_embeds
    for li in range(cfg.num_hidden_layers):
        lp = params['layers'][li]
        lambda_init = _lambda_init(li)
        lam1 = jnp.exp(jnp.sum(lp['lambda_q1'] * lp['lambda_k1']))
        lam2 = jnp.exp(jnp.sum(lp['lambda_q2'] * lp['lambda_k2']))
        lambda_full = (lam1 - lam2 + lambda_init).reshape(1).astype(jnp.float32)
        input_scale = math.sqrt(cfg.hidden_size) if li == 0 else 1.0
        h = decoder_layer(lp, cfg, h, cos_t, sin_t, lambda_full, input_scale)
    return lm_head_call(params, cfg, h)


# ----------------------------------------------------------------------------
# Deterministic parameter init (synthetic, no checkpoint). Weights are stored
# pre-transposed / pre-fused ([in, out] layout); rotate_half and 1/sqrt(D) are
# folded into extra Q/K weight columns at init so the kernel does no relayouts.
# ----------------------------------------------------------------------------
def init_params(cfg, key):
    def nrm(k, shape, scale=0.02):
        return scale * jax.random.normal(k, shape, jnp.float32)

    H, KV, D, Hd, I = (cfg.num_attention_heads, cfg.num_key_value_heads,
                       cfg.head_dim, cfg.hidden_size, cfg.intermediate_size)
    half = D // 2
    sm_scale = 1.0 / math.sqrt(D)

    def rot_cols(w_t):
        # Columns of the weight composed with rotate_half: rotate_half(h@W) == h@W_rot.
        blocks = []
        for hh in range(w_t.shape[1] // D):
            blk = w_t[:, hh * D:(hh + 1) * D]
            blocks.append(jnp.concatenate([-blk[:, half:], blk[:, :half]], axis=1))
        return jnp.concatenate(blocks, axis=1)

    layers = []
    for li in range(cfg.num_hidden_layers):
        keys = jax.random.split(key, 13)
        key = keys[-1]
        q_t = nrm(keys[0], (H * D, Hd)).T * sm_scale          # (Hd, H*D), sm folded
        k_t = nrm(keys[1], (KV * D, Hd)).T                    # (Hd, KV*D)
        v_t = nrm(keys[2], (KV * D, Hd)).T
        o_t = nrm(keys[3], (Hd, H * D)).T                     # (H*D, Hd)
        g_w = nrm(keys[4], (I, Hd))
        u_w = nrm(keys[5], (I, Hd))
        d_t = nrm(keys[6], (Hd, I)).T                         # (I, Hd)
        lambda_init = _lambda_init(li)
        layers.append(dict(
            wqkv_t=jnp.concatenate(
                [q_t, rot_cols(q_t), k_t, rot_cols(k_t), v_t], axis=1),
            wo_t=o_t,
            wgu_t=jnp.concatenate([g_w, u_w], axis=0).T,      # (Hd, 2I)
            wd_t=d_t,
            input_ln=jnp.zeros((1, Hd), jnp.float32),
            post_ln=jnp.zeros((1, Hd), jnp.float32),
            # subln weight (ones) pre-multiplied by (1 - lambda_init)
            subw=(1.0 - lambda_init) * jnp.ones((1, D), jnp.float32),
            lambda_q1=0.1 * jax.random.normal(keys[7], (D,), jnp.float32),
            lambda_k1=0.1 * jax.random.normal(keys[8], (D,), jnp.float32),
            lambda_q2=0.1 * jax.random.normal(keys[9], (D,), jnp.float32),
            lambda_k2=0.1 * jax.random.normal(keys[10], (D,), jnp.float32),
        ))
    k1, k2 = jax.random.split(key)
    return dict(
        layers=layers,
        final_norm=jnp.zeros((1, Hd), jnp.float32),
        lm_head_t=nrm(k1, (cfg.vocab_size, Hd)).T,            # (Hd, V)
    ), k2


# ----------------------------------------------------------------------------
if __name__ == "__main__":
    cfg = Cfg()
    B, S = 2, 8

    key = jax.random.PRNGKey(0)
    params, key = init_params(cfg, key)

    inputs_embeds = jax.random.normal(key, (B, S, cfg.hidden_size), jnp.float32)
    position_ids = jnp.broadcast_to(jnp.arange(S, dtype=jnp.int32)[None], (B, S))

    fwd = jax.jit(functools.partial(gemma_forward, params, cfg))
    logits = fwd(inputs_embeds, position_ids)
    jax.block_until_ready(logits)

    assert logits.shape == (B, S, cfg.vocab_size)
    assert logits.dtype == jnp.float32
    assert bool(jnp.all(jnp.isfinite(logits)))
    print("KERNEL_OK")
</pallas_src>

<mosaic_0001>
module attributes {stable_mosaic.version = 11 : i64} {
  func.func @_final_head_kernel(%arg0: i32, %arg1: memref<1x8x128xf32, #tpu.memory_space<vmem>>, %arg2: memref<1x128xf32, #tpu.memory_space<vmem>>, %arg3: memref<128x256xf32, #tpu.memory_space<vmem>>, %arg4: memref<1x8x256xf32, #tpu.memory_space<vmem>>) attributes {dimension_semantics = [#tpu.dimension_semantics<parallel>], iteration_bounds = array<i64: 2>, scalar_prefetch = 0 : i64, scratch_operands = 0 : i64, tpu.core_type = #tpu.core_type<tc>, window_params = [{transform_indices = @transform_0, window_bounds = array<i64: 1, 8, 128>}, {pipeline_mode = #tpu.pipeline_mode<synchronous>, transform_indices = @transform_1, window_bounds = array<i64: 1, 128>}, {pipeline_mode = #tpu.pipeline_mode<synchronous>, transform_indices = @transform_2, window_bounds = array<i64: 128, 256>}, {transform_indices = @transform_3, window_bounds = array<i64: 1, 8, 256>}]} {
    %c0 = arith.constant 0 : index
    %c0_0 = arith.constant 0 : index
    %c0_1 = arith.constant 0 : index
    %0 = vector.load %arg1[%c0, %c0_0, %c0_1] : memref<1x8x128xf32, #tpu.memory_space<vmem>>, vector<1x8x128xf32>
    %1 = vector.shape_cast %0 : vector<1x8x128xf32> to vector<8x128xf32>
    %2 = arith.mulf %1, %1 : vector<8x128xf32>
    %cst = arith.constant dense<0.000000e+00> : vector<8xf32>
    %3 = vector.multi_reduction <add>, %2, %cst [1] : vector<8x128xf32> to vector<8xf32>
    %4 = vector.shape_cast %3 : vector<8xf32> to vector<8x1xf32>
    %cst_2 = arith.constant 1.280000e+02 : f32
    %5 = vector.broadcast %cst_2 : f32 to vector<8x1xf32>
    %6 = arith.divf %4, %5 : vector<8x1xf32>
    %cst_3 = arith.constant 9.99999997E-7 : f32
    %7 = vector.broadcast %cst_3 : f32 to vector<8x1xf32>
    %8 = arith.addf %6, %7 : vector<8x1xf32>
    %9 = math.rsqrt %8 : vector<8x1xf32>
    %10 = vector.broadcast %9 : vector<8x1xf32> to vector<8x128xf32>
    %11 = arith.mulf %1, %10 : vector<8x128xf32>
    %c0_4 = arith.constant 0 : index
    %c0_5 = arith.constant 0 : index
    %12 = vector.load %arg2[%c0_4, %c0_5] : memref<1x128xf32, #tpu.memory_space<vmem>>, vector<1x128xf32>
    %cst_6 = arith.constant 1.000000e+00 : f32
    %13 = vector.broadcast %cst_6 : f32 to vector<1x128xf32>
    %14 = arith.addf %13, %12 : vector<1x128xf32>
    %15 = vector.broadcast %14 : vector<1x128xf32> to vector<8x128xf32>
    %16 = arith.mulf %11, %15 : vector<8x128xf32>
    %c0_7 = arith.constant 0 : index
    %c0_8 = arith.constant 0 : index
    %17 = vector.load %arg3[%c0_7, %c0_8] : memref<128x256xf32, #tpu.memory_space<vmem>>, vector<128x256xf32>
    %cst_9 = arith.constant dense<0.000000e+00> : vector<8x256xf32>
    %18 = tpu.matmul %16, %17, %cst_9 {dimension_numbers = #tpu.dot_dimension_numbers<[1], [0], [0], [1], [0, 0, 1, 1], [], []>} : vector<8x128xf32>, vector<128x256xf32>, vector<8x256xf32> -> vector<8x256xf32>
    %c0_10 = arith.constant 0 : index
    %c0_11 = arith.constant 0 : index
    %c0_12 = arith.constant 0 : index
    %19 = vector.load %arg4[%c0_10, %c0_11, %c0_12] : memref<1x8x256xf32, #tpu.memory_space<vmem>>, vector<1x8x256xf32>
    %20 = vector.shape_cast %19 : vector<1x8x256xf32> to vector<8x256xf32>
    %21 = vector.shape_cast %18 : vector<8x256xf32> to vector<1x8x256xf32>
    tpu.vector_store %arg4[%c0_10, %c0_11, %c0_12], %21 {strides = array<i32>} : memref<1x8x256xf32, #tpu.memory_space<vmem>>, vector<1x8x256xf32>,
    return
  }
  func.func @transform_0(%arg0: i32) -> (i32, i32, i32) {
    %c0_i32 = arith.constant 0 : i32
    %c0_i32_0 = arith.constant 0 : i32
    %c0_i32_1 = arith.constant 0 : i32
    return %arg0, %c0_i32, %c0_i32_0 : i32, i32, i32
  }
  func.func @transform_1(%arg0: i32) -> (i32, i32) {
    %c0_i32 = arith.constant 0 : i32
    %c0_i32_0 = arith.constant 0 : i32
    %c0_i32_1 = arith.constant 0 : i32
    return %c0_i32, %c0_i32_0 : i32, i32
  }
  func.func @transform_2(%arg0: i32) -> (i32, i32) {
    %c0_i32 = arith.constant 0 : i32
    %c0_i32_0 = arith.constant 0 : i32
    %c0_i32_1 = arith.constant 0 : i32
    return %c0_i32, %c0_i32_0 : i32, i32
  }
  func.func @transform_3(%arg0: i32) -> (i32, i32, i32) {
    %c0_i32 = arith.constant 0 : i32
    %c0_i32_0 = arith.constant 0 : i32
    %c0_i32_1 = arith.constant 0 : i32
    return %arg0, %c0_i32, %c0_i32_0 : i32, i32, i32
  }
}

module attributes {stable_mosaic.version = 11 : i64} {
  func.func @_decoder_layer_kernel(%arg0: i32, %arg1: memref<1x8x128xf32, #tpu.memory_space<vmem>>, %arg2: memref<1xf32, #tpu.memory_space<smem>>, %arg3: memref<1x128xf32, #tpu.memory_space<vmem>>, %arg4: memref<128x448xf32, #tpu.memory_space<vmem>>, %arg5: memref<8x128xf32, #tpu.memory_space<vmem>>, %arg6: memref<8x128xf32, #tpu.memory_space<vmem>>, %arg7: memref<1x64xf32, #tpu.memory_space<vmem>>, %arg8: memref<128x128xf32, #tpu.memory_space<vmem>>, %arg9: memref<1x128xf32, #tpu.memory_space<vmem>>, %arg10: memref<128x512xf32, #tpu.memory_space<vmem>>, %arg11: memref<256x128xf32, #tpu.memory_space<vmem>>, %arg12: memref<1x8x128xf32, #tpu.memory_space<vmem>>) attributes {dimension_semantics = [#tpu.dimension_semantics<parallel>], iteration_bounds = array<i64: 2>, scalar_prefetch = 0 : i64, scratch_operands = 0 : i64, tpu.core_type = #tpu.core_type<tc>, window_params = [{transform_indices = @transform_0, window_bounds = array<i64: 1, 8, 128>}, {transform_indices = @transform_1, window_bounds = array<i64: 1>}, {pipeline_mode = #tpu.pipeline_mode<synchronous>, transform_indices = @transform_2, window_bounds = array<i64: 1, 128>}, {pipeline_mode = #tpu.pipeline_mode<synchronous>, transform_indices = @transform_3, window_bounds = array<i64: 128, 448>}, {pipeline_mode = #tpu.pipeline_mode<synchronous>, transform_indices = @transform_4, window_bounds = array<i64: 8, 128>}, {pipeline_mode = #tpu.pipeline_mode<synchronous>, transform_indices = @transform_5, window_bounds = array<i64: 8, 128>}, {pipeline_mode = #tpu.pipeline_mode<synchronous>, transform_indices = @transform_6, window_bounds = array<i64: 1, 64>}, {pipeline_mode = #tpu.pipeline_mode<synchronous>, transform_indices = @transform_7, window_bounds = array<i64: 128, 128>}, {pipeline_mode = #tpu.pipeline_mode<synchronous>, transform_indices = @transform_8, window_bounds = array<i64: 1, 128>}, {pipeline_mode = #tpu.pipeline_mode<synchronous>, transform_indices = @transform_9, window_bounds = array<i64: 128, 512>}, {pipeline_mode = #tpu.pipeline_mode<synchronous>, transform_indices = @transform_10, window_bounds = array<i64: 256, 128>}, {transform_indices = @transform_11, window_bounds = array<i64: 1, 8, 128>}]} {
    %c0 = arith.constant 0 : index
    %c0_0 = arith.constant 0 : index
    %c0_1 = arith.constant 0 : index
    %0 = vector.load %arg1[%c0, %c0_0, %c0_1] : memref<1x8x128xf32, #tpu.memory_space<vmem>>, vector<1x8x128xf32>
    %1 = vector.shape_cast %0 : vector<1x8x128xf32> to vector<8x128xf32>
    %cst = arith.constant 11.3137083 : f32
    %2 = vector.broadcast %cst : f32 to vector<8x128xf32>
    %3 = arith.mulf %1, %2 : vector<8x128xf32>
    %4 = arith.mulf %3, %3 : vector<8x128xf32>
    %cst_2 = arith.constant dense<0.000000e+00> : vector<8xf32>
    %5 = vector.multi_reduction <add>, %4, %cst_2 [1] : vector<8x128xf32> to vector<8xf32>
    %6 = vector.shape_cast %5 : vector<8xf32> to vector<8x1xf32>
    %cst_3 = arith.constant 1.280000e+02 : f32
    %7 = vector.broadcast %cst_3 : f32 to vector<8x1xf32>
    %8 = arith.divf %6, %7 : vector<8x1xf32>
    %cst_4 = arith.constant 9.99999997E-7 : f32
    %9 = vector.broadcast %cst_4 : f32 to vector<8x1xf32>
    %10 = arith.addf %8, %9 : vector<8x1xf32>
    %11 = math.rsqrt %10 : vector<8x1xf32>
    %12 = vector.broadcast %11 : vector<8x1xf32> to vector<8x128xf32>
    %13 = arith.mulf %3, %12 : vector<8x128xf32>
    %c0_5 = arith.constant 0 : index
    %c0_6 = arith.constant 0 : index
    %14 = vector.load %arg3[%c0_5, %c0_6] : memref<1x128xf32, #tpu.memory_space<vmem>>, vector<1x128xf32>
    %cst_7 = arith.constant 1.000000e+00 : f32
    %15 = vector.broadcast %cst_7 : f32 to vector<1x128xf32>
    %16 = arith.addf %15, %14 : vector<1x128xf32>
    %17 = vector.broadcast %16 : vector<1x128xf32> to vector<8x128xf32>
    %18 = arith.mulf %13, %17 : vector<8x128xf32>
    %c0_8 = arith.constant 0 : index
    %c0_9 = arith.constant 0 : index
    %19 = vector.load %arg4[%c0_8, %c0_9] : memref<128x448xf32, #tpu.memory_space<vmem>>, vector<128x448xf32>
    %cst_10 = arith.constant dense<0.000000e+00> : vector<8x448xf32>
    %20 = tpu.matmul %18, %19, %cst_10 {dimension_numbers = #tpu.dot_dimension_numbers<[1], [0], [0], [1], [0, 0, 1, 1], [], []>} : vector<8x128xf32>, vector<128x448xf32>, vector<8x448xf32> -> vector<8x448xf32>
    %c0_11 = arith.constant 0 : index
    %c0_12 = arith.constant 0 : index
    %21 = vector.load %arg5[%c0_11, %c0_12] : memref<8x128xf32, #tpu.memory_space<vmem>>, vector<8x128xf32>
    %c0_13 = arith.constant 0 : index
    %c0_14 = arith.constant 0 : index
    %22 = vector.load %arg6[%c0_13, %c0_14] : memref<8x128xf32, #tpu.memory_space<vmem>>, vector<8x128xf32>
    %23 = vector.extract_strided_slice %21 {offsets = [0, 0], sizes = [8, 64], strides = [1, 1]} : vector<8x128xf32> to vector<8x64xf32>
    %24 = vector.extract_strided_slice %22 {offsets = [0, 0], sizes = [8, 64], strides = [1, 1]} : vector<8x128xf32> to vector<8x64xf32>
    %25 = vector.extract_strided_slice %20 {offsets = [0, 0], sizes = [8, 128], strides = [1, 1]} : vector<8x448xf32> to vector<8x128xf32>
    %26 = arith.mulf %25, %21 : vector<8x128xf32>
    %27 = vector.extract_strided_slice %20 {offsets = [0, 128], sizes = [8, 128], strides = [1, 1]} : vector<8x448xf32> to vector<8x128xf32>
    %28 = arith.mulf %27, %22 : vector<8x128xf32>
    %29 = arith.addf %26, %28 : vector<8x128xf32>
    %30 = vector.extract_strided_slice %20 {offsets = [0, 256], sizes = [8, 64], strides = [1, 1]} : vector<8x448xf32> to vector<8x64xf32>
    %31 = arith.mulf %30, %23 : vector<8x64xf32>
    %32 = vector.extract_strided_slice %20 {offsets = [0, 320], sizes = [8, 64], strides = [1, 1]} : vector<8x448xf32> to vector<8x64xf32>
    %33 = arith.mulf %32, %24 : vector<8x64xf32>
    %34 = arith.addf %31, %33 : vector<8x64xf32>
    %35 = vector.extract_strided_slice %20 {offsets = [0, 384], sizes = [8, 64], strides = [1, 1]} : vector<8x448xf32> to vector<8x64xf32>
    %c0_15 = arith.constant 0 : index
    %36 = memref.load %arg2[%c0_15] : memref<1xf32, #tpu.memory_space<smem>>
    %cst_16 = arith.constant 1.000000e+00 : f32
    %37 = arith.subf %cst_16, %36 : f32
    %c0_17 = arith.constant 0 : index
    %c0_18 = arith.constant 0 : index
    %38 = vector.load %arg7[%c0_17, %c0_18] : memref<1x64xf32, #tpu.memory_space<vmem>>, vector<1x64xf32>
    %39 = tpu.iota {dimensions = array<i32: 0>} : vector<16x8xi32>
    %c8_i32 = arith.constant 8 : i32
    %c0_i32 = arith.constant 0 : i32
    %40 = arith.cmpi eq, %c8_i32, %c0_i32 : i32
    %c1_i32 = arith.constant 1 : i32
    %41 = arith.select %40, %c1_i32, %c8_i32 : i32
    %42 = vector.broadcast %41 : i32 to vector<16x8xi32>
    %43 = arith.remsi %39, %42 : vector<16x8xi32>
    %c0_i32_19 = arith.constant 0 : i32
    %44 = vector.broadcast %c0_i32_19 : i32 to vector<16x8xi32>
    %45 = arith.cmpi ne, %43, %44 : vector<16x8xi32>
    %c0_i32_20 = arith.constant 0 : i32
    %46 = vector.broadcast %c0_i32_20 : i32 to vector<16x8xi32>
    %47 = arith.cmpi slt, %43, %46 : vector<16x8xi32>
    %c0_i32_21 = arith.constant 0 : i32
    %48 = arith.cmpi slt, %41, %c0_i32_21 : i32
    %49 = vector.broadcast %48 : i1 to vector<16x8xi1>
    %50 = vector.broadcast %49 : vector<16x8xi1> to vector<16x8xi1>
    %51 = arith.xori %47, %50 : vector<16x8xi1>
    %52 = arith.andi %51, %45 : vector<16x8xi1>
    %53 = vector.broadcast %41 : i32 to vector<16x8xi32>
    %54 = arith.addi %43, %53 : vector<16x8xi32>
    %55 = arith.select %52, %54, %43 : vector<16x8xi1>, vector<16x8xi32>
    %56 = tpu.iota {dimensions = array<i32: 1>} : vector<16x8xi32>
    %57 = arith.cmpi sge, %55, %56 : vector<16x8xi32>
    %cst_22 = arith.constant 0.000000e+00 : f32
    %cst_23 = arith.constant -1.000000e+09 : f32
    %58 = vector.broadcast %cst_22 : f32 to vector<16x8xf32>
    %59 = vector.broadcast %cst_23 : f32 to vector<16x8xf32>
    %60 = arith.select %57, %58, %59 : vector<16x8xi1>, vector<16x8xf32>
    %cst_24 = arith.constant 0.000000e+00 : f32
    %61 = vector.broadcast %cst_24 : f32 to vector<8x128xf32>
    %62 = vector.extract_strided_slice %29 {offsets = [0, 0], sizes = [8, 64], strides = [1, 1]} : vector<8x128xf32> to vector<8x64xf32>
    %63 = vector.extract_strided_slice %29 {offsets = [0, 64], sizes = [8, 64], strides = [1, 1]} : vector<8x128xf32> to vector<8x64xf32>
    %64 = tpu.concatenate %62, %63 in 0 : vector<8x64xf32>, vector<8x64xf32> -> vector<16x64xf32>
    %cst_25 = arith.constant dense<0.000000e+00> : vector<16x8xf32>
    %65 = tpu.matmul %64, %34, %cst_25 {dimension_numbers = #tpu.dot_dimension_numbers<[1], [1], [0], [0], [0, 0, 1, 0], [], []>} : vector<16x64xf32>, vector<8x64xf32>, vector<16x8xf32> -> vector<16x8xf32>
    %66 = arith.addf %65, %60 : vector<16x8xf32>
    %cst_26 = arith.constant dense<0xFF800000> : vector<16xf32>
    %67 = vector.multi_reduction <maximumf>, %66, %cst_26 [1] : vector<16x8xf32> to vector<16xf32>
    %68 = vector.shape_cast %67 : vector<16xf32> to vector<16x1xf32>
    %69 = vector.broadcast %68 : vector<16x1xf32> to vector<16x8xf32>
    %70 = arith.subf %66, %69 : vector<16x8xf32>
    %71 = math.exp %70 : vector<16x8xf32>
    %cst_27 = arith.constant dense<0.000000e+00> : vector<16xf32>
    %72 = vector.multi_reduction <add>, %71, %cst_27 [1] : vector<16x8xf32> to vector<16xf32>
    %73 = vector.shape_cast %72 : vector<16xf32> to vector<16x1xf32>
    %74 = vector.broadcast %73 : vector<16x1xf32> to vector<16x8xf32>
    %75 = arith.divf %71, %74 : vector<16x8xf32>
    %cst_28 = arith.constant dense<0.000000e+00> : vector<16x64xf32>
    %76 = tpu.matmul %75, %35, %cst_28 {dimension_numbers = #tpu.dot_dimension_numbers<[1], [0], [0], [1], [0, 0, 1, 1], [], []>} : vector<16x8xf32>, vector<8x64xf32>, vector<16x64xf32> -> vector<16x64xf32>
    %77 = vector.broadcast %37 : f32 to vector<16x64xf32>
    %78 = arith.mulf %76, %77 : vector<16x64xf32>
    %79 = arith.mulf %78, %78 : vector<16x64xf32>
    %cst_29 = arith.constant dense<0.000000e+00> : vector<16xf32>
    %80 = vector.multi_reduction <add>, %79, %cst_29 [1] : vector<16x64xf32> to vector<16xf32>
    %81 = vector.shape_cast %80 : vector<16xf32> to vector<16x1xf32>
    %cst_30 = arith.constant 6.400000e+01 : f32
    %82 = vector.broadcast %cst_30 : f32 to vector<16x1xf32>
    %83 = arith.divf %81, %82 : vector<16x1xf32>
    %cst_31 = arith.constant 9.99999974E-6 : f32
    %84 = vector.broadcast %cst_31 : f32 to vector<16x1xf32>
    %85 = arith.addf %83, %84 : vector<16x1xf32>
    %86 = math.rsqrt %85 : vector<16x1xf32>
    %87 = vector.broadcast %86 : vector<16x1xf32> to vector<16x64xf32>
    %88 = arith.mulf %78, %87 : vector<16x64xf32>
    %89 = vector.broadcast %38 : vector<1x64xf32> to vector<16x64xf32>
    %90 = arith.mulf %88, %89 : vector<16x64xf32>
    %91 = vector.extract_strided_slice %90 {offsets = [0, 0], sizes = [8, 64], strides = [1, 1]} : vector<16x64xf32> to vector<8x64xf32>
    %c0_32 = arith.constant 0 : index
    %c0_33 = arith.constant 0 : index
    %92 = vector.load %arg8[%c0_32, %c0_33] : memref<128x128xf32, #tpu.memory_space<vmem>>, vector<64x128xf32>
    %cst_34 = arith.constant dense<0.000000e+00> : vector<8x128xf32>
    %93 = tpu.matmul %91, %92, %cst_34 {dimension_numbers = #tpu.dot_dimension_numbers<[1], [0], [0], [1], [0, 0, 1, 1], [], []>} : vector<8x64xf32>, vector<64x128xf32>, vector<8x128xf32> -> vector<8x128xf32>
    %94 = arith.addf %61, %93 : vector<8x128xf32>
    %95 = vector.extract_strided_slice %90 {offsets = [8, 0], sizes = [8, 64], strides = [1, 1]} : vector<16x64xf32> to vector<8x64xf32>
    %c64 = arith.constant 64 : index
    %c0_35 = arith.constant 0 : index
    %96 = vector.load %arg8[%c64, %c0_35] : memref<128x128xf32, #tpu.memory_space<vmem>>, vector<64x128xf32>
    %cst_36 = arith.constant dense<0.000000e+00> : vector<8x128xf32>
    %97 = tpu.matmul %95, %96, %cst_36 {dimension_numbers = #tpu.dot_dimension_numbers<[1], [0], [0], [1], [0, 0, 1, 1], [], []>} : vector<8x64xf32>, vector<64x128xf32>, vector<8x128xf32> -> vector<8x128xf32>
    %98 = arith.addf %94, %97 : vector<8x128xf32>
    %99 = arith.addf %3, %98 : vector<8x128xf32>
    %100 = arith.mulf %99, %99 : vector<8x128xf32>
    %cst_37 = arith.constant dense<0.000000e+00> : vector<8xf32>
    %101 = vector.multi_reduction <add>, %100, %cst_37 [1] : vector<8x128xf32> to vector<8xf32>
    %102 = vector.shape_cast %101 : vector<8xf32> to vector<8x1xf32>
    %cst_38 = arith.constant 1.280000e+02 : f32
    %103 = vector.broadcast %cst_38 : f32 to vector<8x1xf32>
    %104 = arith.divf %102, %103 : vector<8x1xf32>
    %cst_39 = arith.constant 9.99999997E-7 : f32
    %105 = vector.broadcast %cst_39 : f32 to vector<8x1xf32>
    %106 = arith.addf %104, %105 : vector<8x1xf32>
    %107 = math.rsqrt %106 : vector<8x1xf32>
    %108 = vector.broadcast %107 : vector<8x1xf32> to vector<8x128xf32>
    %109 = arith.mulf %99, %108 : vector<8x128xf32>
    %c0_40 = arith.constant 0 : index
    %c0_41 = arith.constant 0 : index
    %110 = vector.load %arg9[%c0_40, %c0_41] : memref<1x128xf32, #tpu.memory_space<vmem>>, vector<1x128xf32>
    %cst_42 = arith.constant 1.000000e+00 : f32
    %111 = vector.broadcast %cst_42 : f32 to vector<1x128xf32>
    %112 = arith.addf %111, %110 : vector<1x128xf32>
    %113 = vector.broadcast %112 : vector<1x128xf32> to vector<8x128xf32>
    %114 = arith.mulf %109, %113 : vector<8x128xf32>
    %c0_43 = arith.constant 0 : index
    %c0_44 = arith.constant 0 : index
    %115 = vector.load %arg10[%c0_43, %c0_44] : memref<128x512xf32, #tpu.memory_space<vmem>>, vector<128x512xf32>
    %cst_45 = arith.constant dense<0.000000e+00> : vector<8x512xf32>
    %116 = tpu.matmul %114, %115, %cst_45 {dimension_numbers = #tpu.dot_dimension_numbers<[1], [0], [0], [1], [0, 0, 1, 1], [], []>} : vector<8x128xf32>, vector<128x512xf32>, vector<8x512xf32> -> vector<8x512xf32>
    %117 = vector.extract_strided_slice %116 {offsets = [0, 0], sizes = [8, 256], strides = [1, 1]} : vector<8x512xf32> to vector<8x256xf32>
    %118 = vector.extract_strided_slice %116 {offsets = [0, 256], sizes = [8, 256], strides = [1, 1]} : vector<8x512xf32> to vector<8x256xf32>
    %cst_46 = arith.constant 5.000000e-01 : f32
    %119 = vector.broadcast %cst_46 : f32 to vector<8x256xf32>
    %120 = arith.mulf %119, %117 : vector<8x256xf32>
    %cst_47 = arith.constant 4.471500e-02 : f32
    %121 = vector.broadcast %cst_47 : f32 to vector<8x256xf32>
    %122 = arith.mulf %121, %117 : vector<8x256xf32>
    %123 = arith.mulf %122, %117 : vector<8x256xf32>
    %124 = arith.mulf %123, %117 : vector<8x256xf32>
    %125 = arith.addf %117, %124 : vector<8x256xf32>
    %cst_48 = arith.constant 0.797884583 : f32
    %126 = vector.broadcast %cst_48 : f32 to vector<8x256xf32>
    %127 = arith.mulf %126, %125 : vector<8x256xf32>
    %128 = math.tanh %127 : vector<8x256xf32>
    %cst_49 = arith.constant 1.000000e+00 : f32
    %129 = vector.broadcast %cst_49 : f32 to vector<8x256xf32>
    %130 = arith.addf %129, %128 : vector<8x256xf32>
    %131 = arith.mulf %120, %130 : vector<8x256xf32>
    %132 = arith.mulf %131, %118 : vector<8x256xf32>
    %c0_50 = arith.constant 0 : index
    %c0_51 = arith.constant 0 : index
    %133 = vector.load %arg11[%c0_50, %c0_51] : memref<256x128xf32, #tpu.memory_space<vmem>>, vector<256x128xf32>
    %cst_52 = arith.constant dense<0.000000e+00> : vector<8x128xf32>
    %134 = tpu.matmul %132, %133, %cst_52 {dimension_numbers = #tpu.dot_dimension_numbers<[1], [0], [0], [1], [0, 0, 1, 1], [], []>} : vector<8x256xf32>, vector<256x128xf32>, vector<8x128xf32> -> vector<8x128xf32>
    %135 = arith.addf %99, %134 : vector<8x128xf32>
    %c0_53 = arith.constant 0 : index
    %c0_54 = arith.constant 0 : index
    %c0_55 = arith.constant 0 : index
    %136 = vector.load %arg12[%c0_53, %c0_54, %c0_55] : memref<1x8x128xf32, #tpu.memory_space<vmem>>, vector<1x8x128xf32>
    %137 = vector.shape_cast %136 : vector<1x8x128xf32> to vector<8x128xf32>
    %138 = vector.shape_cast %135 : vector<8x128xf32> to vector<1x8x128xf32>
    tpu.vector_store %arg12[%c0_53, %c0_54, %c0_55], %138 {strides = array<i32>} : memref<1x8x128xf32, #tpu.memory_space<vmem>>, vector<1x8x128xf32>,
    return
  }
  func.func @transform_0(%arg0: i32) -> (i32, i32, i32) {
    %c0_i32 = arith.constant 0 : i32
    %c0_i32_0 = arith.constant 0 : i32
    %c0_i32_1 = arith.constant 0 : i32
    return %arg0, %c0_i32, %c0_i32_0 : i32, i32, i32
  }
  func.func @transform_1(%arg0: i32) -> i32 {
    %c0_i32 = arith.constant 0 : i32
    %c0_i32_0 = arith.constant 0 : i32
    return %c0_i32 : i32
  }
  func.func @transform_2(%arg0: i32) -> (i32, i32) {
    %c0_i32 = arith.constant 0 : i32
    %c0_i32_0 = arith.constant 0 : i32
    %c0_i32_1 = arith.constant 0 : i32
    return %c0_i32, %c0_i32_0 : i32, i32
  }
  func.func @transform_3(%arg0: i32) -> (i32, i32) {
    %c0_i32 = arith.constant 0 : i32
    %c0_i32_0 = arith.constant 0 : i32
    %c0_i32_1 = arith.constant 0 : i32
    return %c0_i32, %c0_i32_0 : i32, i32
  }
  func.func @transform_4(%arg0: i32) -> (i32, i32) {
    %c0_i32 = arith.constant 0 : i32
    %c0_i32_0 = arith.constant 0 : i32
    %c0_i32_1 = arith.constant 0 : i32
    return %c0_i32, %c0_i32_0 : i32, i32
  }
  func.func @transform_5(%arg0: i32) -> (i32, i32) {
    %c0_i32 = arith.constant 0 : i32
    %c0_i32_0 = arith.constant 0 : i32
    %c0_i32_1 = arith.constant 0 : i32
    return %c0_i32, %c0_i32_0 : i32, i32
  }
  func.func @transform_6(%arg0: i32) -> (i32, i32) {
    %c0_i32 = arith.constant 0 : i32
    %c0_i32_0 = arith.constant 0 : i32
    %c0_i32_1 = arith.constant 0 : i32
    return %c0_i32, %c0_i32_0 : i32, i32
  }
  func.func @transform_7(%arg0: i32) -> (i32, i32) {
    %c0_i32 = arith.constant 0 : i32
    %c0_i32_0 = arith.constant 0 : i32
    %c0_i32_1 = arith.constant 0 : i32
    return %c0_i32, %c0_i32_0 : i32, i32
  }
  func.func @transform_8(%arg0: i32) -> (i32, i32) {
    %c0_i32 = arith.constant 0 : i32
    %c0_i32_0 = arith.constant 0 : i32
    %c0_i32_1 = arith.constant 0 : i32
    return %c0_i32, %c0_i32_0 : i32, i32
  }
  func.func @transform_9(%arg0: i32) -> (i32, i32) {
    %c0_i32 = arith.constant 0 : i32
    %c0_i32_0 = arith.constant 0 : i32
    %c0_i32_1 = arith.constant 0 : i32
    return %c0_i32, %c0_i32_0 : i32, i32
  }
  func.func @transform_10(%arg0: i32) -> (i32, i32) {
    %c0_i32 = arith.constant 0 : i32
    %c0_i32_0 = arith.constant 0 : i32
    %c0_i32_1 = arith.constant 0 : i32
    return %c0_i32, %c0_i32_0 : i32, i32
  }
  func.func @transform_11(%arg0: i32) -> (i32, i32, i32) {
    %c0_i32 = arith.constant 0 : i32
    %c0_i32_0 = arith.constant 0 : i32
    %c0_i32_1 = arith.constant 0 : i32
    return %arg0, %c0_i32, %c0_i32_0 : i32, i32, i32
  }
}

module attributes {stable_mosaic.version = 11 : i64} {
  func.func @_decoder_layer_kernel(%arg0: i32, %arg1: memref<1x8x128xf32, #tpu.memory_space<vmem>>, %arg2: memref<1xf32, #tpu.memory_space<smem>>, %arg3: memref<1x128xf32, #tpu.memory_space<vmem>>, %arg4: memref<128x448xf32, #tpu.memory_space<vmem>>, %arg5: memref<8x128xf32, #tpu.memory_space<vmem>>, %arg6: memref<8x128xf32, #tpu.memory_space<vmem>>, %arg7: memref<1x64xf32, #tpu.memory_space<vmem>>, %arg8: memref<128x128xf32, #tpu.memory_space<vmem>>, %arg9: memref<1x128xf32, #tpu.memory_space<vmem>>, %arg10: memref<128x512xf32, #tpu.memory_space<vmem>>, %arg11: memref<256x128xf32, #tpu.memory_space<vmem>>, %arg12: memref<1x8x128xf32, #tpu.memory_space<vmem>>) attributes {dimension_semantics = [#tpu.dimension_semantics<parallel>], iteration_bounds = array<i64: 2>, scalar_prefetch = 0 : i64, scratch_operands = 0 : i64, tpu.core_type = #tpu.core_type<tc>, window_params = [{transform_indices = @transform_0, window_bounds = array<i64: 1, 8, 128>}, {transform_indices = @transform_1, window_bounds = array<i64: 1>}, {pipeline_mode = #tpu.pipeline_mode<synchronous>, transform_indices = @transform_2, window_bounds = array<i64: 1, 128>}, {pipeline_mode = #tpu.pipeline_mode<synchronous>, transform_indices = @transform_3, window_bounds = array<i64: 128, 448>}, {pipeline_mode = #tpu.pipeline_mode<synchronous>, transform_indices = @transform_4, window_bounds = array<i64: 8, 128>}, {pipeline_mode = #tpu.pipeline_mode<synchronous>, transform_indices = @transform_5, window_bounds = array<i64: 8, 128>}, {pipeline_mode = #tpu.pipeline_mode<synchronous>, transform_indices = @transform_6, window_bounds = array<i64: 1, 64>}, {pipeline_mode = #tpu.pipeline_mode<synchronous>, transform_indices = @transform_7, window_bounds = array<i64: 128, 128>}, {pipeline_mode = #tpu.pipeline_mode<synchronous>, transform_indices = @transform_8, window_bounds = array<i64: 1, 128>}, {pipeline_mode = #tpu.pipeline_mode<synchronous>, transform_indices = @transform_9, window_bounds = array<i64: 128, 512>}, {pipeline_mode = #tpu.pipeline_mode<synchronous>, transform_indices = @transform_10, window_bounds = array<i64: 256, 128>}, {transform_indices = @transform_11, window_bounds = array<i64: 1, 8, 128>}]} {
    %c0 = arith.constant 0 : index
    %c0_0 = arith.constant 0 : index
    %c0_1 = arith.constant 0 : index
    %0 = vector.load %arg1[%c0, %c0_0, %c0_1] : memref<1x8x128xf32, #tpu.memory_space<vmem>>, vector<1x8x128xf32>
    %1 = vector.shape_cast %0 : vector<1x8x128xf32> to vector<8x128xf32>
    %2 = arith.mulf %1, %1 : vector<8x128xf32>
    %cst = arith.constant dense<0.000000e+00> : vector<8xf32>
    %3 = vector.multi_reduction <add>, %2, %cst [1] : vector<8x128xf32> to vector<8xf32>
    %4 = vector.shape_cast %3 : vector<8xf32> to vector<8x1xf32>
    %cst_2 = arith.constant 1.280000e+02 : f32
    %5 = vector.broadcast %cst_2 : f32 to vector<8x1xf32>
    %6 = arith.divf %4, %5 : vector<8x1xf32>
    %cst_3 = arith.constant 9.99999997E-7 : f32
    %7 = vector.broadcast %cst_3 : f32 to vector<8x1xf32>
    %8 = arith.addf %6, %7 : vector<8x1xf32>
    %9 = math.rsqrt %8 : vector<8x1xf32>
    %10 = vector.broadcast %9 : vector<8x1xf32> to vector<8x128xf32>
    %11 = arith.mulf %1, %10 : vector<8x128xf32>
    %c0_4 = arith.constant 0 : index
    %c0_5 = arith.constant 0 : index
    %12 = vector.load %arg3[%c0_4, %c0_5] : memref<1x128xf32, #tpu.memory_space<vmem>>, vector<1x128xf32>
    %cst_6 = arith.constant 1.000000e+00 : f32
    %13 = vector.broadcast %cst_6 : f32 to vector<1x128xf32>
    %14 = arith.addf %13, %12 : vector<1x128xf32>
    %15 = vector.broadcast %14 : vector<1x128xf32> to vector<8x128xf32>
    %16 = arith.mulf %11, %15 : vector<8x128xf32>
    %c0_7 = arith.constant 0 : index
    %c0_8 = arith.constant 0 : index
    %17 = vector.load %arg4[%c0_7, %c0_8] : memref<128x448xf32, #tpu.memory_space<vmem>>, vector<128x448xf32>
    %cst_9 = arith.constant dense<0.000000e+00> : vector<8x448xf32>
    %18 = tpu.matmul %16, %17, %cst_9 {dimension_numbers = #tpu.dot_dimension_numbers<[1], [0], [0], [1], [0, 0, 1, 1], [], []>} : vector<8x128xf32>, vector<128x448xf32>, vector<8x448xf32> -> vector<8x448xf32>
    %c0_10 = arith.constant 0 : index
    %c0_11 = arith.constant 0 : index
    %19 = vector.load %arg5[%c0_10, %c0_11] : memref<8x128xf32, #tpu.memory_space<vmem>>, vector<8x128xf32>
    %c0_12 = arith.constant 0 : index
    %c0_13 = arith.constant 0 : index
    %20 = vector.load %arg6[%c0_12, %c0_13] : memref<8x128xf32, #tpu.memory_space<vmem>>, vector<8x128xf32>
    %21 = vector.extract_strided_slice %19 {offsets = [0, 0], sizes = [8, 64], strides = [1, 1]} : vector<8x128xf32> to vector<8x64xf32>
    %22 = vector.extract_strided_slice %20 {offsets = [0, 0], sizes = [8, 64], strides = [1, 1]} : vector<8x128xf32> to vector<8x64xf32>
    %23 = vector.extract_strided_slice %18 {offsets = [0, 0], sizes = [8, 128], strides = [1, 1]} : vector<8x448xf32> to vector<8x128xf32>
    %24 = arith.mulf %23, %19 : vector<8x128xf32>
    %25 = vector.extract_strided_slice %18 {offsets = [0, 128], sizes = [8, 128], strides = [1, 1]} : vector<8x448xf32> to vector<8x128xf32>
    %26 = arith.mulf %25, %20 : vector<8x128xf32>
    %27 = arith.addf %24, %26 : vector<8x128xf32>
    %28 = vector.extract_strided_slice %18 {offsets = [0, 256], sizes = [8, 64], strides = [1, 1]} : vector<8x448xf32> to vector<8x64xf32>
    %29 = arith.mulf %28, %21 : vector<8x64xf32>
    %30 = vector.extract_strided_slice %18 {offsets = [0, 320], sizes = [8, 64], strides = [1, 1]} : vector<8x448xf32> to vector<8x64xf32>
    %31 = arith.mulf %30, %22 : vector<8x64xf32>
    %32 = arith.addf %29, %31 : vector<8x64xf32>
    %33 = vector.extract_strided_slice %18 {offsets = [0, 384], sizes = [8, 64], strides = [1, 1]} : vector<8x448xf32> to vector<8x64xf32>
    %c0_14 = arith.constant 0 : index
    %34 = memref.load %arg2[%c0_14] : memref<1xf32, #tpu.memory_space<smem>>
    %cst_15 = arith.constant 1.000000e+00 : f32
    %35 = arith.subf %cst_15, %34 : f32
    %c0_16 = arith.constant 0 : index
    %c0_17 = arith.constant 0 : index
    %36 = vector.load %arg7[%c0_16, %c0_17] : memref<1x64xf32, #tpu.memory_space<vmem>>, vector<1x64xf32>
    %37 = tpu.iota {dimensions = array<i32: 0>} : vector<16x8xi32>
    %c8_i32 = arith.constant 8 : i32
    %c0_i32 = arith.constant 0 : i32
    %38 = arith.cmpi eq, %c8_i32, %c0_i32 : i32
    %c1_i32 = arith.constant 1 : i32
    %39 = arith.select %38, %c1_i32, %c8_i32 : i32
    %40 = vector.broadcast %39 : i32 to vector<16x8xi32>
    %41 = arith.remsi %37, %40 : vector<16x8xi32>
    %c0_i32_18 = arith.constant 0 : i32
    %42 = vector.broadcast %c0_i32_18 : i32 to vector<16x8xi32>
    %43 = arith.cmpi ne, %41, %42 : vector<16x8xi32>
    %c0_i32_19 = arith.constant 0 : i32
    %44 = vector.broadcast %c0_i32_19 : i32 to vector<16x8xi32>
    %45 = arith.cmpi slt, %41, %44 : vector<16x8xi32>
    %c0_i32_20 = arith.constant 0 : i32
    %46 = arith.cmpi slt, %39, %c0_i32_20 : i32
    %47 = vector.broadcast %46 : i1 to vector<16x8xi1>
    %48 = vector.broadcast %47 : vector<16x8xi1> to vector<16x8xi1>
    %49 = arith.xori %45, %48 : vector<16x8xi1>
    %50 = arith.andi %49, %43 : vector<16x8xi1>
    %51 = vector.broadcast %39 : i32 to vector<16x8xi32>
    %52 = arith.addi %41, %51 : vector<16x8xi32>
    %53 = arith.select %50, %52, %41 : vector<16x8xi1>, vector<16x8xi32>
    %54 = tpu.iota {dimensions = array<i32: 1>} : vector<16x8xi32>
    %55 = arith.cmpi sge, %53, %54 : vector<16x8xi32>
    %cst_21 = arith.constant 0.000000e+00 : f32
    %cst_22 = arith.constant -1.000000e+09 : f32
    %56 = vector.broadcast %cst_21 : f32 to vector<16x8xf32>
    %57 = vector.broadcast %cst_22 : f32 to vector<16x8xf32>
    %58 = arith.select %55, %56, %57 : vector<16x8xi1>, vector<16x8xf32>
    %cst_23 = arith.constant 0.000000e+00 : f32
    %59 = vector.broadcast %cst_23 : f32 to vector<8x128xf32>
    %60 = vector.extract_strided_slice %27 {offsets = [0, 0], sizes = [8, 64], strides = [1, 1]} : vector<8x128xf32> to vector<8x64xf32>
    %61 = vector.extract_strided_slice %27 {offsets = [0, 64], sizes = [8, 64], strides = [1, 1]} : vector<8x128xf32> to vector<8x64xf32>
    %62 = tpu.concatenate %60, %61 in 0 : vector<8x64xf32>, vector<8x64xf32> -> vector<16x64xf32>
    %cst_24 = arith.constant dense<0.000000e+00> : vector<16x8xf32>
    %63 = tpu.matmul %62, %32, %cst_24 {dimension_numbers = #tpu.dot_dimension_numbers<[1], [1], [0], [0], [0, 0, 1, 0], [], []>} : vector<16x64xf32>, vector<8x64xf32>, vector<16x8xf32> -> vector<16x8xf32>
    %64 = arith.addf %63, %58 : vector<16x8xf32>
    %cst_25 = arith.constant dense<0xFF800000> : vector<16xf32>
    %65 = vector.multi_reduction <maximumf>, %64, %cst_25 [1] : vector<16x8xf32> to vector<16xf32>
    %66 = vector.shape_cast %65 : vector<16xf32> to vector<16x1xf32>
    %67 = vector.broadcast %66 : vector<16x1xf32> to vector<16x8xf32>
    %68 = arith.subf %64, %67 : vector<16x8xf32>
    %69 = math.exp %68 : vector<16x8xf32>
    %cst_26 = arith.constant dense<0.000000e+00> : vector<16xf32>
    %70 = vector.multi_reduction <add>, %69, %cst_26 [1] : vector<16x8xf32> to vector<16xf32>
    %71 = vector.shape_cast %70 : vector<16xf32> to vector<16x1xf32>
    %72 = vector.broadcast %71 : vector<16x1xf32> to vector<16x8xf32>
    %73 = arith.divf %69, %72 : vector<16x8xf32>
    %cst_27 = arith.constant dense<0.000000e+00> : vector<16x64xf32>
    %74 = tpu.matmul %73, %33, %cst_27 {dimension_numbers = #tpu.dot_dimension_numbers<[1], [0], [0], [1], [0, 0, 1, 1], [], []>} : vector<16x8xf32>, vector<8x64xf32>, vector<16x64xf32> -> vector<16x64xf32>
    %75 = vector.broadcast %35 : f32 to vector<16x64xf32>
    %76 = arith.mulf %74, %75 : vector<16x64xf32>
    %77 = arith.mulf %76, %76 : vector<16x64xf32>
    %cst_28 = arith.constant dense<0.000000e+00> : vector<16xf32>
    %78 = vector.multi_reduction <add>, %77, %cst_28 [1] : vector<16x64xf32> to vector<16xf32>
    %79 = vector.shape_cast %78 : vector<16xf32> to vector<16x1xf32>
    %cst_29 = arith.constant 6.400000e+01 : f32
    %80 = vector.broadcast %cst_29 : f32 to vector<16x1xf32>
    %81 = arith.divf %79, %80 : vector<16x1xf32>
    %cst_30 = arith.constant 9.99999974E-6 : f32
    %82 = vector.broadcast %cst_30 : f32 to vector<16x1xf32>
    %83 = arith.addf %81, %82 : vector<16x1xf32>
    %84 = math.rsqrt %83 : vector<16x1xf32>
    %85 = vector.broadcast %84 : vector<16x1xf32> to vector<16x64xf32>
    %86 = arith.mulf %76, %85 : vector<16x64xf32>
    %87 = vector.broadcast %36 : vector<1x64xf32> to vector<16x64xf32>
    %88 = arith.mulf %86, %87 : vector<16x64xf32>
    %89 = vector.extract_strided_slice %88 {offsets = [0, 0], sizes = [8, 64], strides = [1, 1]} : vector<16x64xf32> to vector<8x64xf32>
    %c0_31 = arith.constant 0 : index
    %c0_32 = arith.constant 0 : index
    %90 = vector.load %arg8[%c0_31, %c0_32] : memref<128x128xf32, #tpu.memory_space<vmem>>, vector<64x128xf32>
    %cst_33 = arith.constant dense<0.000000e+00> : vector<8x128xf32>
    %91 = tpu.matmul %89, %90, %cst_33 {dimension_numbers = #tpu.dot_dimension_numbers<[1], [0], [0], [1], [0, 0, 1, 1], [], []>} : vector<8x64xf32>, vector<64x128xf32>, vector<8x128xf32> -> vector<8x128xf32>
    %92 = arith.addf %59, %91 : vector<8x128xf32>
    %93 = vector.extract_strided_slice %88 {offsets = [8, 0], sizes = [8, 64], strides = [1, 1]} : vector<16x64xf32> to vector<8x64xf32>
    %c64 = arith.constant 64 : index
    %c0_34 = arith.constant 0 : index
    %94 = vector.load %arg8[%c64, %c0_34] : memref<128x128xf32, #tpu.memory_space<vmem>>, vector<64x128xf32>
    %cst_35 = arith.constant dense<0.000000e+00> : vector<8x128xf32>
    %95 = tpu.matmul %93, %94, %cst_35 {dimension_numbers = #tpu.dot_dimension_numbers<[1], [0], [0], [1], [0, 0, 1, 1], [], []>} : vector<8x64xf32>, vector<64x128xf32>, vector<8x128xf32> -> vector<8x128xf32>
    %96 = arith.addf %92, %95 : vector<8x128xf32>
    %97 = arith.addf %1, %96 : vector<8x128xf32>
    %98 = arith.mulf %97, %97 : vector<8x128xf32>
    %cst_36 = arith.constant dense<0.000000e+00> : vector<8xf32>
    %99 = vector.multi_reduction <add>, %98, %cst_36 [1] : vector<8x128xf32> to vector<8xf32>
    %100 = vector.shape_cast %99 : vector<8xf32> to vector<8x1xf32>
    %cst_37 = arith.constant 1.280000e+02 : f32
    %101 = vector.broadcast %cst_37 : f32 to vector<8x1xf32>
    %102 = arith.divf %100, %101 : vector<8x1xf32>
    %cst_38 = arith.constant 9.99999997E-7 : f32
    %103 = vector.broadcast %cst_38 : f32 to vector<8x1xf32>
    %104 = arith.addf %102, %103 : vector<8x1xf32>
    %105 = math.rsqrt %104 : vector<8x1xf32>
    %106 = vector.broadcast %105 : vector<8x1xf32> to vector<8x128xf32>
    %107 = arith.mulf %97, %106 : vector<8x128xf32>
    %c0_39 = arith.constant 0 : index
    %c0_40 = arith.constant 0 : index
    %108 = vector.load %arg9[%c0_39, %c0_40] : memref<1x128xf32, #tpu.memory_space<vmem>>, vector<1x128xf32>
    %cst_41 = arith.constant 1.000000e+00 : f32
    %109 = vector.broadcast %cst_41 : f32 to vector<1x128xf32>
    %110 = arith.addf %109, %108 : vector<1x128xf32>
    %111 = vector.broadcast %110 : vector<1x128xf32> to vector<8x128xf32>
    %112 = arith.mulf %107, %111 : vector<8x128xf32>
    %c0_42 = arith.constant 0 : index
    %c0_43 = arith.constant 0 : index
    %113 = vector.load %arg10[%c0_42, %c0_43] : memref<128x512xf32, #tpu.memory_space<vmem>>, vector<128x512xf32>
    %cst_44 = arith.constant dense<0.000000e+00> : vector<8x512xf32>
    %114 = tpu.matmul %112, %113, %cst_44 {dimension_numbers = #tpu.dot_dimension_numbers<[1], [0], [0], [1], [0, 0, 1, 1], [], []>} : vector<8x128xf32>, vector<128x512xf32>, vector<8x512xf32> -> vector<8x512xf32>
    %115 = vector.extract_strided_slice %114 {offsets = [0, 0], sizes = [8, 256], strides = [1, 1]} : vector<8x512xf32> to vector<8x256xf32>
    %116 = vector.extract_strided_slice %114 {offsets = [0, 256], sizes = [8, 256], strides = [1, 1]} : vector<8x512xf32> to vector<8x256xf32>
    %cst_45 = arith.constant 5.000000e-01 : f32
    %117 = vector.broadcast %cst_45 : f32 to vector<8x256xf32>
    %118 = arith.mulf %117, %115 : vector<8x256xf32>
    %cst_46 = arith.constant 4.471500e-02 : f32
    %119 = vector.broadcast %cst_46 : f32 to vector<8x256xf32>
    %120 = arith.mulf %119, %115 : vector<8x256xf32>
    %121 = arith.mulf %120, %115 : vector<8x256xf32>
    %122 = arith.mulf %121, %115 : vector<8x256xf32>
    %123 = arith.addf %115, %122 : vector<8x256xf32>
    %cst_47 = arith.constant 0.797884583 : f32
    %124 = vector.broadcast %cst_47 : f32 to vector<8x256xf32>
    %125 = arith.mulf %124, %123 : vector<8x256xf32>
    %126 = math.tanh %125 : vector<8x256xf32>
    %cst_48 = arith.constant 1.000000e+00 : f32
    %127 = vector.broadcast %cst_48 : f32 to vector<8x256xf32>
    %128 = arith.addf %127, %126 : vector<8x256xf32>
    %129 = arith.mulf %118, %128 : vector<8x256xf32>
    %130 = arith.mulf %129, %116 : vector<8x256xf32>
    %c0_49 = arith.constant 0 : index
    %c0_50 = arith.constant 0 : index
    %131 = vector.load %arg11[%c0_49, %c0_50] : memref<256x128xf32, #tpu.memory_space<vmem>>, vector<256x128xf32>
    %cst_51 = arith.constant dense<0.000000e+00> : vector<8x128xf32>
    %132 = tpu.matmul %130, %131, %cst_51 {dimension_numbers = #tpu.dot_dimension_numbers<[1], [0], [0], [1], [0, 0, 1, 1], [], []>} : vector<8x256xf32>, vector<256x128xf32>, vector<8x128xf32> -> vector<8x128xf32>
    %133 = arith.addf %97, %132 : vector<8x128xf32>
    %c0_52 = arith.constant 0 : index
    %c0_53 = arith.constant 0 : index
    %c0_54 = arith.constant 0 : index
    %134 = vector.load %arg12[%c0_52, %c0_53, %c0_54] : memref<1x8x128xf32, #tpu.memory_space<vmem>>, vector<1x8x128xf32>
    %135 = vector.shape_cast %134 : vector<1x8x128xf32> to vector<8x128xf32>
    %136 = vector.shape_cast %133 : vector<8x128xf32> to vector<1x8x128xf32>
    tpu.vector_store %arg12[%c0_52, %c0_53, %c0_54], %136 {strides = array<i32>} : memref<1x8x128xf32, #tpu.memory_space<vmem>>, vector<1x8x128xf32>,
    return
  }
  func.func @transform_0(%arg0: i32) -> (i32, i32, i32) {
    %c0_i32 = arith.constant 0 : i32
    %c0_i32_0 = arith.constant 0 : i32
    %c0_i32_1 = arith.constant 0 : i32
    return %arg0, %c0_i32, %c0_i32_0 : i32, i32, i32
  }
  func.func @transform_1(%arg0: i32) -> i32 {
    %c0_i32 = arith.constant 0 : i32
    %c0_i32_0 = arith.constant 0 : i32
    return %c0_i32 : i32
  }
  func.func @transform_2(%arg0: i32) -> (i32, i32) {
    %c0_i32 = arith.constant 0 : i32
    %c0_i32_0 = arith.constant 0 : i32
    %c0_i32_1 = arith.constant 0 : i32
    return %c0_i32, %c0_i32_0 : i32, i32
  }
  func.func @transform_3(%arg0: i32) -> (i32, i32) {
    %c0_i32 = arith.constant 0 : i32
    %c0_i32_0 = arith.constant 0 : i32
    %c0_i32_1 = arith.constant 0 : i32
    return %c0_i32, %c0_i32_0 : i32, i32
  }
  func.func @transform_4(%arg0: i32) -> (i32, i32) {
    %c0_i32 = arith.constant 0 : i32
    %c0_i32_0 = arith.constant 0 : i32
    %c0_i32_1 = arith.constant 0 : i32
    return %c0_i32, %c0_i32_0 : i32, i32
  }
  func.func @transform_5(%arg0: i32) -> (i32, i32) {
    %c0_i32 = arith.constant 0 : i32
    %c0_i32_0 = arith.constant 0 : i32
    %c0_i32_1 = arith.constant 0 : i32
    return %c0_i32, %c0_i32_0 : i32, i32
  }
  func.func @transform_6(%arg0: i32) -> (i32, i32) {
    %c0_i32 = arith.constant 0 : i32
    %c0_i32_0 = arith.constant 0 : i32
    %c0_i32_1 = arith.constant 0 : i32
    return %c0_i32, %c0_i32_0 : i32, i32
  }
  func.func @transform_7(%arg0: i32) -> (i32, i32) {
    %c0_i32 = arith.constant 0 : i32
    %c0_i32_0 = arith.constant 0 : i32
    %c0_i32_1 = arith.constant 0 : i32
    return %c0_i32, %c0_i32_0 : i32, i32
  }
  func.func @transform_8(%arg0: i32) -> (i32, i32) {
    %c0_i32 = arith.constant 0 : i32
    %c0_i32_0 = arith.constant 0 : i32
    %c0_i32_1 = arith.constant 0 : i32
    return %c0_i32, %c0_i32_0 : i32, i32
  }
  func.func @transform_9(%arg0: i32) -> (i32, i32) {
    %c0_i32 = arith.constant 0 : i32
    %c0_i32_0 = arith.constant 0 : i32
    %c0_i32_1 = arith.constant 0 : i32
    return %c0_i32, %c0_i32_0 : i32, i32
  }
  func.func @transform_10(%arg0: i32) -> (i32, i32) {
    %c0_i32 = arith.constant 0 : i32
    %c0_i32_0 = arith.constant 0 : i32
    %c0_i32_1 = arith.constant 0 : i32
    return %c0_i32, %c0_i32_0 : i32, i32
  }
  func.func @transform_11(%arg0: i32) -> (i32, i32, i32) {
    %c0_i32 = arith.constant 0 : i32
    %c0_i32_0 = arith.constant 0 : i32
    %c0_i32_1 = arith.constant 0 : i32
    return %arg0, %c0_i32, %c0_i32_0 : i32, i32, i32
  }
}

</mosaic_0001>

<llo_original>
// kernel: tile.19
$region0: #{tile.19}
  %s0 = inlined_call_operand.vmem [shape: f32[8,2,64], index: 0, kind: input, shape index: {}]
  %s1 = inlined_call_operand.vmem [shape: f32[8,128], index: 1, kind: output, shape index: {}]
  $region1: #{tile.19} parent=0
    #allocation0 [shape = 'u8[32768]{0}', space=vmem, size = 0x8000, scoped, tag = 'scoped mem for input reshape']
    %s3 = sshllo.u32 0, 2
    %s4 = smul.addr 2, 7
    %s5 = scalar_lea.vmem %s0, %s4
    %v6 = vld [vmem:[%s5] sm:%s3]
    %s7 = scalar_lea.vmem [#allocation0], 56
    %8 = vst [vmem:[%s7] sm:%s3] %v6
    %s9 = smul.addr 2, 6
    %s10 = scalar_lea.vmem %s0, %s9
    %v11 = vld [vmem:[%s10] sm:%s3]
    %s12 = scalar_lea.vmem [#allocation0], 48
    %13 = vst [vmem:[%s12] sm:%s3] %v11
    %s14 = smul.addr 2, 5
    %s15 = scalar_lea.vmem %s0, %s14
    %v16 = vld [vmem:[%s15] sm:%s3]
    %s17 = scalar_lea.vmem [#allocation0], 40
    %18 = vst [vmem:[%s17] sm:%s3] %v16
    %s19 = smul.addr 2, 4
    %s20 = scalar_lea.vmem %s0, %s19
    %v21 = vld [vmem:[%s20] sm:%s3]
    %s22 = scalar_lea.vmem [#allocation0], 32
    %23 = vst [vmem:[%s22] sm:%s3] %v21
    %s24 = smul.addr 2, 3
    %s25 = scalar_lea.vmem %s0, %s24
    %v26 = vld [vmem:[%s25] sm:%s3]
    %s27 = scalar_lea.vmem [#allocation0], 24
    %28 = vst [vmem:[%s27] sm:%s3] %v26
    %s29 = smul.addr 2, 2
    %s30 = scalar_lea.vmem %s0, %s29
    %v31 = vld [vmem:[%s30] sm:%s3]
    %s32 = scalar_lea.vmem [#allocation0], 16
    %33 = vst [vmem:[%s32] sm:%s3] %v31
    %s34 = scalar_lea.vmem %s0, 2
    %v35 = vld [vmem:[%s34] sm:%s3]
    %s36 = scalar_lea.vmem [#allocation0], 8
    %37 = vst [vmem:[%s36] sm:%s3] %v35
    %v38 = vld [vmem:[%s0] sm:%s3]
    %39 = vst [vmem:[#allocation0] sm:%s3] %v38
    %v40 = vld [vmem:[#allocation0] ss:$8 sm:$0xf]
    %v41 = vld [vmem:[#allocation0] ss:$8 sm:$0xf0]
    %vm42 = vcmask 1047556
    %v43 = vsel %vm42, %v41, %v40
    %vm44 = vcmask 523264
    %45 = vst.msk [vmem:[%s1] sm:$0xff] %vm44, %v43
    %s46 = scalar_lea.vmem [#allocation0], 1
    %v47 = vld [vmem:[%s46] ss:$8 sm:$0xf]
    %s48 = scalar_lea.vmem [#allocation0], 1
    %v49 = vld [vmem:[%s48] ss:$8 sm:$0xf0]
    %vm50 = vcmask 1047556
    %v51 = vsel %vm50, %v49, %v47
    %52 = vrot.lane.b32.xlu0 %v51, 64
    %v53 = vpop.permute.xlu0 %52
    %vm54 = vcmask 1048064
    %55 = vst.msk [vmem:[%s1] sm:$0xff] %vm54, %v53

// kernel: gemma_forward.5
$region0: #{gemma_forward.5}
  #allocation0 [shape = 'u32[]', space=smem, size = 0x4, offset = 0x4, fixed_abs, tag = 'smem constant byte address 0x4 - core index']
  #allocation1 [shape = 'u32[144,128]{1,0:T(1,128)}', space=vmem, size = 0x12000, scoped, tag = 'internal scratch']
  %s0 = inlined_call_operand.vmem [shape: f32[2,8,128], index: 0, kind: input, shape index: {}]
  %s1 = inlined_call_operand.vmem [shape: f32[1,128], index: 1, kind: input, shape index: {}]
  %s2 = inlined_call_operand.vmem [shape: f32[128,256], index: 2, kind: input, shape index: {}]
  %s3 = inlined_call_operand.hbm [shape: f32[2,8,256], index: 3, kind: output, shape index: {}]
  %s4 = sld [smem:[#allocation0]]
  $region45: #{gemma_forward.5} parent=0
    _
  %s6 = ssub.s32 1, %s4
  %s7 = scalar_select 0, %s6, %s4
  $region1: #{gemma_forward.5} parent=0
    #allocation2 [shape = 'u8[16384]{0}', space=vmem, size = 0x4000, scoped, tag = 'output window, operand 0']
    #allocation3 [shape = 's32[2]{0}', space=sflag, size = 0x8, scoped, tag = 'scoped memory for gemma_forward.5']
    %8 = vsyncpa [#allocation3], 0
    %s9 = scalar_lea.sflag [#allocation3], 1
    %10 = vsyncpa %s9, 0
    loop: start=0, step=1, limit=4
    $region2: #{gemma_forward.5} parent=1 // loop_pre_header
      _
    $region3: #{gemma_forward.5} parent=1 // loop_header
      %s12 = sphi 0, %s16
      %p13 = scmp.ge.s32.totalorder %s12, 4
      %s22 = sphi 0, %s24
      %s25 = sphi 0, %s22
      %s26 = sphi 0, %s25
      %s42 = sphi 0, %s26
      %s46 = sphi 0, %s46
      %s48 = sphi 0, %s46
      %s49 = sphi 0, %s48
      %s63 = sphi 0, %s49
      %s67 = sphi 0, %s67
      %s69 = sphi 0, %s67
      %s70 = sphi 0, %s69
      %s84 = sphi 0, %s70
      %s90 = sphi 0, %s92
      %s93 = sphi 0, %s90
      %s94 = sphi 0, %s93
      %s110 = sphi 0, %s94
    $region4: #{gemma_forward.5} parent=1 // loop_header_branch
      %15 = sbr.rel (%p13) target = $region8
    $region5: #{gemma_forward.5} parent=1 // loop_body
      %s17 = ssub.s32 %s12, 1
      %s18 = ssub.s32 %s12, 2
      %s19 = sadd.s32 %s12, 1
      %s20 = ssub.s32 %s12, %s19
      %p21 = scmp.eq.s32.totalorder %s20, 0
      %s23 = sadd.s32 %s22, 1
      %s24 = scalar_select %p21, %s22, %s23
      %p27 = pneg %p21
      %p28 = scmp.eq.s32.totalorder %s12, 1
      %p29 = por %p27, %p28
      %p30 = scmp.ne.s32.totalorder %s22, %s25
      %p31 = scmp.eq.s32.totalorder %s12, 0
      %p32 = por %p30, %p31
      %p33 = scmp.ne.s32.totalorder %s22, %s25
      %p34 = scmp.eq.s32.totalorder %s17, 1
      %p35 = por %p33, %p34
      %p36 = scmp.ne.s32.totalorder %s25, %s26
      %p37 = scmp.eq.s32.totalorder %s17, 0
      %p38 = por %p36, %p37
      %p39 = scmp.ne.s32.totalorder %s25, %s26
      %p40 = scmp.eq.s32.totalorder %s18, 1
      %p41 = por %p39, %p40
      %p43 = scmp.ne.s32.totalorder %s26, %s42
      %p44 = scmp.eq.s32.totalorder %s18, 0
      %p45 = por %p43, %p44
      %s47 = sadd.s32 %s46, 1
      %p50 = scmp.eq.s32.totalorder %s12, 1
      %p51 = scmp.ne.s32.totalorder %s46, %s48
      %p52 = scmp.eq.s32.totalorder %s12, 0
      %p53 = por %p51, %p52
      %p54 = scmp.ne.s32.totalorder %s46, %s48
      %p55 = scmp.eq.s32.totalorder %s17, 1
      %p56 = por %p54, %p55
      %p57 = scmp.ne.s32.totalorder %s48, %s49
      %p58 = scmp.eq.s32.totalorder %s17, 0
      %p59 = por %p57, %p58
      %p60 = scmp.ne.s32.totalorder %s48, %s49
      %p61 = scmp.eq.s32.totalorder %s18, 1
      %p62 = por %p60, %p61
      %p64 = scmp.ne.s32.totalorder %s49, %s63
      %p65 = scmp.eq.s32.totalorder %s18, 0
      %p66 = por %p64, %p65
      %s68 = sadd.s32 %s67, 1
      %p71 = scmp.eq.s32.totalorder %s12, 1
      %p72 = scmp.ne.s32.totalorder %s67, %s69
      %p73 = scmp.eq.s32.totalorder %s12, 0
      %p74 = por %p72, %p73
      %p75 = scmp.ne.s32.totalorder %s67, %s69
      %p76 = scmp.eq.s32.totalorder %s17, 1
      %p77 = por %p75, %p76
      %p78 = scmp.ne.s32.totalorder %s69, %s70
      %p79 = scmp.eq.s32.totalorder %s17, 0
      %p80 = por %p78, %p79
      %p81 = scmp.ne.s32.totalorder %s69, %s70
      %p82 = scmp.eq.s32.totalorder %s18, 1
      %p83 = por %p81, %p82
      %p85 = scmp.ne.s32.totalorder %s70, %s84
      %p86 = scmp.eq.s32.totalorder %s18, 0
      %p87 = por %p85, %p86
      %s88 = ssub.s32 %s12, %s19
      %p89 = scmp.eq.s32.totalorder %s88, 0
      %s91 = sadd.s32 %s90, 1
      %s92 = scalar_select %p89, %s90, %s91
      %p95 = pneg %p89
      %p96 = scmp.eq.s32.totalorder %s12, 1
      %p97 = por %p95, %p96
      %p98 = scmp.ne.s32.totalorder %s90, %s93
      %p99 = scmp.eq.s32.totalorder %s12, 0
      %p100 = por %p98, %p99
      %p101 = scmp.ne.s32.totalorder %s90, %s93
      %p102 = scmp.eq.s32.totalorder %s17, 1
      %p103 = por %p101, %p102
      %p104 = scmp.ne.s32.totalorder %s93, %s94
      %p105 = scmp.eq.s32.totalorder %s17, 0
      %p106 = por %p104, %p105
      %p107 = scmp.ne.s32.totalorder %s93, %s94
      %p108 = scmp.eq.s32.totalorder %s18, 1
      %p109 = por %p107, %p108
      %p111 = scmp.ne.s32.totalorder %s94, %s110
      %p112 = scmp.eq.s32.totalorder %s18, 0
      %p113 = por %p111, %p112
      %p114 = scmp.le.s32.totalorder 1, %s12
      %p115 = scmp.lt.s32.totalorder %s12, 3
      %p116 = pnand %p114, %p115
      %p117 = pneg %p116
      // Predicated region
      $region9: #{gemma_forward.5} parent=5 // pred_check
        _
      $region10: #{gemma_forward.5} parent=5 // pred_check_branch
        %119 = sbr.rel (%p116) target = $region12
      $region11: #{gemma_forward.5} parent=5 // pred_region
        %s120 = ssub.s32 %s12, 1
        // Predicated region
        $region13: #{gemma_forward.5} parent=11 // pred_check
          %p121 = pneg %p59
        $region14: #{gemma_forward.5} parent=11 // pred_check_branch
          %123 = sbr.rel (%p121) target = $region16
        $region15: #{gemma_forward.5} parent=11 // pred_region
          _
        $region16: #{gemma_forward.5} parent=11 // pred_fallthru
          _
        // Predicated region
        $region17: #{gemma_forward.5} parent=11 // pred_check
          %p124 = pneg %p80
        $region18: #{gemma_forward.5} parent=11 // pred_check_branch
          %126 = sbr.rel (%p124) target = $region20
        $region19: #{gemma_forward.5} parent=11 // pred_region
          _
        $region20: #{gemma_forward.5} parent=11 // pred_fallthru
          _
      $region12: #{gemma_forward.5} parent=5 // pred_fallthru
        _
      %p127 = scmp.lt.s32.totalorder %s12, 2
      // Predicated region
      $region21: #{gemma_forward.5} parent=5 // pred_check
        %p128 = pneg %p127
      $region22: #{gemma_forward.5} parent=5 // pred_check_branch
        %130 = sbr.rel (%p128) target = $region24
      $region23: #{gemma_forward.5} parent=5 // pred_region
        // Predicated region
        $region25: #{gemma_forward.5} parent=23 // pred_check
          %p131 = pneg %p32
        $region26: #{gemma_forward.5} parent=23 // pred_check_branch
          %133 = sbr.rel (%p131) target = $region28
        $region27: #{gemma_forward.5} parent=23 // pred_region
          %p134 = scmp.lt.s32.totalorder %s12, 1
          %s135 = scalar_select %p134, %s12, 1
          %s136 = smul.addr %s135, 8
          %s137 = scalar_lea.vmem %s0, %s136
        $region28: #{gemma_forward.5} parent=23 // pred_fallthru
          _
      $region24: #{gemma_forward.5} parent=5 // pred_fallthru
        _
      %p138 = scmp.le.s32.totalorder 1, %s12
      %p139 = scmp.lt.s32.totalorder %s12, 3
      %p140 = pnand %p138, %p139
      %p141 = pneg %p140
      // Predicated region
      $region29: #{gemma_forward.5} parent=5 // pred_check
        _
      $region30: #{gemma_forward.5} parent=5 // pred_check_branch
        %143 = sbr.rel (%p140) target = $region32
      $region31: #{gemma_forward.5} parent=5 // pred_region
        %s144 = ssub.s32 %s12, 1
        %p145 = scmp.lt.s32.totalorder %s17, 1
        %s146 = scalar_select %p145, %s17, 1
        %s147 = smul.addr %s146, 8
        %s148 = scalar_lea.vmem %s0, %s147
        %p149 = pneg %p38
        %p150 = pneg %p35
        %p151 = pneg %p59
        %p152 = pneg %p56
        %p153 = pneg %p80
        %p154 = pneg %p77
        %p155 = pneg %p106
        %p156 = pneg %p103
        %s157 = sand.u32 %s93, 1
        %s158 = scalar_lea.sflag [#allocation3], %s157
        %s159 = sand.u32 %s93, 1
        %s160 = smul.addr %s159, 16
        %s161 = scalar_lea.vmem [#allocation2], %s160
        %p162 = scmp.lt.s32.totalorder %s17, 1
        %s163 = scalar_select %p162, %s17, 1
        %s164 = smul.addr %s163, 8
        %s165 = scalar_lea.vmem %s0, %s164
        %v166 = vld [vmem:[%s165] sm:$0xff]
        %v167 = vmul.f32 %v166, %v166
        %168 = vadd.xlane.f32.xlu0 %v167
        %v169 = vpop.xlane.xlu0 %168
        %v170 = vrcp.pop 128.0
        %v171 = vmul.f32 %v169, %v170
        %v172 = vadd.f32 %v171, 1e-06
        %v173 = vrsqrt.pop %v172
        %v174 = vmul.f32 %v166, %v173
        %v175 = vld [vmem:[%s1] sm:$0x1]
        %v176 = vadd.f32 %v175, 1.0
        %v178 = vlaneseq
        %v179 = vshrl.u32 %v178, 7
        %v180 = vsub.s32 0, %v179
        %v181 = vrot.slane %v176, %v180
        %v183 = vmul.f32 %v174, %v181
        %v184 = vld [vmem:[%s2] sm:$0xff]
        %v185 = vld [vmem:[%s2 + $0x8] sm:$0xff]
        %v186 = vld [vmem:[%s2 + $0x10] sm:$0xff]
        %v187 = vld [vmem:[%s2 + $0x18] sm:$0xff]
        %v188 = vld [vmem:[%s2 + $0x20] sm:$0xff]
        %v189 = vld [vmem:[%s2 + $0x28] sm:$0xff]
        %v190 = vld [vmem:[%s2 + $0x30] sm:$0xff]
        %v191 = vld [vmem:[%s2 + $0x38] sm:$0xff]
        %v192 = vld [vmem:[%s2 + $0x40] sm:$0xff]
        %v193 = vld [vmem:[%s2 + $0x48] sm:$0xff]
        %v194 = vld [vmem:[%s2 + $0x50] sm:$0xff]
        %v195 = vld [vmem:[%s2 + $0x58] sm:$0xff]
        %v196 = vld [vmem:[%s2 + $0x60] sm:$0xff]
        %v197 = vld [vmem:[%s2 + $0x68] sm:$0xff]
        %v198 = vld [vmem:[%s2 + $0x70] sm:$0xff]
        %v199 = vld [vmem:[%s2 + $0x78] sm:$0xff]
        %v200 = vld [vmem:[%s2 + $0x80] sm:$0xff]
        %v201 = vld [vmem:[%s2 + $0x88] sm:$0xff]
        %v202 = vld [vmem:[%s2 + $0x90] sm:$0xff]
        %v203 = vld [vmem:[%s2 + $0x98] sm:$0xff]
        %v204 = vld [vmem:[%s2 + $0xa0] sm:$0xff]
        %v205 = vld [vmem:[%s2 + $0xa8] sm:$0xff]
        %v206 = vld [vmem:[%s2 + $0xb0] sm:$0xff]
        %v207 = vld [vmem:[%s2 + $0xb8] sm:$0xff]
        %v208 = vld [vmem:[%s2 + $0xc0] sm:$0xff]
        %v209 = vld [vmem:[%s2 + $0xc8] sm:$0xff]
        %v210 = vld [vmem:[%s2 + $0xd0] sm:$0xff]
        %v211 = vld [vmem:[%s2 + $0xd8] sm:$0xff]
        %v212 = vld [vmem:[%s2 + $0xe0] sm:$0xff]
        %v213 = vld [vmem:[%s2 + $0xe8] sm:$0xff]
        %v214 = vld [vmem:[%s2 + $0xf0] sm:$0xff]
        %v215 = vld [vmem:[%s2 + $0xf8] sm:$0xff]
        %216 = vmatprep.subr.mxu0 %v185
        %217 = vmatpush1.msra.mxu0 %v184
        %218 = vmatprep.subr.mxu0 %v187
        %219 = vmatpush1.msra.mxu0 %v186
        %220 = vmatprep.subr.mxu0 %v189
        %221 = vmatpush1.msra.mxu0 %v188
        %222 = vmatprep.subr.mxu0 %v191
        %223 = vmatpush1.msra.mxu0 %v190
        %224 = vmatprep.subr.mxu0 %v193
        %225 = vmatpush1.msra.mxu0 %v192
        %226 = vmatprep.subr.mxu0 %v195
        %227 = vmatpush1.msra.mxu0 %v194
        %228 = vmatprep.subr.mxu0 %v197
        %229 = vmatpush1.msra.mxu0 %v196
        %230 = vmatprep.subr.mxu0 %v199
        %231 = vmatpush1.msra.mxu0 %v198
        %232 = vmatprep.subr.mxu0 %v201
        %233 = vmatpush1.msra.mxu0 %v200
        %234 = vmatprep.subr.mxu0 %v203
        %235 = vmatpush1.msra.mxu0 %v202
        %236 = vmatprep.subr.mxu0 %v205
        %237 = vmatpush1.msra.mxu0 %v204
        %238 = vmatprep.subr.mxu0 %v207
        %239 = vmatpush1.msra.mxu0 %v206
        %240 = vmatprep.subr.mxu0 %v209
        %241 = vmatpush1.msra.mxu0 %v208
        %242 = vmatprep.subr.mxu0 %v211
        %243 = vmatpush1.msra.mxu0 %v210
        %244 = vmatprep.subr.mxu0 %v213
        %245 = vmatpush1.msra.mxu0 %v212
        %246 = vmatprep.subr.mxu0 %v215
        %247 = vmatpush1.msra.mxu0 %v214
        %248 = vmatprep.subr.mxu0 0.0
        %249 = vmatpush1.msra.mxu0 0.0
        %250 = vmatprep.subr.mxu0 0.0
        %251 = vmatpush1.msra.mxu0 0.0
        %252 = vmatprep.subr.mxu0 0.0
        %253 = vmatpush1.msra.mxu0 0.0
        %254 = vmatprep.subr.mxu0 0.0
        %255 = vmatpush1.msra.mxu0 0.0
        %256 = vmatprep.subr.mxu0 0.0
        %257 = vmatpush1.msra.mxu0 0.0
        %258 = vmatprep.subr.mxu0 0.0
        %259 = vmatpush1.msra.mxu0 0.0
        %260 = vmatprep.subr.mxu0 0.0
        %261 = vmatpush1.msra.mxu0 0.0
        %262 = vmatprep.subr.mxu0 0.0
        %263 = vmatpush1.msra.mxu0 0.0
        %264 = vmatprep.subr.mxu0 0.0
        %265 = vmatpush1.msra.mxu0 0.0
        %266 = vmatprep.subr.mxu0 0.0
        %267 = vmatpush1.msra.mxu0 0.0
        %268 = vmatprep.subr.mxu0 0.0
        %269 = vmatpush1.msra.mxu0 0.0
        %270 = vmatprep.subr.mxu0 0.0
        %271 = vmatpush1.msra.mxu0 0.0
        %272 = vmatprep.subr.mxu0 0.0
        %273 = vmatpush1.msra.mxu0 0.0
        %274 = vmatprep.subr.mxu0 0.0
        %275 = vmatpush1.msra.mxu0 0.0
        %276 = vmatprep.subr.mxu0 0.0
        %277 = vmatpush1.msra.mxu0 0.0
        %278 = vmatprep.subr.mxu0 0.0
        %279 = vmatpush1.msra.mxu0 0.0
        %280 = vmatprep.mubr.f32.mxu0 0.0
        %281 = vmatmul.mubr.f32.gmra.mrb[0].mxu0 %v183
        %v282 = vpop.f32.mrb[0].mxu0
        %v283 = vadd.f32 0.0, %v282
        %v284 = vpop.f32.mrb[0].mxu0
        %v285 = vadd.f32 0.0, %v284
        %286 = vdwg.mxu0
        %287 = vst [vmem:[%s161] sm:$0xff] %v283
        %288 = vst [vmem:[%s161 + $0x8] sm:$0xff] %v285
        %s289 = sand.u32 %s93, 1
        %s290 = scalar_lea.sflag [#allocation3], %s289
        %s291 = sand.u32 %s93, 1
        %s292 = smul.addr %s291, 16
        %s293 = scalar_lea.vmem [#allocation2], %s292
        // Predicated region
        $region33: #{gemma_forward.5} parent=31 // pred_check
          %p294 = pneg %p103
        $region34: #{gemma_forward.5} parent=31 // pred_check_branch
          %296 = sbr.rel (%p294) target = $region36
        $region35: #{gemma_forward.5} parent=31 // pred_region
          %s298 = ssub.s32 256, 256
          %299 = vsyncadd %s290, %s298
          %s300 = smul.addr %s17, 2
          %s301 = smul.addr %s300, 128
          %s302 = scalar_lea.hbm %s3, %s301
          %s304 = sshll.u32 %s293, 4
          %s305 = int_to_ptr.vmem [resolvable:$true] %s304
          %307 = dma.vmem_to_hbm [thread:$0]  %s305, 256, %s302, %s290
        $region36: #{gemma_forward.5} parent=31 // pred_fallthru
          _
      $region32: #{gemma_forward.5} parent=5 // pred_fallthru
        _
      %p308 = scmp.le.s32.totalorder 2, %s12
      // Predicated region
      $region37: #{gemma_forward.5} parent=5 // pred_check
        %p309 = pneg %p308
      $region38: #{gemma_forward.5} parent=5 // pred_check_branch
        %311 = sbr.rel (%p309) target = $region40
      $region39: #{gemma_forward.5} parent=5 // pred_region
        %s312 = ssub.s32 %s12, 2
        // Predicated region
        $region41: #{gemma_forward.5} parent=39 // pred_check
          %p313 = pneg %p109
        $region42: #{gemma_forward.5} parent=39 // pred_check_branch
          %315 = sbr.rel (%p313) target = $region44
        $region43: #{gemma_forward.5} parent=39 // pred_region
          %s316 = sand.u32 %s94, 1
          %s317 = scalar_lea.sflag [#allocation3], %s316
          %s318 = sand.u32 %s94, 1
          %s319 = smul.addr %s318, 16
          %s320 = scalar_lea.vmem [#allocation2], %s319
          %321 = dma.done %s317, 256
        $region44: #{gemma_forward.5} parent=39 // pred_fallthru
          _
      $region40: #{gemma_forward.5} parent=5 // pred_fallthru
        _
    $region6: #{gemma_forward.5} parent=1 // loop_footer
      %s16 = sadd.s32 1, %s12
    $region7: #{gemma_forward.5} parent=1 // loop_footer_branch
      %11 = sbr.rel target = $region3
    $region8: #{gemma_forward.5} parent=1 // loop_exit
      _
    %322 = vsyncpa [#allocation3], 1
    %s323 = scalar_lea.sflag [#allocation3], 1
    %324 = vsyncpa %s323, 1

// kernel: gemma_forward.4
$region0: #{gemma_forward.4}
  #allocation0 [shape = 'u32[]', space=smem, size = 0x4, offset = 0x4, fixed_abs, tag = 'smem constant byte address 0x4 - core index']
  #allocation1 [shape = 'u32[144,128]{1,0:T(1,128)}', space=vmem, size = 0x12000, scoped, tag = 'internal scratch']
  #allocation2 [shape = 'f32[1]{0:T(128)S(6)}', space=smem, size = 0x200, scoped, tag = 'scoped memory for gemma_forward.4']
  %s0 = inlined_call_operand.vmem [shape: f32[2,8,128], index: 0, kind: input, shape index: {}]
  %s1 = inlined_call_operand.<no memory space> [shape: f32[1], index: 1, kind: input, shape index: {}]
  %s2 = inlined_call_operand.vmem [shape: f32[1,128], index: 2, kind: input, shape index: {}, may-alias: {2,8}]
  %s3 = inlined_call_operand.vmem [shape: f32[128,448], index: 3, kind: input, shape index: {}]
  %s4 = inlined_call_operand.vmem [shape: f32[8,128], index: 4, kind: input, shape index: {}]
  %s5 = inlined_call_operand.vmem [shape: f32[8,128], index: 5, kind: input, shape index: {}]
  %s6 = inlined_call_operand.vmem [shape: f32[1,64], index: 6, kind: input, shape index: {}]
  %s7 = inlined_call_operand.vmem [shape: f32[128,128], index: 7, kind: input, shape index: {}]
  %s8 = inlined_call_operand.vmem [shape: f32[1,128], index: 8, kind: input, shape index: {}, may-alias: {2,8}]
  %s9 = inlined_call_operand.vmem [shape: f32[128,512], index: 9, kind: input, shape index: {}]
  %s10 = inlined_call_operand.vmem [shape: f32[256,128], index: 10, kind: input, shape index: {}]
  %s11 = inlined_call_operand.vmem [shape: f32[2,8,128], index: 11, kind: output, shape index: {}]
  %s12 = sld [smem:[#allocation0]]
  $region77: #{gemma_forward.4} parent=0
    _
  %s14 = ssub.s32 1, %s12
  %s15 = scalar_select 0, %s14, %s12
  %16 = sst [smem:[#allocation2]] %s1
  loop: start=0, step=1, limit=4
  $region2: #{gemma_forward.4} parent=0 // loop_pre_header
    _
  $region3: #{gemma_forward.4} parent=0 // loop_header
    %s18 = sphi 0, %s22
    %p19 = scmp.ge.s32.totalorder %s18, 4
    %s28 = sphi 0, %s30
    %s31 = sphi 0, %s28
    %s32 = sphi 0, %s31
    %s48 = sphi 0, %s32
    %s52 = sphi 0, %s52
    %s54 = sphi 0, %s52
    %s55 = sphi 0, %s54
    %s69 = sphi 0, %s55
    %s73 = sphi 0, %s73
    %s75 = sphi 0, %s73
    %s76 = sphi 0, %s75
    %s90 = sphi 0, %s76
    %s94 = sphi 0, %s94
    %s96 = sphi 0, %s94
    %s97 = sphi 0, %s96
    %s111 = sphi 0, %s97
    %s115 = sphi 0, %s115
    %s117 = sphi 0, %s115
    %s118 = sphi 0, %s117
    %s132 = sphi 0, %s118
    %s136 = sphi 0, %s136
    %s138 = sphi 0, %s136
    %s139 = sphi 0, %s138
    %s153 = sphi 0, %s139
    %s157 = sphi 0, %s157
    %s159 = sphi 0, %s157
    %s160 = sphi 0, %s159
    %s174 = sphi 0, %s160
    %s178 = sphi 0, %s178
    %s180 = sphi 0, %s178
    %s181 = sphi 0, %s180
    %s195 = sphi 0, %s181
    %s199 = sphi 0, %s199
    %s201 = sphi 0, %s199
    %s202 = sphi 0, %s201
    %s216 = sphi 0, %s202
    %s220 = sphi 0, %s220
    %s222 = sphi 0, %s220
    %s223 = sphi 0, %s222
    %s237 = sphi 0, %s223
    %s241 = sphi 0, %s241
    %s243 = sphi 0, %s241
    %s244 = sphi 0, %s243
    %s258 = sphi 0, %s244
    %s264 = sphi 0, %s266
    %s267 = sphi 0, %s264
    %s268 = sphi 0, %s267
    %s284 = sphi 0, %s268
  $region4: #{gemma_forward.4} parent=0 // loop_header_branch
    %21 = sbr.rel (%p19) target = $region8
  $region5: #{gemma_forward.4} parent=0 // loop_body
    %s23 = ssub.s32 %s18, 1
    %s24 = ssub.s32 %s18, 2
    %s25 = sadd.s32 %s18, 1
    %s26 = ssub.s32 %s18, %s25
    %p27 = scmp.eq.s32.totalorder %s26, 0
    %s29 = sadd.s32 %s28, 1
    %s30 = scalar_select %p27, %s28, %s29
    %p33 = pneg %p27
    %p34 = scmp.eq.s32.totalorder %s18, 1
    %p35 = por %p33, %p34
    %p36 = scmp.ne.s32.totalorder %s28, %s31
    %p37 = scmp.eq.s32.totalorder %s18, 0
    %p38 = por %p36, %p37
    %p39 = scmp.ne.s32.totalorder %s28, %s31
    %p40 = scmp.eq.s32.totalorder %s23, 1
    %p41 = por %p39, %p40
    %p42 = scmp.ne.s32.totalorder %s31, %s32
    %p43 = scmp.eq.s32.totalorder %s23, 0
    %p44 = por %p42, %p43
    %p45 = scmp.ne.s32.totalorder %s31, %s32
    %p46 = scmp.eq.s32.totalorder %s24, 1
    %p47 = por %p45, %p46
    %p49 = scmp.ne.s32.totalorder %s32, %s48
    %p50 = scmp.eq.s32.totalorder %s24, 0
    %p51 = por %p49, %p50
    %s53 = sadd.s32 %s52, 1
    %p56 = scmp.eq.s32.totalorder %s18, 1
    %p57 = scmp.ne.s32.totalorder %s52, %s54
    %p58 = scmp.eq.s32.totalorder %s18, 0
    %p59 = por %p57, %p58
    %p60 = scmp.ne.s32.totalorder %s52, %s54
    %p61 = scmp.eq.s32.totalorder %s23, 1
    %p62 = por %p60, %p61
    %p63 = scmp.ne.s32.totalorder %s54, %s55
    %p64 = scmp.eq.s32.totalorder %s23, 0
    %p65 = por %p63, %p64
    %p66 = scmp.ne.s32.totalorder %s54, %s55
    %p67 = scmp.eq.s32.totalorder %s24, 1
    %p68 = por %p66, %p67
    %p70 = scmp.ne.s32.totalorder %s55, %s69
    %p71 = scmp.eq.s32.totalorder %s24, 0
    %p72 = por %p70, %p71
    %s74 = sadd.s32 %s73, 1
    %p77 = scmp.eq.s32.totalorder %s18, 1
    %p78 = scmp.ne.s32.totalorder %s73, %s75
    %p79 = scmp.eq.s32.totalorder %s18, 0
    %p80 = por %p78, %p79
    %p81 = scmp.ne.s32.totalorder %s73, %s75
    %p82 = scmp.eq.s32.totalorder %s23, 1
    %p83 = por %p81, %p82
    %p84 = scmp.ne.s32.totalorder %s75, %s76
    %p85 = scmp.eq.s32.totalorder %s23, 0
    %p86 = por %p84, %p85
    %p87 = scmp.ne.s32.totalorder %s75, %s76
    %p88 = scmp.eq.s32.totalorder %s24, 1
    %p89 = por %p87, %p88
    %p91 = scmp.ne.s32.totalorder %s76, %s90
    %p92 = scmp.eq.s32.totalorder %s24, 0
    %p93 = por %p91, %p92
    %s95 = sadd.s32 %s94, 1
    %p98 = scmp.eq.s32.totalorder %s18, 1
    %p99 = scmp.ne.s32.totalorder %s94, %s96
    %p100 = scmp.eq.s32.totalorder %s18, 0
    %p101 = por %p99, %p100
    %p102 = scmp.ne.s32.totalorder %s94, %s96
    %p103 = scmp.eq.s32.totalorder %s23, 1
    %p104 = por %p102, %p103
    %p105 = scmp.ne.s32.totalorder %s96, %s97
    %p106 = scmp.eq.s32.totalorder %s23, 0
    %p107 = por %p105, %p106
    %p108 = scmp.ne.s32.totalorder %s96, %s97
    %p109 = scmp.eq.s32.totalorder %s24, 1
    %p110 = por %p108, %p109
    %p112 = scmp.ne.s32.totalorder %s97, %s111
    %p113 = scmp.eq.s32.totalorder %s24, 0
    %p114 = por %p112, %p113
    %s116 = sadd.s32 %s115, 1
    %p119 = scmp.eq.s32.totalorder %s18, 1
    %p120 = scmp.ne.s32.totalorder %s115, %s117
    %p121 = scmp.eq.s32.totalorder %s18, 0
    %p122 = por %p120, %p121
    %p123 = scmp.ne.s32.totalorder %s115, %s117
    %p124 = scmp.eq.s32.totalorder %s23, 1
    %p125 = por %p123, %p124
    %p126 = scmp.ne.s32.totalorder %s117, %s118
    %p127 = scmp.eq.s32.totalorder %s23, 0
    %p128 = por %p126, %p127
    %p129 = scmp.ne.s32.totalorder %s117, %s118
    %p130 = scmp.eq.s32.totalorder %s24, 1
    %p131 = por %p129, %p130
    %p133 = scmp.ne.s32.totalorder %s118, %s132
    %p134 = scmp.eq.s32.totalorder %s24, 0
    %p135 = por %p133, %p134
    %s137 = sadd.s32 %s136, 1
    %p140 = scmp.eq.s32.totalorder %s18, 1
    %p141 = scmp.ne.s32.totalorder %s136, %s138
    %p142 = scmp.eq.s32.totalorder %s18, 0
    %p143 = por %p141, %p142
    %p144 = scmp.ne.s32.totalorder %s136, %s138
    %p145 = scmp.eq.s32.totalorder %s23, 1
    %p146 = por %p144, %p145
    %p147 = scmp.ne.s32.totalorder %s138, %s139
    %p148 = scmp.eq.s32.totalorder %s23, 0
    %p149 = por %p147, %p148
    %p150 = scmp.ne.s32.totalorder %s138, %s139
    %p151 = scmp.eq.s32.totalorder %s24, 1
    %p152 = por %p150, %p151
    %p154 = scmp.ne.s32.totalorder %s139, %s153
    %p155 = scmp.eq.s32.totalorder %s24, 0
    %p156 = por %p154, %p155
    %s158 = sadd.s32 %s157, 1
    %p161 = scmp.eq.s32.totalorder %s18, 1
    %p162 = scmp.ne.s32.totalorder %s157, %s159
    %p163 = scmp.eq.s32.totalorder %s18, 0
    %p164 = por %p162, %p163
    %p165 = scmp.ne.s32.totalorder %s157, %s159
    %p166 = scmp.eq.s32.totalorder %s23, 1
    %p167 = por %p165, %p166
    %p168 = scmp.ne.s32.totalorder %s159, %s160
    %p169 = scmp.eq.s32.totalorder %s23, 0
    %p170 = por %p168, %p169
    %p171 = scmp.ne.s32.totalorder %s159, %s160
    %p172 = scmp.eq.s32.totalorder %s24, 1
    %p173 = por %p171, %p172
    %p175 = scmp.ne.s32.totalorder %s160, %s174
    %p176 = scmp.eq.s32.totalorder %s24, 0
    %p177 = por %p175, %p176
    %s179 = sadd.s32 %s178, 1
    %p182 = scmp.eq.s32.totalorder %s18, 1
    %p183 = scmp.ne.s32.totalorder %s178, %s180
    %p184 = scmp.eq.s32.totalorder %s18, 0
    %p185 = por %p183, %p184
    %p186 = scmp.ne.s32.totalorder %s178, %s180
    %p187 = scmp.eq.s32.totalorder %s23, 1
    %p188 = por %p186, %p187
    %p189 = scmp.ne.s32.totalorder %s180, %s181
    %p190 = scmp.eq.s32.totalorder %s23, 0
    %p191 = por %p189, %p190
    %p192 = scmp.ne.s32.totalorder %s180, %s181
    %p193 = scmp.eq.s32.totalorder %s24, 1
    %p194 = por %p192, %p193
    %p196 = scmp.ne.s32.totalorder %s181, %s195
    %p197 = scmp.eq.s32.totalorder %s24, 0
    %p198 = por %p196, %p197
    %s200 = sadd.s32 %s199, 1
    %p203 = scmp.eq.s32.totalorder %s18, 1
    %p204 = scmp.ne.s32.totalorder %s199, %s201
    %p205 = scmp.eq.s32.totalorder %s18, 0
    %p206 = por %p204, %p205
    %p207 = scmp.ne.s32.totalorder %s199, %s201
    %p208 = scmp.eq.s32.totalorder %s23, 1
    %p209 = por %p207, %p208
    %p210 = scmp.ne.s32.totalorder %s201, %s202
    %p211 = scmp.eq.s32.totalorder %s23, 0
    %p212 = por %p210, %p211
    %p213 = scmp.ne.s32.totalorder %s201, %s202
    %p214 = scmp.eq.s32.totalorder %s24, 1
    %p215 = por %p213, %p214
    %p217 = scmp.ne.s32.totalorder %s202, %s216
    %p218 = scmp.eq.s32.totalorder %s24, 0
    %p219 = por %p217, %p218
    %s221 = sadd.s32 %s220, 1
    %p224 = scmp.eq.s32.totalorder %s18, 1
    %p225 = scmp.ne.s32.totalorder %s220, %s222
    %p226 = scmp.eq.s32.totalorder %s18, 0
    %p227 = por %p225, %p226
    %p228 = scmp.ne.s32.totalorder %s220, %s222
    %p229 = scmp.eq.s32.totalorder %s23, 1
    %p230 = por %p228, %p229
    %p231 = scmp.ne.s32.totalorder %s222, %s223
    %p232 = scmp.eq.s32.totalorder %s23, 0
    %p233 = por %p231, %p232
    %p234 = scmp.ne.s32.totalorder %s222, %s223
    %p235 = scmp.eq.s32.totalorder %s24, 1
    %p236 = por %p234, %p235
    %p238 = scmp.ne.s32.totalorder %s223, %s237
    %p239 = scmp.eq.s32.totalorder %s24, 0
    %p240 = por %p238, %p239
    %s242 = sadd.s32 %s241, 1
    %p245 = scmp.eq.s32.totalorder %s18, 1
    %p246 = scmp.ne.s32.totalorder %s241, %s243
    %p247 = scmp.eq.s32.totalorder %s18, 0
    %p248 = por %p246, %p247
    %p249 = scmp.ne.s32.totalorder %s241, %s243
    %p250 = scmp.eq.s32.totalorder %s23, 1
    %p251 = por %p249, %p250
    %p252 = scmp.ne.s32.totalorder %s243, %s244
    %p253 = scmp.eq.s32.totalorder %s23, 0
    %p254 = por %p252, %p253
    %p255 = scmp.ne.s32.totalorder %s243, %s244
    %p256 = scmp.eq.s32.totalorder %s24, 1
    %p257 = por %p255, %p256
    %p259 = scmp.ne.s32.totalorder %s244, %s258
    %p260 = scmp.eq.s32.totalorder %s24, 0
    %p261 = por %p259, %p260
    %s262 = ssub.s32 %s18, %s25
    %p263 = scmp.eq.s32.totalorder %s262, 0
    %s265 = sadd.s32 %s264, 1
    %s266 = scalar_select %p263, %s264, %s265
    %p269 = pneg %p263
    %p270 = scmp.eq.s32.totalorder %s18, 1
    %p271 = por %p269, %p270
    %p272 = scmp.ne.s32.totalorder %s264, %s267
    %p273 = scmp.eq.s32.totalorder %s18, 0
    %p274 = por %p272, %p273
    %p275 = scmp.ne.s32.totalorder %s264, %s267
    %p276 = scmp.eq.s32.totalorder %s23, 1
    %p277 = por %p275, %p276
    %p278 = scmp.ne.s32.totalorder %s267, %s268
    %p279 = scmp.eq.s32.totalorder %s23, 0
    %p280 = por %p278, %p279
    %p281 = scmp.ne.s32.totalorder %s267, %s268
    %p282 = scmp.eq.s32.totalorder %s24, 1
    %p283 = por %p281, %p282
    %p285 = scmp.ne.s32.totalorder %s268, %s284
    %p286 = scmp.eq.s32.totalorder %s24, 0
    %p287 = por %p285, %p286
    %p288 = scmp.le.s32.totalorder 1, %s18
    %p289 = scmp.lt.s32.totalorder %s18, 3
    %p290 = pnand %p288, %p289
    %p291 = pneg %p290
    // Predicated region
    $region9: #{gemma_forward.4} parent=5 // pred_check
      _
    $region10: #{gemma_forward.4} parent=5 // pred_check_branch
      %293 = sbr.rel (%p290) target = $region12
    $region11: #{gemma_forward.4} parent=5 // pred_region
      %s294 = ssub.s32 %s18, 1
      // Predicated region
      $region13: #{gemma_forward.4} parent=11 // pred_check
        %p295 = pneg %p65
      $region14: #{gemma_forward.4} parent=11 // pred_check_branch
        %297 = sbr.rel (%p295) target = $region16
      $region15: #{gemma_forward.4} parent=11 // pred_region
        _
      $region16: #{gemma_forward.4} parent=11 // pred_fallthru
        _
      // Predicated region
      $region17: #{gemma_forward.4} parent=11 // pred_check
        %p298 = pneg %p86
      $region18: #{gemma_forward.4} parent=11 // pred_check_branch
        %300 = sbr.rel (%p298) target = $region20
      $region19: #{gemma_forward.4} parent=11 // pred_region
        _
      $region20: #{gemma_forward.4} parent=11 // pred_fallthru
        _
      // Predicated region
      $region21: #{gemma_forward.4} parent=11 // pred_check
        %p301 = pneg %p107
      $region22: #{gemma_forward.4} parent=11 // pred_check_branch
        %303 = sbr.rel (%p301) target = $region24
      $region23: #{gemma_forward.4} parent=11 // pred_region
        _
      $region24: #{gemma_forward.4} parent=11 // pred_fallthru
        _
      // Predicated region
      $region25: #{gemma_forward.4} parent=11 // pred_check
        %p304 = pneg %p128
      $region26: #{gemma_forward.4} parent=11 // pred_check_branch
        %306 = sbr.rel (%p304) target = $region28
      $region27: #{gemma_forward.4} parent=11 // pred_region
        _
      $region28: #{gemma_forward.4} parent=11 // pred_fallthru
        _
      // Predicated region
      $region29: #{gemma_forward.4} parent=11 // pred_check
        %p307 = pneg %p149
      $region30: #{gemma_forward.4} parent=11 // pred_check_branch
        %309 = sbr.rel (%p307) target = $region32
      $region31: #{gemma_forward.4} parent=11 // pred_region
        _
      $region32: #{gemma_forward.4} parent=11 // pred_fallthru
        _
      // Predicated region
      $region33: #{gemma_forward.4} parent=11 // pred_check
        %p310 = pneg %p170
      $region34: #{gemma_forward.4} parent=11 // pred_check_branch
        %312 = sbr.rel (%p310) target = $region36
      $region35: #{gemma_forward.4} parent=11 // pred_region
        _
      $region36: #{gemma_forward.4} parent=11 // pred_fallthru
        _
      // Predicated region
      $region37: #{gemma_forward.4} parent=11 // pred_check
        %p313 = pneg %p191
      $region38: #{gemma_forward.4} parent=11 // pred_check_branch
        %315 = sbr.rel (%p313) target = $region40
      $region39: #{gemma_forward.4} parent=11 // pred_region
        _
      $region40: #{gemma_forward.4} parent=11 // pred_fallthru
        _
      // Predicated region
      $region41: #{gemma_forward.4} parent=11 // pred_check
        %p316 = pneg %p212
      $region42: #{gemma_forward.4} parent=11 // pred_check_branch
        %318 = sbr.rel (%p316) target = $region44
      $region43: #{gemma_forward.4} parent=11 // pred_region
        _
      $region44: #{gemma_forward.4} parent=11 // pred_fallthru
        _
      // Predicated region
      $region45: #{gemma_forward.4} parent=11 // pred_check
        %p319 = pneg %p233
      $region46: #{gemma_forward.4} parent=11 // pred_check_branch
        %321 = sbr.rel (%p319) target = $region48
      $region47: #{gemma_forward.4} parent=11 // pred_region
        _
      $region48: #{gemma_forward.4} parent=11 // pred_fallthru
        _
      // Predicated region
      $region49: #{gemma_forward.4} parent=11 // pred_check
        %p322 = pneg %p254
      $region50: #{gemma_forward.4} parent=11 // pred_check_branch
        %324 = sbr.rel (%p322) target = $region52
      $region51: #{gemma_forward.4} parent=11 // pred_region
        _
      $region52: #{gemma_forward.4} parent=11 // pred_fallthru
        _
    $region12: #{gemma_forward.4} parent=5 // pred_fallthru
      _
    %p325 = scmp.lt.s32.totalorder %s18, 2
    // Predicated region
    $region53: #{gemma_forward.4} parent=5 // pred_check
      %p326 = pneg %p325
    $region54: #{gemma_forward.4} parent=5 // pred_check_branch
      %328 = sbr.rel (%p326) target = $region56
    $region55: #{gemma_forward.4} parent=5 // pred_region
      // Predicated region
      $region57: #{gemma_forward.4} parent=55 // pred_check
        %p329 = pneg %p38
      $region58: #{gemma_forward.4} parent=55 // pred_check_branch
        %331 = sbr.rel (%p329) target = $region60
      $region59: #{gemma_forward.4} parent=55 // pred_region
        %p332 = scmp.lt.s32.totalorder %s18, 1
        %s333 = scalar_select %p332, %s18, 1
        %s334 = smul.addr %s333, 8
        %s335 = scalar_lea.vmem %s0, %s334
      $region60: #{gemma_forward.4} parent=55 // pred_fallthru
        _
    $region56: #{gemma_forward.4} parent=5 // pred_fallthru
      _
    %p336 = scmp.le.s32.totalorder 1, %s18
    %p337 = scmp.lt.s32.totalorder %s18, 3
    %p338 = pnand %p336, %p337
    %p339 = pneg %p338
    // Predicated region
    $region61: #{gemma_forward.4} parent=5 // pred_check
      _
    $region62: #{gemma_forward.4} parent=5 // pred_check_branch
      %341 = sbr.rel (%p338) target = $region64
    $region63: #{gemma_forward.4} parent=5 // pred_region
      %s342 = ssub.s32 %s18, 1
      %p343 = scmp.lt.s32.totalorder %s23, 1
      %s344 = scalar_select %p343, %s23, 1
      %s345 = smul.addr %s344, 8
      %s346 = scalar_lea.vmem %s0, %s345
      %p347 = pneg %p44
      %p348 = pneg %p41
      %p349 = pneg %p65
      %p350 = pneg %p62
      %p351 = pneg %p86
      %p352 = pneg %p83
      %p353 = pneg %p107
      %p354 = pneg %p104
      %p355 = pneg %p128
      %p356 = pneg %p125
      %p357 = pneg %p149
      %p358 = pneg %p146
      %p359 = pneg %p170
      %p360 = pneg %p167
      %p361 = pneg %p191
      %p362 = pneg %p188
      %p363 = pneg %p212
      %p364 = pneg %p209
      %p365 = pneg %p233
      %p366 = pneg %p230
      %p367 = pneg %p254
      %p368 = pneg %p251
      %p369 = pneg %p280
      %p370 = pneg %p277
      %p371 = scmp.lt.s32.totalorder %s23, 1
      %s372 = scalar_select %p371, %s23, 1
      %s373 = smul.addr %s372, 8
      %s374 = scalar_lea.vmem %s11, %s373
      %p375 = scmp.lt.s32.totalorder %s23, 1
      %s376 = scalar_select %p375, %s23, 1
      %s377 = smul.addr %s376, 8
      %s378 = scalar_lea.vmem %s0, %s377
      %p379 = scmp.lt.s32.totalorder %s23, 1
      %s380 = scalar_select %p379, %s23, 1
      %s381 = smul.addr %s380, 8
      %s382 = scalar_lea.vmem %s11, %s381
      %v383 = vld [vmem:[%s378] sm:$0xff]
      %v384 = vmul.f32 %v383, %v383
      %385 = vadd.xlane.f32.xlu0 %v384
      %v386 = vpop.xlane.xlu0 %385
      %v387 = vrcp.pop 128.0
      %v388 = vmul.f32 %v386, %v387
      %v389 = vadd.f32 %v388, 1e-06
      %v390 = vrsqrt.pop %v389
      %v391 = vmul.f32 %v383, %v390
      %v392 = vld [vmem:[%s2] sm:$0x1]
      %v393 = vadd.f32 %v392, 1.0
      %v395 = vlaneseq
      %v396 = vshrl.u32 %v395, 7
      %v397 = vsub.s32 0, %v396
      %v398 = vrot.slane %v393, %v397
      %v400 = vmul.f32 %v391, %v398
      %v401 = vld [vmem:[%s3] sm:$0xff]
      %v402 = vld [vmem:[%s3 + $0x8] sm:$0xff]
      %v403 = vld [vmem:[%s3 + $0x10] sm:$0xff]
      %v404 = vld [vmem:[%s3 + $0x18] sm:$0xff]
      %v405 = vld [vmem:[%s3 + $0x20] sm:$0xff]
      %v406 = vld [vmem:[%s3 + $0x28] sm:$0xff]
      %v407 = vld [vmem:[%s3 + $0x30] sm:$0xff]
      %v408 = vld [vmem:[%s3 + $0x38] sm:$0xff]
      %v409 = vld [vmem:[%s3 + $0x40] sm:$0xff]
      %v410 = vld [vmem:[%s3 + $0x48] sm:$0xff]
      %v411 = vld [vmem:[%s3 + $0x50] sm:$0xff]
      %v412 = vld [vmem:[%s3 + $0x58] sm:$0xff]
      %v413 = vld [vmem:[%s3 + $0x60] sm:$0xff]
      %v414 = vld [vmem:[%s3 + $0x68] sm:$0xff]
      %v415 = vld [vmem:[%s3 + $0x70] sm:$0xff]
      %v416 = vld [vmem:[%s3 + $0x78] sm:$0xff]
      %v417 = vld [vmem:[%s3 + $0x80] sm:$0xff]
      %v418 = vld [vmem:[%s3 + $0x88] sm:$0xff]
      %v419 = vld [vmem:[%s3 + $0x90] sm:$0xff]
      %v420 = vld [vmem:[%s3 + $0x98] sm:$0xff]
      %v421 = vld [vmem:[%s3 + $0xa0] sm:$0xff]
      %v422 = vld [vmem:[%s3 + $0xa8] sm:$0xff]
      %v423 = vld [vmem:[%s3 + $0xb0] sm:$0xff]
      %v424 = vld [vmem:[%s3 + $0xb8] sm:$0xff]
      %v425 = vld [vmem:[%s3 + $0xc0] sm:$0xff]
      %v426 = vld [vmem:[%s3 + $0xc8] sm:$0xff]
      %v427 = vld [vmem:[%s3 + $0xd0] sm:$0xff]
      %v428 = vld [vmem:[%s3 + $0xd8] sm:$0xff]
      %v429 = vld [vmem:[%s3 + $0xe0] sm:$0xff]
      %v430 = vld [vmem:[%s3 + $0xe8] sm:$0xff]
      %v431 = vld [vmem:[%s3 + $0xf0] sm:$0xff]
      %v432 = vld [vmem:[%s3 + $0xf8] sm:$0xff]
      %v433 = vld [vmem:[%s3 + $0x100] sm:$0xff]
      %v434 = vld [vmem:[%s3 + $0x108] sm:$0xff]
      %v435 = vld [vmem:[%s3 + $0x110] sm:$0xff]
      %v436 = vld [vmem:[%s3 + $0x118] sm:$0xff]
      %v437 = vld [vmem:[%s3 + $0x120] sm:$0xff]
      %v438 = vld [vmem:[%s3 + $0x128] sm:$0xff]
      %v439 = vld [vmem:[%s3 + $0x130] sm:$0xff]
      %v440 = vld [vmem:[%s3 + $0x138] sm:$0xff]
      %v441 = vld [vmem:[%s3 + $0x140] sm:$0xff]
      %v442 = vld [vmem:[%s3 + $0x148] sm:$0xff]
      %v443 = vld [vmem:[%s3 + $0x150] sm:$0xff]
      %v444 = vld [vmem:[%s3 + $0x158] sm:$0xff]
      %v445 = vld [vmem:[%s3 + $0x160] sm:$0xff]
      %v446 = vld [vmem:[%s3 + $0x168] sm:$0xff]
      %v447 = vld [vmem:[%s3 + $0x170] sm:$0xff]
      %v448 = vld [vmem:[%s3 + $0x178] sm:$0xff]
      %v449 = vld [vmem:[%s3 + $0x180] sm:$0xff]
      %v450 = vld [vmem:[%s3 + $0x188] sm:$0xff]
      %v451 = vld [vmem:[%s3 + $0x190] sm:$0xff]
      %v452 = vld [vmem:[%s3 + $0x198] sm:$0xff]
      %v453 = vld [vmem:[%s3 + $0x1a0] sm:$0xff]
      %v454 = vld [vmem:[%s3 + $0x1a8] sm:$0xff]
      %v455 = vld [vmem:[%s3 + $0x1b0] sm:$0xff]
      %v456 = vld [vmem:[%s3 + $0x1b8] sm:$0xff]
      %v457 = vld [vmem:[%s3 + $0x1c0] sm:$0xff]
      %v458 = vld [vmem:[%s3 + $0x1c8] sm:$0xff]
      %v459 = vld [vmem:[%s3 + $0x1d0] sm:$0xff]
      %v460 = vld [vmem:[%s3 + $0x1d8] sm:$0xff]
      %v461 = vld [vmem:[%s3 + $0x1e0] sm:$0xff]
      %v462 = vld [vmem:[%s3 + $0x1e8] sm:$0xff]
      %v463 = vld [vmem:[%s3 + $0x1f0] sm:$0xff]
      %v464 = vld [vmem:[%s3 + $0x1f8] sm:$0xff]
      %465 = vmatprep.subr.mxu0 %v402
      %466 = vmatpush1.msra.mxu0 %v401
      %467 = vmatprep.subr.mxu0 %v406
      %468 = vmatpush1.msra.mxu0 %v405
      %469 = vmatprep.subr.mxu0 %v410
      %470 = vmatpush1.msra.mxu0 %v409
      %471 = vmatprep.subr.mxu0 %v414
      %472 = vmatpush1.msra.mxu0 %v413
      %473 = vmatprep.subr.mxu0 %v418
      %474 = vmatpush1.msra.mxu0 %v417
      %475 = vmatprep.subr.mxu0 %v422
      %476 = vmatpush1.msra.mxu0 %v421
      %477 = vmatprep.subr.mxu0 %v426
      %478 = vmatpush1.msra.mxu0 %v425
      %479 = vmatprep.subr.mxu0 %v430
      %480 = vmatpush1.msra.mxu0 %v429
      %481 = vmatprep.subr.mxu0 %v434
      %482 = vmatpush1.msra.mxu0 %v433
      %483 = vmatprep.subr.mxu0 %v438
      %484 = vmatpush1.msra.mxu0 %v437
      %485 = vmatprep.subr.mxu0 %v442
      %486 = vmatpush1.msra.mxu0 %v441
      %487 = vmatprep.subr.mxu0 %v446
      %488 = vmatpush1.msra.mxu0 %v445
      %489 = vmatprep.subr.mxu0 %v450
      %490 = vmatpush1.msra.mxu0 %v449
      %491 = vmatprep.subr.mxu0 %v454
      %492 = vmatpush1.msra.mxu0 %v453
      %493 = vmatprep.subr.mxu0 %v458
      %494 = vmatpush1.msra.mxu0 %v457
      %495 = vmatprep.subr.mxu0 %v462
      %496 = vmatpush1.msra.mxu0 %v461
      %497 = vmatprep.subr.mxu0 0.0
      %498 = vmatpush1.msra.mxu0 0.0
      %499 = vmatprep.subr.mxu0 0.0
      %500 = vmatpush1.msra.mxu0 0.0
      %501 = vmatprep.subr.mxu0 0.0
      %502 = vmatpush1.msra.mxu0 0.0
      %503 = vmatprep.subr.mxu0 0.0
      %504 = vmatpush1.msra.mxu0 0.0
      %505 = vmatprep.subr.mxu0 0.0
      %506 = vmatpush1.msra.mxu0 0.0
      %507 = vmatprep.subr.mxu0 0.0
      %508 = vmatpush1.msra.mxu0 0.0
      %509 = vmatprep.subr.mxu0 0.0
      %510 = vmatpush1.msra.mxu0 0.0
      %511 = vmatprep.subr.mxu0 0.0
      %512 = vmatpush1.msra.mxu0 0.0
      %513 = vmatprep.subr.mxu0 0.0
      %514 = vmatpush1.msra.mxu0 0.0
      %515 = vmatprep.subr.mxu0 0.0
      %516 = vmatpush1.msra.mxu0 0.0
      %517 = vmatprep.subr.mxu0 0.0
      %518 = vmatpush1.msra.mxu0 0.0
      %519 = vmatprep.subr.mxu0 0.0
      %520 = vmatpush1.msra.mxu0 0.0
      %521 = vmatprep.subr.mxu0 0.0
      %522 = vmatpush1.msra.mxu0 0.0
      %523 = vmatprep.subr.mxu0 0.0
      %524 = vmatpush1.msra.mxu0 0.0
      %525 = vmatprep.subr.mxu0 0.0
      %526 = vmatpush1.msra.mxu0 0.0
      %527 = vmatprep.subr.mxu0 0.0
      %528 = vmatpush1.msra.mxu0 0.0
      %529 = vmatprep.mubr.f32.mxu0 0.0
      %530 = vmatmul.mubr.f32.gmra.mrb[0].mxu0 %v400
      %v531 = vpop.f32.mrb[0].mxu0
      %v532 = vadd.f32 0.0, %v531
      %v533 = vpop.f32.mrb[0].mxu0
      %v534 = vadd.f32 0.0, %v533
      %535 = vdwg.mxu0
      %536 = vmatprep.subr.mxu0 %v404
      %537 = vmatpush1.msra.mxu0 %v403
      %538 = vmatprep.subr.mxu0 %v408
      %539 = vmatpush1.msra.mxu0 %v407
      %540 = vmatprep.subr.mxu0 %v412
      %541 = vmatpush1.msra.mxu0 %v411
      %542 = vmatprep.subr.mxu0 %v416
      %543 = vmatpush1.msra.mxu0 %v415
      %544 = vmatprep.subr.mxu0 %v420
      %545 = vmatpush1.msra.mxu0 %v419
      %546 = vmatprep.subr.mxu0 %v424
      %547 = vmatpush1.msra.mxu0 %v423
      %548 = vmatprep.subr.mxu0 %v428
      %549 = vmatpush1.msra.mxu0 %v427
      %550 = vmatprep.subr.mxu0 %v432
      %551 = vmatpush1.msra.mxu0 %v431
      %552 = vmatprep.subr.mxu0 %v436
      %553 = vmatpush1.msra.mxu0 %v435
      %554 = vmatprep.subr.mxu0 %v440
      %555 = vmatpush1.msra.mxu0 %v439
      %556 = vmatprep.subr.mxu0 %v444
      %557 = vmatpush1.msra.mxu0 %v443
      %558 = vmatprep.subr.mxu0 %v448
      %559 = vmatpush1.msra.mxu0 %v447
      %560 = vmatprep.subr.mxu0 %v452
      %561 = vmatpush1.msra.mxu0 %v451
      %562 = vmatprep.subr.mxu0 %v456
      %563 = vmatpush1.msra.mxu0 %v455
      %564 = vmatprep.subr.mxu0 %v460
      %565 = vmatpush1.msra.mxu0 %v459
      %566 = vmatprep.subr.mxu0 %v464
      %567 = vmatpush1.msra.mxu0 %v463
      %568 = vmatprep.subr.mxu0 0.0
      %569 = vmatpush1.msra.mxu0 0.0
      %570 = vmatprep.subr.mxu0 0.0
      %571 = vmatpush1.msra.mxu0 0.0
      %572 = vmatprep.subr.mxu0 0.0
      %573 = vmatpush1.msra.mxu0 0.0
      %574 = vmatprep.subr.mxu0 0.0
      %575 = vmatpush1.msra.mxu0 0.0
      %576 = vmatprep.subr.mxu0 0.0
      %577 = vmatpush1.msra.mxu0 0.0
      %578 = vmatprep.subr.mxu0 0.0
      %579 = vmatpush1.msra.mxu0 0.0
      %580 = vmatprep.subr.mxu0 0.0
      %581 = vmatpush1.msra.mxu0 0.0
      %582 = vmatprep.subr.mxu0 0.0
      %583 = vmatpush1.msra.mxu0 0.0
      %584 = vmatprep.subr.mxu0 0.0
      %585 = vmatpush1.msra.mxu0 0.0
      %586 = vmatprep.subr.mxu0 0.0
      %587 = vmatpush1.msra.mxu0 0.0
      %588 = vmatprep.subr.mxu0 0.0
      %589 = vmatpush1.msra.mxu0 0.0
      %590 = vmatprep.subr.mxu0 0.0
      %591 = vmatpush1.msra.mxu0 0.0
      %592 = vmatprep.subr.mxu0 0.0
      %593 = vmatpush1.msra.mxu0 0.0
      %594 = vmatprep.subr.mxu0 0.0
      %595 = vmatpush1.msra.mxu0 0.0
      %596 = vmatprep.subr.mxu0 0.0
      %597 = vmatpush1.msra.mxu0 0.0
      %598 = vmatprep.subr.mxu0 0.0
      %599 = vmatpush1.msra.mxu0 0.0
      %600 = vmatprep.mubr.f32.mxu0 0.0
      %601 = vmatmul.mubr.f32.gmra.mrb[0].mxu0 %v400
      %v602 = vpop.f32.mrb[0].mxu0
      %v603 = vadd.f32 0.0, %v602
      %v604 = vpop.f32.mrb[0].mxu0
      %v605 = vadd.f32 0.0, %v604
      %606 = vdwg.mxu0
      %v607 = vld [vmem:[%s4] sm:$0xff]
      %v608 = vld [vmem:[%s5] sm:$0xff]
      %v609 = vmul.f32 %v532, %v607
      %v610 = vmul.f32 %v534, %v608
      %v611 = vadd.f32 %v609, %v610
      %v612 = vmul.f32 %v603, %v607
      %614 = vrot.lane.b32.xlu0 %v608, 64
      %v615 = vpop.permute.xlu0 %614
      %v617 = vmul.f32 %v603, %v615
      %619 = vrot.lane.b32.xlu0 %v617, 64
      %v620 = vpop.permute.xlu0 %619
      %v622 = vadd.f32 %v612, %v620
      %s623 = sld [smem:[#allocation2]]
      %s624 = ssub.f32 1.0, %s623
      %v625 = vld [vmem:[%s6] sm:$0x1]
      %v626 = vlaneseq
      %v627 = vshrl.u32 %v626, 7
      %v628 = vadd.s32 %v627, 8
      %vm629 = vcmp.lt.s32.totalorder %v627, 0
      %v630 = vsub.s32 0, %v627
      %v631 = vsel %vm629, %v630, %v627
      %v632 = vshrl.u32 %v631, 3
      %v633 = vand.u32 %v631, 7
      %v634 = vsub.s32 0, %v633
      %v635 = vsel %vm629, %v634, %v633
      %vm636 = vcmp.lt.s32.totalorder %v628, 0
      %v637 = vsub.s32 0, %v628
      %v638 = vsel %vm636, %v637, %v628
      %v639 = vshrl.u32 %v638, 3
      %v640 = vand.u32 %v638, 7
      %v641 = vsub.s32 0, %v640
      %v642 = vsel %vm636, %v641, %v640
      %vm643 = vcmp.ne.s32.totalorder %v635, 0
      %vm644 = vcmp.ne.s32.totalorder %v642, 0
      %vm645 = vcmp.lt.s32.totalorder %v635, 0
      %vm646 = vcmp.lt.s32.totalorder %v642, 0
      %vm647 = vmand %vm645, %vm643
      %vm648 = vmand %vm646, %vm644
      %v649 = vadd.s32 %v635, 8
      %v650 = vadd.s32 %v642, 8
      %v651 = vsel %vm647, %v649, %v635
      %v652 = vsel %vm648, %v650, %v642
      %v653 = vlaneseq
      %v654 = vand.u32 %v653, 127
      %vm655 = vcmp.ge.s32.totalorder %v651, %v654
      %vm656 = vcmp.ge.s32.totalorder %v652, %v654
      %v657 = vsel %vm655, 0.0, -1e+09
      %v658 = vsel %vm656, 0.0, -1e+09
      %660 = vrot.lane.b32.xlu0 %v611, 64
      %v661 = vpop.permute.xlu0 %660
      %vm662 = vcmask 523264
      %v663 = vsel %vm662, %v611, 0
      %v665 = vsel %vm662, %v661, 0
      %v668 = vsel %vm662, %v622, 0
      %670 = vmatprep.subr.mxu0 0.0
      %671 = vmatpush1.xpose.msra.mxu0 %v668
      %672 = vmatprep.subr.mxu0 0.0
      %673 = vmatpush1.xpose.msra.mxu0 0.0
      %674 = vmatprep.subr.mxu0 0.0
      %675 = vmatpush1.xpose.msra.mxu0 0.0
      %676 = vmatprep.subr.mxu0 0.0
      %677 = vmatpush1.xpose.msra.mxu0 0.0
      %678 = vmatprep.subr.mxu0 0.0
      %679 = vmatpush1.xpose.msra.mxu0 0.0
      %680 = vmatprep.subr.mxu0 0.0
      %681 = vmatpush1.xpose.msra.mxu0 0.0
      %682 = vmatprep.subr.mxu0 0.0
      %683 = vmatpush1.xpose.msra.mxu0 0.0
      %684 = vmatprep.subr.mxu0 0.0
      %685 = vmatpush1.xpose.msra.mxu0 0.0
      %686 = vmatprep.subr.mxu0 0.0
      %687 = vmatpush1.xpose.msra.mxu0 0.0
      %688 = vmatprep.subr.mxu0 0.0
      %689 = vmatpush1.xpose.msra.mxu0 0.0
      %690 = vmatprep.subr.mxu0 0.0
      %691 = vmatpush1.xpose.msra.mxu0 0.0
      %692 = vmatprep.subr.mxu0 0.0
      %693 = vmatpush1.xpose.msra.mxu0 0.0
      %694 = vmatprep.subr.mxu0 0.0
      %695 = vmatpush1.xpose.msra.mxu0 0.0
      %696 = vmatprep.subr.mxu0 0.0
      %697 = vmatpush1.xpose.msra.mxu0 0.0
      %698 = vmatprep.subr.mxu0 0.0
      %699 = vmatpush1.xpose.msra.mxu0 0.0
      %700 = vmatprep.subr.mxu0 0.0
      %701 = vmatpush1.xpose.msra.mxu0 0.0
      %702 = vmatprep.subr.mxu0 0.0
      %703 = vmatpush1.xpose.msra.mxu0 0.0
      %704 = vmatprep.subr.mxu0 0.0
      %705 = vmatpush1.xpose.msra.mxu0 0.0
      %706 = vmatprep.subr.mxu0 0.0
      %707 = vmatpush1.xpose.msra.mxu0 0.0
      %708 = vmatprep.subr.mxu0 0.0
      %709 = vmatpush1.xpose.msra.mxu0 0.0
      %710 = vmatprep.subr.mxu0 0.0
      %711 = vmatpush1.xpose.msra.mxu0 0.0
      %712 = vmatprep.subr.mxu0 0.0
      %713 = vmatpush1.xpose.msra.mxu0 0.0
      %714 = vmatprep.subr.mxu0 0.0
      %715 = vmatpush1.xpose.msra.mxu0 0.0
      %716 = vmatprep.subr.mxu0 0.0
      %717 = vmatpush1.xpose.msra.mxu0 0.0
      %718 = vmatprep.subr.mxu0 0.0
      %719 = vmatpush1.xpose.msra.mxu0 0.0
      %720 = vmatprep.subr.mxu0 0.0
      %721 = vmatpush1.xpose.msra.mxu0 0.0
      %722 = vmatprep.subr.mxu0 0.0
      %723 = vmatpush1.xpose.msra.mxu0 0.0
      %724 = vmatprep.subr.mxu0 0.0
      %725 = vmatpush1.xpose.msra.mxu0 0.0
      %726 = vmatprep.subr.mxu0 0.0
      %727 = vmatpush1.xpose.msra.mxu0 0.0
      %728 = vmatprep.subr.mxu0 0.0
      %729 = vmatpush1.xpose.msra.mxu0 0.0
      %730 = vmatprep.subr.mxu0 0.0
      %731 = vmatpush1.xpose.msra.mxu0 0.0
      %732 = vmatprep.subr.mxu0 0.0
      %733 = vmatpush1.xpose.msra.mxu0 0.0
      %734 = vmatprep.mubr.f32.mxu0 0.0
      %735 = vmatmul.mubr.f32.gmra.mrb[0].mxu0 %v663
      %v736 = vpop.f32.mrb[0].mxu0
      %v737 = vadd.f32 %v657, %v736
      %v738 = vpop.f32.mrb[0].mxu0
      %739 = vmatprep.mubr.f32.mxu0 0.0
      %740 = vmatmul.mubr.f32.gmra.mrb[0].mxu0 %v665
      %v741 = vpop.f32.mrb[0].mxu0
      %v742 = vadd.f32 %v658, %v741
      %v743 = vpop.f32.mrb[0].mxu0
      %744 = vdwg.mxu0
      %vm745 = vcmask 64512
      %v746 = vsel %vm745, %v737, -inf
      %747 = vmax.xlane.f32.xlu0 %v746
      %v748 = vpop.xlane.xlu0 %747
      %v749 = vsel %vm745, %v742, -inf
      %750 = vmax.xlane.f32.xlu0 %v749
      %v751 = vpop.xlane.xlu0 %750
      %v752 = vsub.f32 %v737, %v748
      %v753 = vsub.f32 %v742, %v751
      %v754 = vmul.f32 %v752, 1.442695
      %v755 = vpow.pop %v754
      %v756 = vmul.f32 %v753, 1.442695
      %v757 = vpow.pop %v756
      %v758 = vsel %vm745, %v755, 0.0
      %759 = vadd.xlane.f32.xlu0 %v758
      %v760 = vpop.xlane.xlu0 %759
      %v761 = vsel %vm745, %v757, 0.0
      %762 = vadd.xlane.f32.xlu0 %v761
      %v763 = vpop.xlane.xlu0 %762
      %v764 = vrcp.pop %v760
      %v765 = vmul.f32 %v755, %v764
      %v766 = vrcp.pop %v763
      %v767 = vmul.f32 %v757, %v766
      %v769 = vsel %vm745, %v765, 0
      %v772 = vsel %vm745, %v767, 0
      %774 = vmatprep.subr.mxu0 0.0
      %775 = vmatpush1.msra.mxu0 %v605
      %776 = vmatprep.subr.mxu0 0.0
      %777 = vmatpush1.msra.mxu0 0.0
      %778 = vmatprep.subr.mxu0 0.0
      %779 = vmatpush1.msra.mxu0 0.0
      %780 = vmatprep.subr.mxu0 0.0
      %781 = vmatpush1.msra.mxu0 0.0
      %782 = vmatprep.subr.mxu0 0.0
      %783 = vmatpush1.msra.mxu0 0.0
      %784 = vmatprep.subr.mxu0 0.0
      %785 = vmatpush1.msra.mxu0 0.0
      %786 = vmatprep.subr.mxu0 0.0
      %787 = vmatpush1.msra.mxu0 0.0
      %788 = vmatprep.subr.mxu0 0.0
      %789 = vmatpush1.msra.mxu0 0.0
      %790 = vmatprep.subr.mxu0 0.0
      %791 = vmatpush1.msra.mxu0 0.0
      %792 = vmatprep.subr.mxu0 0.0
      %793 = vmatpush1.msra.mxu0 0.0
      %794 = vmatprep.subr.mxu0 0.0
      %795 = vmatpush1.msra.mxu0 0.0
      %796 = vmatprep.subr.mxu0 0.0
      %797 = vmatpush1.msra.mxu0 0.0
      %798 = vmatprep.subr.mxu0 0.0
      %799 = vmatpush1.msra.mxu0 0.0
      %800 = vmatprep.subr.mxu0 0.0
      %801 = vmatpush1.msra.mxu0 0.0
      %802 = vmatprep.subr.mxu0 0.0
      %803 = vmatpush1.msra.mxu0 0.0
      %804 = vmatprep.subr.mxu0 0.0
      %805 = vmatpush1.msra.mxu0 0.0
      %806 = vmatprep.subr.mxu0 0.0
      %807 = vmatpush1.msra.mxu0 0.0
      %808 = vmatprep.subr.mxu0 0.0
      %809 = vmatpush1.msra.mxu0 0.0
      %810 = vmatprep.subr.mxu0 0.0
      %811 = vmatpush1.msra.mxu0 0.0
      %812 = vmatprep.subr.mxu0 0.0
      %813 = vmatpush1.msra.mxu0 0.0
      %814 = vmatprep.subr.mxu0 0.0
      %815 = vmatpush1.msra.mxu0 0.0
      %816 = vmatprep.subr.mxu0 0.0
      %817 = vmatpush1.msra.mxu0 0.0
      %818 = vmatprep.subr.mxu0 0.0
      %819 = vmatpush1.msra.mxu0 0.0
      %820 = vmatprep.subr.mxu0 0.0
      %821 = vmatpush1.msra.mxu0 0.0
      %822 = vmatprep.subr.mxu0 0.0
      %823 = vmatpush1.msra.mxu0 0.0
      %824 = vmatprep.subr.mxu0 0.0
      %825 = vmatpush1.msra.mxu0 0.0
      %826 = vmatprep.subr.mxu0 0.0
      %827 = vmatpush1.msra.mxu0 0.0
      %828 = vmatprep.subr.mxu0 0.0
      %829 = vmatpush1.msra.mxu0 0.0
      %830 = vmatprep.subr.mxu0 0.0
      %831 = vmatpush1.msra.mxu0 0.0
      %832 = vmatprep.subr.mxu0 0.0
      %833 = vmatpush1.msra.mxu0 0.0
      %834 = vmatprep.subr.mxu0 0.0
      %835 = vmatpush1.msra.mxu0 0.0
      %836 = vmatprep.subr.mxu0 0.0
      %837 = vmatpush1.msra.mxu0 0.0
      %838 = vmatprep.mubr.f32.mxu0 0.0
      %839 = vmatmul.mubr.f32.gmra.mrb[0].mxu0 %v769
      %v840 = vpop.f32.mrb[0].mxu0
      %v841 = vadd.f32 0.0, %v840
      %v842 = vpop.f32.mrb[0].mxu0
      %843 = vmatprep.mubr.f32.mxu0 0.0
      %844 = vmatmul.mubr.f32.gmra.mrb[0].mxu0 %v772
      %v845 = vpop.f32.mrb[0].mxu0
      %v846 = vadd.f32 0.0, %v845
      %v847 = vpop.f32.mrb[0].mxu0
      %848 = vdwg.mxu0
      %v849 = vstv %s624
      %v850 = vmul.f32 %v841, %v849
      %v851 = vmul.f32 %v846, %v849
      %v852 = vmul.f32 %v850, %v850
      %v853 = vmul.f32 %v851, %v851
      %v854 = vsel %vm662, %v852, 0.0
      %855 = vadd.xlane.f32.xlu0 %v854
      %v856 = vpop.xlane.xlu0 %855
      %v857 = vsel %vm662, %v853, 0.0
      %858 = vadd.xlane.f32.xlu0 %v857
      %v859 = vpop.xlane.xlu0 %858
      %v860 = vrcp.pop 64.0
      %v861 = vmul.f32 %v856, %v860
      %v862 = vmul.f32 %v859, %v860
      %v863 = vadd.f32 %v861, 1e-05
      %v864 = vadd.f32 %v862, 1e-05
      %v865 = vrsqrt.pop %v863
      %v866 = vrsqrt.pop %v864
      %v867 = vmul.f32 %v850, %v865
      %v868 = vmul.f32 %v851, %v866
      %v870 = vlaneseq
      %v871 = vshrl.u32 %v870, 7
      %v872 = vsub.s32 0, %v871
      %v873 = vrot.slane %v625, %v872
      %v875 = vmul.f32 %v867, %v873
      %v876 = vmul.f32 %v868, %v873
      %v877 = vld [vmem:[%s7] sm:$0xff]
      %v878 = vld [vmem:[%s7 + $0x8] sm:$0xff]
      %v879 = vld [vmem:[%s7 + $0x10] sm:$0xff]
      %v880 = vld [vmem:[%s7 + $0x18] sm:$0xff]
      %v881 = vld [vmem:[%s7 + $0x20] sm:$0xff]
      %v882 = vld [vmem:[%s7 + $0x28] sm:$0xff]
      %v883 = vld [vmem:[%s7 + $0x30] sm:$0xff]
      %v884 = vld [vmem:[%s7 + $0x38] sm:$0xff]
      %v885 = vld [vmem:[%s7 + $0x40] sm:$0xff]
      %v886 = vld [vmem:[%s7 + $0x48] sm:$0xff]
      %v887 = vld [vmem:[%s7 + $0x50] sm:$0xff]
      %v888 = vld [vmem:[%s7 + $0x58] sm:$0xff]
      %v889 = vld [vmem:[%s7 + $0x60] sm:$0xff]
      %v890 = vld [vmem:[%s7 + $0x68] sm:$0xff]
      %v891 = vld [vmem:[%s7 + $0x70] sm:$0xff]
      %v892 = vld [vmem:[%s7 + $0x78] sm:$0xff]
      %v894 = vsel %vm662, %v876, 0
      %896 = vmatprep.subr.mxu0 0.0
      %897 = vmatpush1.msra.mxu0 %v885
      %898 = vmatprep.subr.mxu0 0.0
      %899 = vmatpush1.msra.mxu0 %v886
      %900 = vmatprep.subr.mxu0 0.0
      %901 = vmatpush1.msra.mxu0 %v887
      %902 = vmatprep.subr.mxu0 0.0
      %903 = vmatpush1.msra.mxu0 %v888
      %904 = vmatprep.subr.mxu0 0.0
      %905 = vmatpush1.msra.mxu0 %v889
      %906 = vmatprep.subr.mxu0 0.0
      %907 = vmatpush1.msra.mxu0 %v890
      %908 = vmatprep.subr.mxu0 0.0
      %909 = vmatpush1.msra.mxu0 %v891
      %910 = vmatprep.subr.mxu0 0.0
      %911 = vmatpush1.msra.mxu0 %v892
      %912 = vmatprep.subr.mxu0 0.0
      %913 = vmatpush1.msra.mxu0 0.0
      %914 = vmatprep.subr.mxu0 0.0
      %915 = vmatpush1.msra.mxu0 0.0
      %916 = vmatprep.subr.mxu0 0.0
      %917 = vmatpush1.msra.mxu0 0.0
      %918 = vmatprep.subr.mxu0 0.0
      %919 = vmatpush1.msra.mxu0 0.0
      %920 = vmatprep.subr.mxu0 0.0
      %921 = vmatpush1.msra.mxu0 0.0
      %922 = vmatprep.subr.mxu0 0.0
      %923 = vmatpush1.msra.mxu0 0.0
      %924 = vmatprep.subr.mxu0 0.0
      %925 = vmatpush1.msra.mxu0 0.0
      %926 = vmatprep.subr.mxu0 0.0
      %927 = vmatpush1.msra.mxu0 0.0
      %928 = vmatprep.subr.mxu0 0.0
      %929 = vmatpush1.msra.mxu0 0.0
      %930 = vmatprep.subr.mxu0 0.0
      %931 = vmatpush1.msra.mxu0 0.0
      %932 = vmatprep.subr.mxu0 0.0
      %933 = vmatpush1.msra.mxu0 0.0
      %934 = vmatprep.subr.mxu0 0.0
      %935 = vmatpush1.msra.mxu0 0.0
      %936 = vmatprep.subr.mxu0 0.0
      %937 = vmatpush1.msra.mxu0 0.0
      %938 = vmatprep.subr.mxu0 0.0
      %939 = vmatpush1.msra.mxu0 0.0
      %940 = vmatprep.subr.mxu0 0.0
      %941 = vmatpush1.msra.mxu0 0.0
      %942 = vmatprep.subr.mxu0 0.0
      %943 = vmatpush1.msra.mxu0 0.0
      %944 = vmatprep.subr.mxu0 0.0
      %945 = vmatpush1.msra.mxu0 0.0
      %946 = vmatprep.subr.mxu0 0.0
      %947 = vmatpush1.msra.mxu0 0.0
      %948 = vmatprep.subr.mxu0 0.0
      %949 = vmatpush1.msra.mxu0 0.0
      %950 = vmatprep.subr.mxu0 0.0
      %951 = vmatpush1.msra.mxu0 0.0
      %952 = vmatprep.subr.mxu0 0.0
      %953 = vmatpush1.msra.mxu0 0.0
      %954 = vmatprep.subr.mxu0 0.0
      %955 = vmatpush1.msra.mxu0 0.0
      %956 = vmatprep.subr.mxu0 0.0
      %957 = vmatpush1.msra.mxu0 0.0
      %958 = vmatprep.subr.mxu0 0.0
      %959 = vmatpush1.msra.mxu0 0.0
      %960 = vmatprep.mubr.f32.mxu0 0.0
      %961 = vmatmul.mubr.f32.gmra.mrb[0].mxu0 %v894
      %v962 = vpop.f32.mrb[0].mxu0
      %v963 = vadd.f32 0.0, %v962
      %v964 = vpop.f32.mrb[0].mxu0
      %965 = vdwg.mxu0
      %v967 = vsel %vm662, %v875, 0
      %969 = vmatprep.subr.mxu0 0.0
      %970 = vmatpush1.msra.mxu0 %v877
      %971 = vmatprep.subr.mxu0 0.0
      %972 = vmatpush1.msra.mxu0 %v878
      %973 = vmatprep.subr.mxu0 0.0
      %974 = vmatpush1.msra.mxu0 %v879
      %975 = vmatprep.subr.mxu0 0.0
      %976 = vmatpush1.msra.mxu0 %v880
      %977 = vmatprep.subr.mxu0 0.0
      %978 = vmatpush1.msra.mxu0 %v881
      %979 = vmatprep.subr.mxu0 0.0
      %980 = vmatpush1.msra.mxu0 %v882
      %981 = vmatprep.subr.mxu0 0.0
      %982 = vmatpush1.msra.mxu0 %v883
      %983 = vmatprep.subr.mxu0 0.0
      %984 = vmatpush1.msra.mxu0 %v884
      %985 = vmatprep.subr.mxu0 0.0
      %986 = vmatpush1.msra.mxu0 0.0
      %987 = vmatprep.subr.mxu0 0.0
      %988 = vmatpush1.msra.mxu0 0.0
      %989 = vmatprep.subr.mxu0 0.0
      %990 = vmatpush1.msra.mxu0 0.0
      %991 = vmatprep.subr.mxu0 0.0
      %992 = vmatpush1.msra.mxu0 0.0
      %993 = vmatprep.subr.mxu0 0.0
      %994 = vmatpush1.msra.mxu0 0.0
      %995 = vmatprep.subr.mxu0 0.0
      %996 = vmatpush1.msra.mxu0 0.0
      %997 = vmatprep.subr.mxu0 0.0
      %998 = vmatpush1.msra.mxu0 0.0
      %999 = vmatprep.subr.mxu0 0.0
      %1000 = vmatpush1.msra.mxu0 0.0
      %1001 = vmatprep.subr.mxu0 0.0
      %1002 = vmatpush1.msra.mxu0 0.0
      %1003 = vmatprep.subr.mxu0 0.0
      %1004 = vmatpush1.msra.mxu0 0.0
      %1005 = vmatprep.subr.mxu0 0.0
      %1006 = vmatpush1.msra.mxu0 0.0
      %1007 = vmatprep.subr.mxu0 0.0
      %1008 = vmatpush1.msra.mxu0 0.0
      %1009 = vmatprep.subr.mxu0 0.0
      %1010 = vmatpush1.msra.mxu0 0.0
      %1011 = vmatprep.subr.mxu0 0.0
      %1012 = vmatpush1.msra.mxu0 0.0
      %1013 = vmatprep.subr.mxu0 0.0
      %1014 = vmatpush1.msra.mxu0 0.0
      %1015 = vmatprep.subr.mxu0 0.0
      %1016 = vmatpush1.msra.mxu0 0.0
      %1017 = vmatprep.subr.mxu0 0.0
      %1018 = vmatpush1.msra.mxu0 0.0
      %1019 = vmatprep.subr.mxu0 0.0
      %1020 = vmatpush1.msra.mxu0 0.0
      %1021 = vmatprep.subr.mxu0 0.0
      %1022 = vmatpush1.msra.mxu0 0.0
      %1023 = vmatprep.subr.mxu0 0.0
      %1024 = vmatpush1.msra.mxu0 0.0
      %1025 = vmatprep.subr.mxu0 0.0
      %1026 = vmatpush1.msra.mxu0 0.0
      %1027 = vmatprep.subr.mxu0 0.0
      %1028 = vmatpush1.msra.mxu0 0.0
      %1029 = vmatprep.subr.mxu0 0.0
      %1030 = vmatpush1.msra.mxu0 0.0
      %1031 = vmatprep.subr.mxu0 0.0
      %1032 = vmatpush1.msra.mxu0 0.0
      %1033 = vmatprep.mubr.f32.mxu0 0.0
      %1034 = vmatmul.mubr.f32.gmra.mrb[0].mxu0 %v967
      %v1035 = vpop.f32.mrb[0].mxu0
      %v1036 = vadd.f32 %v963, %v1035
      %v1037 = vpop.f32.mrb[0].mxu0
      %1038 = vdwg.mxu0
      %v1039 = vadd.f32 %v383, %v1036
      %v1040 = vmul.f32 %v1039, %v1039
      %1041 = vadd.xlane.f32.xlu0 %v1040
      %v1042 = vpop.xlane.xlu0 %1041
      %v1043 = vmul.f32 %v1042, %v387
      %v1044 = vadd.f32 %v1043, 1e-06
      %v1045 = vrsqrt.pop %v1044
      %v1046 = vmul.f32 %v1039, %v1045
      %v1047 = vld [vmem:[%s8] sm:$0x1]
      %v1048 = vadd.f32 %v1047, 1.0
      %v1050 = vlaneseq
      %v1051 = vshrl.u32 %v1050, 7
      %v1052 = vsub.s32 0, %v1051
      %v1053 = vrot.slane %v1048, %v1052
      %v1055 = vmul.f32 %v1046, %v1053
      %v1056 = vld [vmem:[%s9] sm:$0xff]
      %v1057 = vld [vmem:[%s9 + $0x8] sm:$0xff]
      %v1058 = vld [vmem:[%s9 + $0x10] sm:$0xff]
      %v1059 = vld [vmem:[%s9 + $0x18] sm:$0xff]
      %v1060 = vld [vmem:[%s9 + $0x20] sm:$0xff]
      %v1061 = vld [vmem:[%s9 + $0x28] sm:$0xff]
      %v1062 = vld [vmem:[%s9 + $0x30] sm:$0xff]
      %v1063 = vld [vmem:[%s9 + $0x38] sm:$0xff]
      %v1064 = vld [vmem:[%s9 + $0x40] sm:$0xff]
      %v1065 = vld [vmem:[%s9 + $0x48] sm:$0xff]
      %v1066 = vld [vmem:[%s9 + $0x50] sm:$0xff]
      %v1067 = vld [vmem:[%s9 + $0x58] sm:$0xff]
      %v1068 = vld [vmem:[%s9 + $0x60] sm:$0xff]
      %v1069 = vld [vmem:[%s9 + $0x68] sm:$0xff]
      %v1070 = vld [vmem:[%s9 + $0x70] sm:$0xff]
      %v1071 = vld [vmem:[%s9 + $0x78] sm:$0xff]
      %v1072 = vld [vmem:[%s9 + $0x80] sm:$0xff]
      %v1073 = vld [vmem:[%s9 + $0x88] sm:$0xff]
      %v1074 = vld [vmem:[%s9 + $0x90] sm:$0xff]
      %v1075 = vld [vmem:[%s9 + $0x98] sm:$0xff]
      %v1076 = vld [vmem:[%s9 + $0xa0] sm:$0xff]
      %v1077 = vld [vmem:[%s9 + $0xa8] sm:$0xff]
      %v1078 = vld [vmem:[%s9 + $0xb0] sm:$0xff]
      %v1079 = vld [vmem:[%s9 + $0xb8] sm:$0xff]
      %v1080 = vld [vmem:[%s9 + $0xc0] sm:$0xff]
      %v1081 = vld [vmem:[%s9 + $0xc8] sm:$0xff]
      %v1082 = vld [vmem:[%s9 + $0xd0] sm:$0xff]
      %v1083 = vld [vmem:[%s9 + $0xd8] sm:$0xff]
      %v1084 = vld [vmem:[%s9 + $0xe0] sm:$0xff]
      %v1085 = vld [vmem:[%s9 + $0xe8] sm:$0xff]
      %v1086 = vld [vmem:[%s9 + $0xf0] sm:$0xff]
      %v1087 = vld [vmem:[%s9 + $0xf8] sm:$0xff]
      %v1088 = vld [vmem:[%s9 + $0x100] sm:$0xff]
      %v1089 = vld [vmem:[%s9 + $0x108] sm:$0xff]
      %v1090 = vld [vmem:[%s9 + $0x110] sm:$0xff]
      %v1091 = vld [vmem:[%s9 + $0x118] sm:$0xff]
      %v1092 = vld [vmem:[%s9 + $0x120] sm:$0xff]
      %v1093 = vld [vmem:[%s9 + $0x128] sm:$0xff]
      %v1094 = vld [vmem:[%s9 + $0x130] sm:$0xff]
      %v1095 = vld [vmem:[%s9 + $0x138] sm:$0xff]
      %v1096 = vld [vmem:[%s9 + $0x140] sm:$0xff]
      %v1097 = vld [vmem:[%s9 + $0x148] sm:$0xff]
      %v1098 = vld [vmem:[%s9 + $0x150] sm:$0xff]
      %v1099 = vld [vmem:[%s9 + $0x158] sm:$0xff]
      %v1100 = vld [vmem:[%s9 + $0x160] sm:$0xff]
      %v1101 = vld [vmem:[%s9 + $0x168] sm:$0xff]
      %v1102 = vld [vmem:[%s9 + $0x170] sm:$0xff]
      %v1103 = vld [vmem:[%s9 + $0x178] sm:$0xff]
      %v1104 = vld [vmem:[%s9 + $0x180] sm:$0xff]
      %v1105 = vld [vmem:[%s9 + $0x188] sm:$0xff]
      %v1106 = vld [vmem:[%s9 + $0x190] sm:$0xff]
      %v1107 = vld [vmem:[%s9 + $0x198] sm:$0xff]
      %v1108 = vld [vmem:[%s9 + $0x1a0] sm:$0xff]
      %v1109 = vld [vmem:[%s9 + $0x1a8] sm:$0xff]
      %v1110 = vld [vmem:[%s9 + $0x1b0] sm:$0xff]
      %v1111 = vld [vmem:[%s9 + $0x1b8] sm:$0xff]
      %v1112 = vld [vmem:[%s9 + $0x1c0] sm:$0xff]
      %v1113 = vld [vmem:[%s9 + $0x1c8] sm:$0xff]
      %v1114 = vld [vmem:[%s9 + $0x1d0] sm:$0xff]
      %v1115 = vld [vmem:[%s9 + $0x1d8] sm:$0xff]
      %v1116 = vld [vmem:[%s9 + $0x1e0] sm:$0xff]
      %v1117 = vld [vmem:[%s9 + $0x1e8] sm:$0xff]
      %v1118 = vld [vmem:[%s9 + $0x1f0] sm:$0xff]
      %v1119 = vld [vmem:[%s9 + $0x1f8] sm:$0xff]
      %1120 = vmatprep.subr.mxu0 %v1057
      %1121 = vmatpush1.msra.mxu0 %v1056
      %1122 = vmatprep.subr.mxu0 %v1061
      %1123 = vmatpush1.msra.mxu0 %v1060
      %1124 = vmatprep.subr.mxu0 %v1065
      %1125 = vmatpush1.msra.mxu0 %v1064
      %1126 = vmatprep.subr.mxu0 %v1069
      %1127 = vmatpush1.msra.mxu0 %v1068
      %1128 = vmatprep.subr.mxu0 %v1073
      %1129 = vmatpush1.msra.mxu0 %v1072
      %1130 = vmatprep.subr.mxu0 %v1077
      %1131 = vmatpush1.msra.mxu0 %v1076
      %1132 = vmatprep.subr.mxu0 %v1081
      %1133 = vmatpush1.msra.mxu0 %v1080
      %1134 = vmatprep.subr.mxu0 %v1085
      %1135 = vmatpush1.msra.mxu0 %v1084
      %1136 = vmatprep.subr.mxu0 %v1089
      %1137 = vmatpush1.msra.mxu0 %v1088
      %1138 = vmatprep.subr.mxu0 %v1093
      %1139 = vmatpush1.msra.mxu0 %v1092
      %1140 = vmatprep.subr.mxu0 %v1097
      %1141 = vmatpush1.msra.mxu0 %v1096
      %1142 = vmatprep.subr.mxu0 %v1101
      %1143 = vmatpush1.msra.mxu0 %v1100
      %1144 = vmatprep.subr.mxu0 %v1105
      %1145 = vmatpush1.msra.mxu0 %v1104
      %1146 = vmatprep.subr.mxu0 %v1109
      %1147 = vmatpush1.msra.mxu0 %v1108
      %1148 = vmatprep.subr.mxu0 %v1113
      %1149 = vmatpush1.msra.mxu0 %v1112
      %1150 = vmatprep.subr.mxu0 %v1117
      %1151 = vmatpush1.msra.mxu0 %v1116
      %1152 = vmatprep.subr.mxu0 0.0
      %1153 = vmatpush1.msra.mxu0 0.0
      %1154 = vmatprep.subr.mxu0 0.0
      %1155 = vmatpush1.msra.mxu0 0.0
      %1156 = vmatprep.subr.mxu0 0.0
      %1157 = vmatpush1.msra.mxu0 0.0
      %1158 = vmatprep.subr.mxu0 0.0
      %1159 = vmatpush1.msra.mxu0 0.0
      %1160 = vmatprep.subr.mxu0 0.0
      %1161 = vmatpush1.msra.mxu0 0.0
      %1162 = vmatprep.subr.mxu0 0.0
      %1163 = vmatpush1.msra.mxu0 0.0
      %1164 = vmatprep.subr.mxu0 0.0
      %1165 = vmatpush1.msra.mxu0 0.0
      %1166 = vmatprep.subr.mxu0 0.0
      %1167 = vmatpush1.msra.mxu0 0.0
      %1168 = vmatprep.subr.mxu0 0.0
      %1169 = vmatpush1.msra.mxu0 0.0
      %1170 = vmatprep.subr.mxu0 0.0
      %1171 = vmatpush1.msra.mxu0 0.0
      %1172 = vmatprep.subr.mxu0 0.0
      %1173 = vmatpush1.msra.mxu0 0.0
      %1174 = vmatprep.subr.mxu0 0.0
      %1175 = vmatpush1.msra.mxu0 0.0
      %1176 = vmatprep.subr.mxu0 0.0
      %1177 = vmatpush1.msra.mxu0 0.0
      %1178 = vmatprep.subr.mxu0 0.0
      %1179 = vmatpush1.msra.mxu0 0.0
      %1180 = vmatprep.subr.mxu0 0.0
      %1181 = vmatpush1.msra.mxu0 0.0
      %1182 = vmatprep.subr.mxu0 0.0
      %1183 = vmatpush1.msra.mxu0 0.0
      %1184 = vmatprep.mubr.f32.mxu0 0.0
      %1185 = vmatmul.mubr.f32.gmra.mrb[0].mxu0 %v1055
      %v1186 = vpop.f32.mrb[0].mxu0
      %v1187 = vadd.f32 0.0, %v1186
      %v1188 = vpop.f32.mrb[0].mxu0
      %v1189 = vadd.f32 0.0, %v1188
      %1190 = vdwg.mxu0
      %1191 = vmatprep.subr.mxu0 %v1059
      %1192 = vmatpush1.msra.mxu0 %v1058
      %1193 = vmatprep.subr.mxu0 %v1063
      %1194 = vmatpush1.msra.mxu0 %v1062
      %1195 = vmatprep.subr.mxu0 %v1067
      %1196 = vmatpush1.msra.mxu0 %v1066
      %1197 = vmatprep.subr.mxu0 %v1071
      %1198 = vmatpush1.msra.mxu0 %v1070
      %1199 = vmatprep.subr.mxu0 %v1075
      %1200 = vmatpush1.msra.mxu0 %v1074
      %1201 = vmatprep.subr.mxu0 %v1079
      %1202 = vmatpush1.msra.mxu0 %v1078
      %1203 = vmatprep.subr.mxu0 %v1083
      %1204 = vmatpush1.msra.mxu0 %v1082
      %1205 = vmatprep.subr.mxu0 %v1087
      %1206 = vmatpush1.msra.mxu0 %v1086
      %1207 = vmatprep.subr.mxu0 %v1091
      %1208 = vmatpush1.msra.mxu0 %v1090
      %1209 = vmatprep.subr.mxu0 %v1095
      %1210 = vmatpush1.msra.mxu0 %v1094
      %1211 = vmatprep.subr.mxu0 %v1099
      %1212 = vmatpush1.msra.mxu0 %v1098
      %1213 = vmatprep.subr.mxu0 %v1103
      %1214 = vmatpush1.msra.mxu0 %v1102
      %1215 = vmatprep.subr.mxu0 %v1107
      %1216 = vmatpush1.msra.mxu0 %v1106
      %1217 = vmatprep.subr.mxu0 %v1111
      %1218 = vmatpush1.msra.mxu0 %v1110
      %1219 = vmatprep.subr.mxu0 %v1115
      %1220 = vmatpush1.msra.mxu0 %v1114
      %1221 = vmatprep.subr.mxu0 %v1119
      %1222 = vmatpush1.msra.mxu0 %v1118
      %1223 = vmatprep.subr.mxu0 0.0
      %1224 = vmatpush1.msra.mxu0 0.0
      %1225 = vmatprep.subr.mxu0 0.0
      %1226 = vmatpush1.msra.mxu0 0.0
      %1227 = vmatprep.subr.mxu0 0.0
      %1228 = vmatpush1.msra.mxu0 0.0
      %1229 = vmatprep.subr.mxu0 0.0
      %1230 = vmatpush1.msra.mxu0 0.0
      %1231 = vmatprep.subr.mxu0 0.0
      %1232 = vmatpush1.msra.mxu0 0.0
      %1233 = vmatprep.subr.mxu0 0.0
      %1234 = vmatpush1.msra.mxu0 0.0
      %1235 = vmatprep.subr.mxu0 0.0
      %1236 = vmatpush1.msra.mxu0 0.0
      %1237 = vmatprep.subr.mxu0 0.0
      %1238 = vmatpush1.msra.mxu0 0.0
      %1239 = vmatprep.subr.mxu0 0.0
      %1240 = vmatpush1.msra.mxu0 0.0
      %1241 = vmatprep.subr.mxu0 0.0
      %1242 = vmatpush1.msra.mxu0 0.0
      %1243 = vmatprep.subr.mxu0 0.0
      %1244 = vmatpush1.msra.mxu0 0.0
      %1245 = vmatprep.subr.mxu0 0.0
      %1246 = vmatpush1.msra.mxu0 0.0
      %1247 = vmatprep.subr.mxu0 0.0
      %1248 = vmatpush1.msra.mxu0 0.0
      %1249 = vmatprep.subr.mxu0 0.0
      %1250 = vmatpush1.msra.mxu0 0.0
      %1251 = vmatprep.subr.mxu0 0.0
      %1252 = vmatpush1.msra.mxu0 0.0
      %1253 = vmatprep.subr.mxu0 0.0
      %1254 = vmatpush1.msra.mxu0 0.0
      %1255 = vmatprep.mubr.f32.mxu0 0.0
      %1256 = vmatmul.mubr.f32.gmra.mrb[0].mxu0 %v1055
      %v1257 = vpop.f32.mrb[0].mxu0
      %v1258 = vadd.f32 0.0, %v1257
      %v1259 = vpop.f32.mrb[0].mxu0
      %v1260 = vadd.f32 0.0, %v1259
      %1261 = vdwg.mxu0
      %v1262 = vmul.f32 %v1187, 0.5
      %v1263 = vmul.f32 %v1189, 0.5
      %v1264 = vmul.f32 %v1187, 0.044715
      %v1265 = vmul.f32 %v1189, 0.044715
      %v1266 = vmul.f32 %v1264, %v1187
      %v1267 = vmul.f32 %v1265, %v1189
      %v1268 = vmul.f32 %v1266, %v1187
      %v1269 = vmul.f32 %v1267, %v1189
      %v1270 = vadd.f32 %v1187, %v1268
      %v1271 = vadd.f32 %v1189, %v1269
      %v1272 = vmul.f32 %v1270, 0.7978846
      %v1273 = vmul.f32 %v1271, 0.7978846
      %v1274 = vtanh.pop %v1272
      %v1275 = vtanh.pop %v1273
      %v1276 = vadd.f32 %v1274, 1.0
      %v1277 = vadd.f32 %v1275, 1.0
      %v1278 = vmul.f32 %v1262, %v1276
      %v1279 = vmul.f32 %v1263, %v1277
      %v1280 = vmul.f32 %v1278, %v1258
      %v1281 = vmul.f32 %v1279, %v1260
      %v1282 = vld [vmem:[%s10] sm:$0xff]
      %v1283 = vld [vmem:[%s10 + $0x8] sm:$0xff]
      %v1284 = vld [vmem:[%s10 + $0x10] sm:$0xff]
      %v1285 = vld [vmem:[%s10 + $0x18] sm:$0xff]
      %v1286 = vld [vmem:[%s10 + $0x20] sm:$0xff]
      %v1287 = vld [vmem:[%s10 + $0x28] sm:$0xff]
      %v1288 = vld [vmem:[%s10 + $0x30] sm:$0xff]
      %v1289 = vld [vmem:[%s10 + $0x38] sm:$0xff]
      %v1290 = vld [vmem:[%s10 + $0x40] sm:$0xff]
      %v1291 = vld [vmem:[%s10 + $0x48] sm:$0xff]
      %v1292 = vld [vmem:[%s10 + $0x50] sm:$0xff]
      %v1293 = vld [vmem:[%s10 + $0x58] sm:$0xff]
      %v1294 = vld [vmem:[%s10 + $0x60] sm:$0xff]
      %v1295 = vld [vmem:[%s10 + $0x68] sm:$0xff]
      %v1296 = vld [vmem:[%s10 + $0x70] sm:$0xff]
      %v1297 = vld [vmem:[%s10 + $0x78] sm:$0xff]
      %v1298 = vld [vmem:[%s10 + $0x80] sm:$0xff]
      %v1299 = vld [vmem:[%s10 + $0x88] sm:$0xff]
      %v1300 = vld [vmem:[%s10 + $0x90] sm:$0xff]
      %v1301 = vld [vmem:[%s10 + $0x98] sm:$0xff]
      %v1302 = vld [vmem:[%s10 + $0xa0] sm:$0xff]
      %v1303 = vld [vmem:[%s10 + $0xa8] sm:$0xff]
      %v1304 = vld [vmem:[%s10 + $0xb0] sm:$0xff]
      %v1305 = vld [vmem:[%s10 + $0xb8] sm:$0xff]
      %v1306 = vld [vmem:[%s10 + $0xc0] sm:$0xff]
      %v1307 = vld [vmem:[%s10 + $0xc8] sm:$0xff]
      %v1308 = vld [vmem:[%s10 + $0xd0] sm:$0xff]
      %v1309 = vld [vmem:[%s10 + $0xd8] sm:$0xff]
      %v1310 = vld [vmem:[%s10 + $0xe0] sm:$0xff]
      %v1311 = vld [vmem:[%s10 + $0xe8] sm:$0xff]
      %v1312 = vld [vmem:[%s10 + $0xf0] sm:$0xff]
      %v1313 = vld [vmem:[%s10 + $0xf8] sm:$0xff]
      %1314 = vmatprep.subr.mxu0 0.0
      %1315 = vmatpush1.msra.mxu0 %v1282
      %1316 = vmatprep.subr.mxu0 0.0
      %1317 = vmatpush1.msra.mxu0 %v1283
      %1318 = vmatprep.subr.mxu0 0.0
      %1319 = vmatpush1.msra.mxu0 %v1284
      %1320 = vmatprep.subr.mxu0 0.0
      %1321 = vmatpush1.msra.mxu0 %v1285
      %1322 = vmatprep.subr.mxu0 0.0
      %1323 = vmatpush1.msra.mxu0 %v1286
      %1324 = vmatprep.subr.mxu0 0.0
      %1325 = vmatpush1.msra.mxu0 %v1287
      %1326 = vmatprep.subr.mxu0 0.0
      %1327 = vmatpush1.msra.mxu0 %v1288
      %1328 = vmatprep.subr.mxu0 0.0
      %1329 = vmatpush1.msra.mxu0 %v1289
      %1330 = vmatprep.subr.mxu0 0.0
      %1331 = vmatpush1.msra.mxu0 %v1290
      %1332 = vmatprep.subr.mxu0 0.0
      %1333 = vmatpush1.msra.mxu0 %v1291
      %1334 = vmatprep.subr.mxu0 0.0
      %1335 = vmatpush1.msra.mxu0 %v1292
      %1336 = vmatprep.subr.mxu0 0.0
      %1337 = vmatpush1.msra.mxu0 %v1293
      %1338 = vmatprep.subr.mxu0 0.0
      %1339 = vmatpush1.msra.mxu0 %v1294
      %1340 = vmatprep.subr.mxu0 0.0
      %1341 = vmatpush1.msra.mxu0 %v1295
      %1342 = vmatprep.subr.mxu0 0.0
      %1343 = vmatpush1.msra.mxu0 %v1296
      %1344 = vmatprep.subr.mxu0 0.0
      %1345 = vmatpush1.msra.mxu0 %v1297
      %1346 = vmatprep.subr.mxu0 0.0
      %1347 = vmatpush1.msra.mxu0 %v1298
      %1348 = vmatprep.subr.mxu0 0.0
      %1349 = vmatpush1.msra.mxu0 %v1299
      %1350 = vmatprep.subr.mxu0 0.0
      %1351 = vmatpush1.msra.mxu0 %v1300
      %1352 = vmatprep.subr.mxu0 0.0
      %1353 = vmatpush1.msra.mxu0 %v1301
      %1354 = vmatprep.subr.mxu0 0.0
      %1355 = vmatpush1.msra.mxu0 %v1302
      %1356 = vmatprep.subr.mxu0 0.0
      %1357 = vmatpush1.msra.mxu0 %v1303
      %1358 = vmatprep.subr.mxu0 0.0
      %1359 = vmatpush1.msra.mxu0 %v1304
      %1360 = vmatprep.subr.mxu0 0.0
      %1361 = vmatpush1.msra.mxu0 %v1305
      %1362 = vmatprep.subr.mxu0 0.0
      %1363 = vmatpush1.msra.mxu0 %v1306
      %1364 = vmatprep.subr.mxu0 0.0
      %1365 = vmatpush1.msra.mxu0 %v1307
      %1366 = vmatprep.subr.mxu0 0.0
      %1367 = vmatpush1.msra.mxu0 %v1308
      %1368 = vmatprep.subr.mxu0 0.0
      %1369 = vmatpush1.msra.mxu0 %v1309
      %1370 = vmatprep.subr.mxu0 0.0
      %1371 = vmatpush1.msra.mxu0 %v1310
      %1372 = vmatprep.subr.mxu0 0.0
      %1373 = vmatpush1.msra.mxu0 %v1311
      %1374 = vmatprep.subr.mxu0 0.0
      %1375 = vmatpush1.msra.mxu0 %v1312
      %1376 = vmatprep.subr.mxu0 0.0
      %1377 = vmatpush1.msra.mxu0 %v1313
      %1378 = vmatprep.mubr.f32.mxu0 %v1281
      %1379 = vmatmul.mubr.f32.gmra.mrb[0].mxu0 %v1280
      %v1380 = vpop.f32.mrb[0].mxu0
      %v1381 = vadd.f32 0.0, %v1380
      %v1382 = vpop.f32.mrb[0].mxu0
      %1383 = vdwg.mxu0
      %v1384 = vadd.f32 %v1039, %v1381
      %1385 = vst [vmem:[%s382] sm:$0xff] %v1384
      %p1386 = scmp.lt.s32.totalorder %s23, 1
      %s1387 = scalar_select %p1386, %s23, 1
      %s1388 = smul.addr %s1387, 8
      %s1389 = scalar_lea.vmem %s11, %s1388
      // Predicated region
      $region65: #{gemma_forward.4} parent=63 // pred_check
        %p1390 = pneg %p277
      $region66: #{gemma_forward.4} parent=63 // pred_check_branch
        %1392 = sbr.rel (%p1390) target = $region68
      $region67: #{gemma_forward.4} parent=63 // pred_region
        _
      $region68: #{gemma_forward.4} parent=63 // pred_fallthru
        _
    $region64: #{gemma_forward.4} parent=5 // pred_fallthru
      _
    %p1393 = scmp.le.s32.totalorder 2, %s18
    // Predicated region
    $region69: #{gemma_forward.4} parent=5 // pred_check
      %p1394 = pneg %p1393
    $region70: #{gemma_forward.4} parent=5 // pred_check_branch
      %1396 = sbr.rel (%p1394) target = $region72
    $region71: #{gemma_forward.4} parent=5 // pred_region
      %s1397 = ssub.s32 %s18, 2
      // Predicated region
      $region73: #{gemma_forward.4} parent=71 // pred_check
        %p1398 = pneg %p283
      $region74: #{gemma_forward.4} parent=71 // pred_check_branch
        %1400 = sbr.rel (%p1398) target = $region76
      $region75: #{gemma_forward.4} parent=71 // pred_region
        %p1401 = scmp.lt.s32.totalorder %s24, 1
        %s1402 = scalar_select %p1401, %s24, 1
        %s1403 = smul.addr %s1402, 8
        %s1404 = scalar_lea.vmem %s11, %s1403
      $region76: #{gemma_forward.4} parent=71 // pred_fallthru
        _
    $region72: #{gemma_forward.4} parent=5 // pred_fallthru
      _
  $region6: #{gemma_forward.4} parent=0 // loop_footer
    %s22 = sadd.s32 1, %s18
  $region7: #{gemma_forward.4} parent=0 // loop_footer_branch
    %17 = sbr.rel target = $region3
  $region8: #{gemma_forward.4} parent=0 // loop_exit
    _

// kernel: gemma_forward.3
$region0: #{gemma_forward.3}
  #allocation0 [shape = 'u32[]', space=smem, size = 0x4, offset = 0x4, fixed_abs, tag = 'smem constant byte address 0x4 - core index']
  #allocation1 [shape = 'u32[144,128]{1,0:T(1,128)}', space=vmem, size = 0x12000, scoped, tag = 'internal scratch']
  #allocation2 [shape = 'f32[1]{0:T(128)S(6)}', space=smem, size = 0x200, scoped, tag = 'scoped memory for gemma_forward.3']
  %s0 = inlined_call_operand.vmem [shape: f32[2,8,128], index: 0, kind: input, shape index: {}]
  %s1 = inlined_call_operand.<no memory space> [shape: f32[1], index: 1, kind: input, shape index: {}]
  %s2 = inlined_call_operand.vmem [shape: f32[1,128], index: 2, kind: input, shape index: {}, may-alias: {2,8}]
  %s3 = inlined_call_operand.hbm [shape: f32[128,448], index: 3, kind: input, shape index: {}]
  %s4 = inlined_call_operand.vmem [shape: f32[8,128], index: 4, kind: input, shape index: {}]
  %s5 = inlined_call_operand.vmem [shape: f32[8,128], index: 5, kind: input, shape index: {}]
  %s6 = inlined_call_operand.vmem [shape: f32[1,64], index: 6, kind: input, shape index: {}]
  %s7 = inlined_call_operand.vmem [shape: f32[128,128], index: 7, kind: input, shape index: {}]
  %s8 = inlined_call_operand.vmem [shape: f32[1,128], index: 8, kind: input, shape index: {}, may-alias: {2,8}]
  %s9 = inlined_call_operand.hbm [shape: f32[128,512], index: 9, kind: input, shape index: {}]
  %s10 = inlined_call_operand.hbm [shape: f32[256,128], index: 10, kind: input, shape index: {}]
  %s11 = inlined_call_operand.vmem [shape: f32[2,8,128], index: 11, kind: output, shape index: {}]
  %s12 = sld [smem:[#allocation0]]
  $region89: #{gemma_forward.3} parent=0
    _
  %s14 = ssub.s32 1, %s12
  %s15 = scalar_select 0, %s14, %s12
  %16 = sst [smem:[#allocation2]] %s1
  $region1: #{gemma_forward.3} parent=0
    #allocation3 [shape = 'u8[262144]{0}', space=vmem, size = 0x40000, scoped, tag = 'input window, operand 3, single buffered']
    #allocation4 [shape = 's32[2]{0}', space=sflag, size = 0x8, scoped, tag = 'scoped memory for gemma_forward.3']
    #allocation5 [shape = 'u8[262144]{0}', space=vmem, size = 0x40000, scoped, tag = 'input window, operand 9, single buffered']
    #allocation6 [shape = 's32[1]{0}', space=sflag, size = 0x4, scoped, tag = 'scoped memory for gemma_forward.3']
    #allocation7 [shape = 'u8[131072]{0}', space=vmem, size = 0x20000, scoped, tag = 'input window, operand 10, single buffered']
    %17 = vsyncpa [#allocation4], 0
    %18 = vsyncpa [#allocation6], 0
    loop: start=0, step=1, limit=4
    $region2: #{gemma_forward.3} parent=1 // loop_pre_header
      _
    $region3: #{gemma_forward.3} parent=1 // loop_header
      %s20 = sphi 0, %s24
      %p21 = scmp.ge.s32.totalorder %s20, 4
      %s30 = sphi 0, %s32
      %s33 = sphi 0, %s30
      %s34 = sphi 0, %s33
      %s50 = sphi 0, %s34
      %s54 = sphi 0, %s54
      %s56 = sphi 0, %s54
      %s57 = sphi 0, %s56
      %s71 = sphi 0, %s57
      %s75 = sphi 0, %s75
      %s77 = sphi 0, %s75
      %s78 = sphi 0, %s77
      %s92 = sphi 0, %s78
      %s96 = sphi 0, %s96
      %s98 = sphi 0, %s96
      %s99 = sphi 0, %s98
      %s113 = sphi 0, %s99
      %s117 = sphi 0, %s117
      %s119 = sphi 0, %s117
      %s120 = sphi 0, %s119
      %s134 = sphi 0, %s120
      %s138 = sphi 0, %s138
      %s140 = sphi 0, %s138
      %s141 = sphi 0, %s140
      %s155 = sphi 0, %s141
      %s159 = sphi 0, %s159
      %s161 = sphi 0, %s159
      %s162 = sphi 0, %s161
      %s176 = sphi 0, %s162
      %s180 = sphi 0, %s180
      %s182 = sphi 0, %s180
      %s183 = sphi 0, %s182
      %s197 = sphi 0, %s183
      %s201 = sphi 0, %s201
      %s203 = sphi 0, %s201
      %s204 = sphi 0, %s203
      %s218 = sphi 0, %s204
      %s222 = sphi 0, %s222
      %s224 = sphi 0, %s222
      %s225 = sphi 0, %s224
      %s239 = sphi 0, %s225
      %s243 = sphi 0, %s243
      %s245 = sphi 0, %s243
      %s246 = sphi 0, %s245
      %s260 = sphi 0, %s246
      %s266 = sphi 0, %s268
      %s269 = sphi 0, %s266
      %s270 = sphi 0, %s269
      %s286 = sphi 0, %s270
    $region4: #{gemma_forward.3} parent=1 // loop_header_branch
      %23 = sbr.rel (%p21) target = $region8
    $region5: #{gemma_forward.3} parent=1 // loop_body
      %s25 = ssub.s32 %s20, 1
      %s26 = ssub.s32 %s20, 2
      %s27 = sadd.s32 %s20, 1
      %s28 = ssub.s32 %s20, %s27
      %p29 = scmp.eq.s32.totalorder %s28, 0
      %s31 = sadd.s32 %s30, 1
      %s32 = scalar_select %p29, %s30, %s31
      %p35 = pneg %p29
      %p36 = scmp.eq.s32.totalorder %s20, 1
      %p37 = por %p35, %p36
      %p38 = scmp.ne.s32.totalorder %s30, %s33
      %p39 = scmp.eq.s32.totalorder %s20, 0
      %p40 = por %p38, %p39
      %p41 = scmp.ne.s32.totalorder %s30, %s33
      %p42 = scmp.eq.s32.totalorder %s25, 1
      %p43 = por %p41, %p42
      %p44 = scmp.ne.s32.totalorder %s33, %s34
      %p45 = scmp.eq.s32.totalorder %s25, 0
      %p46 = por %p44, %p45
      %p47 = scmp.ne.s32.totalorder %s33, %s34
      %p48 = scmp.eq.s32.totalorder %s26, 1
      %p49 = por %p47, %p48
      %p51 = scmp.ne.s32.totalorder %s34, %s50
      %p52 = scmp.eq.s32.totalorder %s26, 0
      %p53 = por %p51, %p52
      %s55 = sadd.s32 %s54, 1
      %p58 = scmp.eq.s32.totalorder %s20, 1
      %p59 = scmp.ne.s32.totalorder %s54, %s56
      %p60 = scmp.eq.s32.totalorder %s20, 0
      %p61 = por %p59, %p60
      %p62 = scmp.ne.s32.totalorder %s54, %s56
      %p63 = scmp.eq.s32.totalorder %s25, 1
      %p64 = por %p62, %p63
      %p65 = scmp.ne.s32.totalorder %s56, %s57
      %p66 = scmp.eq.s32.totalorder %s25, 0
      %p67 = por %p65, %p66
      %p68 = scmp.ne.s32.totalorder %s56, %s57
      %p69 = scmp.eq.s32.totalorder %s26, 1
      %p70 = por %p68, %p69
      %p72 = scmp.ne.s32.totalorder %s57, %s71
      %p73 = scmp.eq.s32.totalorder %s26, 0
      %p74 = por %p72, %p73
      %s76 = sadd.s32 %s75, 1
      %p79 = scmp.eq.s32.totalorder %s20, 1
      %p80 = scmp.ne.s32.totalorder %s75, %s77
      %p81 = scmp.eq.s32.totalorder %s20, 0
      %p82 = por %p80, %p81
      %p83 = scmp.ne.s32.totalorder %s75, %s77
      %p84 = scmp.eq.s32.totalorder %s25, 1
      %p85 = por %p83, %p84
      %p86 = scmp.ne.s32.totalorder %s77, %s78
      %p87 = scmp.eq.s32.totalorder %s25, 0
      %p88 = por %p86, %p87
      %p89 = scmp.ne.s32.totalorder %s77, %s78
      %p90 = scmp.eq.s32.totalorder %s26, 1
      %p91 = por %p89, %p90
      %p93 = scmp.ne.s32.totalorder %s78, %s92
      %p94 = scmp.eq.s32.totalorder %s26, 0
      %p95 = por %p93, %p94
      %s97 = sadd.s32 %s96, 1
      %p100 = scmp.eq.s32.totalorder %s20, 1
      %p101 = scmp.ne.s32.totalorder %s96, %s98
      %p102 = scmp.eq.s32.totalorder %s20, 0
      %p103 = por %p101, %p102
      %p104 = scmp.ne.s32.totalorder %s96, %s98
      %p105 = scmp.eq.s32.totalorder %s25, 1
      %p106 = por %p104, %p105
      %p107 = scmp.ne.s32.totalorder %s98, %s99
      %p108 = scmp.eq.s32.totalorder %s25, 0
      %p109 = por %p107, %p108
      %p110 = scmp.ne.s32.totalorder %s98, %s99
      %p111 = scmp.eq.s32.totalorder %s26, 1
      %p112 = por %p110, %p111
      %p114 = scmp.ne.s32.totalorder %s99, %s113
      %p115 = scmp.eq.s32.totalorder %s26, 0
      %p116 = por %p114, %p115
      %s118 = sadd.s32 %s117, 1
      %p121 = scmp.eq.s32.totalorder %s20, 1
      %p122 = scmp.ne.s32.totalorder %s117, %s119
      %p123 = scmp.eq.s32.totalorder %s20, 0
      %p124 = por %p122, %p123
      %p125 = scmp.ne.s32.totalorder %s117, %s119
      %p126 = scmp.eq.s32.totalorder %s25, 1
      %p127 = por %p125, %p126
      %p128 = scmp.ne.s32.totalorder %s119, %s120
      %p129 = scmp.eq.s32.totalorder %s25, 0
      %p130 = por %p128, %p129
      %p131 = scmp.ne.s32.totalorder %s119, %s120
      %p132 = scmp.eq.s32.totalorder %s26, 1
      %p133 = por %p131, %p132
      %p135 = scmp.ne.s32.totalorder %s120, %s134
      %p136 = scmp.eq.s32.totalorder %s26, 0
      %p137 = por %p135, %p136
      %s139 = sadd.s32 %s138, 1
      %p142 = scmp.eq.s32.totalorder %s20, 1
      %p143 = scmp.ne.s32.totalorder %s138, %s140
      %p144 = scmp.eq.s32.totalorder %s20, 0
      %p145 = por %p143, %p144
      %p146 = scmp.ne.s32.totalorder %s138, %s140
      %p147 = scmp.eq.s32.totalorder %s25, 1
      %p148 = por %p146, %p147
      %p149 = scmp.ne.s32.totalorder %s140, %s141
      %p150 = scmp.eq.s32.totalorder %s25, 0
      %p151 = por %p149, %p150
      %p152 = scmp.ne.s32.totalorder %s140, %s141
      %p153 = scmp.eq.s32.totalorder %s26, 1
      %p154 = por %p152, %p153
      %p156 = scmp.ne.s32.totalorder %s141, %s155
      %p157 = scmp.eq.s32.totalorder %s26, 0
      %p158 = por %p156, %p157
      %s160 = sadd.s32 %s159, 1
      %p163 = scmp.eq.s32.totalorder %s20, 1
      %p164 = scmp.ne.s32.totalorder %s159, %s161
      %p165 = scmp.eq.s32.totalorder %s20, 0
      %p166 = por %p164, %p165
      %p167 = scmp.ne.s32.totalorder %s159, %s161
      %p168 = scmp.eq.s32.totalorder %s25, 1
      %p169 = por %p167, %p168
      %p170 = scmp.ne.s32.totalorder %s161, %s162
      %p171 = scmp.eq.s32.totalorder %s25, 0
      %p172 = por %p170, %p171
      %p173 = scmp.ne.s32.totalorder %s161, %s162
      %p174 = scmp.eq.s32.totalorder %s26, 1
      %p175 = por %p173, %p174
      %p177 = scmp.ne.s32.totalorder %s162, %s176
      %p178 = scmp.eq.s32.totalorder %s26, 0
      %p179 = por %p177, %p178
      %s181 = sadd.s32 %s180, 1
      %p184 = scmp.eq.s32.totalorder %s20, 1
      %p185 = scmp.ne.s32.totalorder %s180, %s182
      %p186 = scmp.eq.s32.totalorder %s20, 0
      %p187 = por %p185, %p186
      %p188 = scmp.ne.s32.totalorder %s180, %s182
      %p189 = scmp.eq.s32.totalorder %s25, 1
      %p190 = por %p188, %p189
      %p191 = scmp.ne.s32.totalorder %s182, %s183
      %p192 = scmp.eq.s32.totalorder %s25, 0
      %p193 = por %p191, %p192
      %p194 = scmp.ne.s32.totalorder %s182, %s183
      %p195 = scmp.eq.s32.totalorder %s26, 1
      %p196 = por %p194, %p195
      %p198 = scmp.ne.s32.totalorder %s183, %s197
      %p199 = scmp.eq.s32.totalorder %s26, 0
      %p200 = por %p198, %p199
      %s202 = sadd.s32 %s201, 1
      %p205 = scmp.eq.s32.totalorder %s20, 1
      %p206 = scmp.ne.s32.totalorder %s201, %s203
      %p207 = scmp.eq.s32.totalorder %s20, 0
      %p208 = por %p206, %p207
      %p209 = scmp.ne.s32.totalorder %s201, %s203
      %p210 = scmp.eq.s32.totalorder %s25, 1
      %p211 = por %p209, %p210
      %p212 = scmp.ne.s32.totalorder %s203, %s204
      %p213 = scmp.eq.s32.totalorder %s25, 0
      %p214 = por %p212, %p213
      %p215 = scmp.ne.s32.totalorder %s203, %s204
      %p216 = scmp.eq.s32.totalorder %s26, 1
      %p217 = por %p215, %p216
      %p219 = scmp.ne.s32.totalorder %s204, %s218
      %p220 = scmp.eq.s32.totalorder %s26, 0
      %p221 = por %p219, %p220
      %s223 = sadd.s32 %s222, 1
      %p226 = scmp.eq.s32.totalorder %s20, 1
      %p227 = scmp.ne.s32.totalorder %s222, %s224
      %p228 = scmp.eq.s32.totalorder %s20, 0
      %p229 = por %p227, %p228
      %p230 = scmp.ne.s32.totalorder %s222, %s224
      %p231 = scmp.eq.s32.totalorder %s25, 1
      %p232 = por %p230, %p231
      %p233 = scmp.ne.s32.totalorder %s224, %s225
      %p234 = scmp.eq.s32.totalorder %s25, 0
      %p235 = por %p233, %p234
      %p236 = scmp.ne.s32.totalorder %s224, %s225
      %p237 = scmp.eq.s32.totalorder %s26, 1
      %p238 = por %p236, %p237
      %p240 = scmp.ne.s32.totalorder %s225, %s239
      %p241 = scmp.eq.s32.totalorder %s26, 0
      %p242 = por %p240, %p241
      %s244 = sadd.s32 %s243, 1
      %p247 = scmp.eq.s32.totalorder %s20, 1
      %p248 = scmp.ne.s32.totalorder %s243, %s245
      %p249 = scmp.eq.s32.totalorder %s20, 0
      %p250 = por %p248, %p249
      %p251 = scmp.ne.s32.totalorder %s243, %s245
      %p252 = scmp.eq.s32.totalorder %s25, 1
      %p253 = por %p251, %p252
      %p254 = scmp.ne.s32.totalorder %s245, %s246
      %p255 = scmp.eq.s32.totalorder %s25, 0
      %p256 = por %p254, %p255
      %p257 = scmp.ne.s32.totalorder %s245, %s246
      %p258 = scmp.eq.s32.totalorder %s26, 1
      %p259 = por %p257, %p258
      %p261 = scmp.ne.s32.totalorder %s246, %s260
      %p262 = scmp.eq.s32.totalorder %s26, 0
      %p263 = por %p261, %p262
      %s264 = ssub.s32 %s20, %s27
      %p265 = scmp.eq.s32.totalorder %s264, 0
      %s267 = sadd.s32 %s266, 1
      %s268 = scalar_select %p265, %s266, %s267
      %p271 = pneg %p265
      %p272 = scmp.eq.s32.totalorder %s20, 1
      %p273 = por %p271, %p272
      %p274 = scmp.ne.s32.totalorder %s266, %s269
      %p275 = scmp.eq.s32.totalorder %s20, 0
      %p276 = por %p274, %p275
      %p277 = scmp.ne.s32.totalorder %s266, %s269
      %p278 = scmp.eq.s32.totalorder %s25, 1
      %p279 = por %p277, %p278
      %p280 = scmp.ne.s32.totalorder %s269, %s270
      %p281 = scmp.eq.s32.totalorder %s25, 0
      %p282 = por %p280, %p281
      %p283 = scmp.ne.s32.totalorder %s269, %s270
      %p284 = scmp.eq.s32.totalorder %s26, 1
      %p285 = por %p283, %p284
      %p287 = scmp.ne.s32.totalorder %s270, %s286
      %p288 = scmp.eq.s32.totalorder %s26, 0
      %p289 = por %p287, %p288
      %p290 = scmp.le.s32.totalorder 1, %s20
      %p291 = scmp.lt.s32.totalorder %s20, 3
      %p292 = pnand %p290, %p291
      %p293 = pneg %p292
      // Predicated region
      $region9: #{gemma_forward.3} parent=5 // pred_check
        _
      $region10: #{gemma_forward.3} parent=5 // pred_check_branch
        %295 = sbr.rel (%p292) target = $region12
      $region11: #{gemma_forward.3} parent=5 // pred_region
        %s296 = ssub.s32 %s20, 1
        // Predicated region
        $region13: #{gemma_forward.3} parent=11 // pred_check
          %p297 = pneg %p67
        $region14: #{gemma_forward.3} parent=11 // pred_check_branch
          %299 = sbr.rel (%p297) target = $region16
        $region15: #{gemma_forward.3} parent=11 // pred_region
          _
        $region16: #{gemma_forward.3} parent=11 // pred_fallthru
          _
        // Predicated region
        $region17: #{gemma_forward.3} parent=11 // pred_check
          %p300 = pneg %p88
        $region18: #{gemma_forward.3} parent=11 // pred_check_branch
          %302 = sbr.rel (%p300) target = $region20
        $region19: #{gemma_forward.3} parent=11 // pred_region
          _
        $region20: #{gemma_forward.3} parent=11 // pred_fallthru
          _
        // Predicated region
        $region21: #{gemma_forward.3} parent=11 // pred_check
          %p303 = pneg %p109
        $region22: #{gemma_forward.3} parent=11 // pred_check_branch
          %305 = sbr.rel (%p303) target = $region24
        $region23: #{gemma_forward.3} parent=11 // pred_region
          %s307 = ssub.s32 8192, 8192
          %308 = vsyncadd [#allocation4], %s307
          %s309 = sshll.u32 [#allocation3], 4
          %s310 = int_to_ptr.vmem [resolvable:$true] %s309
          %315 = dma.hbm_to_vmem [thread:$0]  %s3, 8192, %s310, [#allocation4], 512, 512, 32
        $region24: #{gemma_forward.3} parent=11 // pred_fallthru
          _
        // Predicated region
        $region25: #{gemma_forward.3} parent=11 // pred_check
          %p316 = pneg %p130
        $region26: #{gemma_forward.3} parent=11 // pred_check_branch
          %318 = sbr.rel (%p316) target = $region28
        $region27: #{gemma_forward.3} parent=11 // pred_region
          _
        $region28: #{gemma_forward.3} parent=11 // pred_fallthru
          _
        // Predicated region
        $region29: #{gemma_forward.3} parent=11 // pred_check
          %p319 = pneg %p151
        $region30: #{gemma_forward.3} parent=11 // pred_check_branch
          %321 = sbr.rel (%p319) target = $region32
        $region31: #{gemma_forward.3} parent=11 // pred_region
          _
        $region32: #{gemma_forward.3} parent=11 // pred_fallthru
          _
        // Predicated region
        $region33: #{gemma_forward.3} parent=11 // pred_check
          %p322 = pneg %p172
        $region34: #{gemma_forward.3} parent=11 // pred_check_branch
          %324 = sbr.rel (%p322) target = $region36
        $region35: #{gemma_forward.3} parent=11 // pred_region
          _
        $region36: #{gemma_forward.3} parent=11 // pred_fallthru
          _
        // Predicated region
        $region37: #{gemma_forward.3} parent=11 // pred_check
          %p325 = pneg %p193
        $region38: #{gemma_forward.3} parent=11 // pred_check_branch
          %327 = sbr.rel (%p325) target = $region40
        $region39: #{gemma_forward.3} parent=11 // pred_region
          _
        $region40: #{gemma_forward.3} parent=11 // pred_fallthru
          _
        // Predicated region
        $region41: #{gemma_forward.3} parent=11 // pred_check
          %p328 = pneg %p214
        $region42: #{gemma_forward.3} parent=11 // pred_check_branch
          %330 = sbr.rel (%p328) target = $region44
        $region43: #{gemma_forward.3} parent=11 // pred_region
          _
        $region44: #{gemma_forward.3} parent=11 // pred_fallthru
          _
        // Predicated region
        $region45: #{gemma_forward.3} parent=11 // pred_check
          %p331 = pneg %p235
        $region46: #{gemma_forward.3} parent=11 // pred_check_branch
          %333 = sbr.rel (%p331) target = $region48
        $region47: #{gemma_forward.3} parent=11 // pred_region
          %s335 = ssub.s32 8192, 8192
          %336 = vsyncadd [#allocation6], %s335
          %s337 = sshll.u32 [#allocation5], 4
          %s338 = int_to_ptr.vmem [resolvable:$true] %s337
          %343 = dma.hbm_to_vmem [thread:$0]  %s9, 8192, %s338, [#allocation6], 512, 512, 32
        $region48: #{gemma_forward.3} parent=11 // pred_fallthru
          _
        // Predicated region
        $region49: #{gemma_forward.3} parent=11 // pred_check
          %p344 = pneg %p256
        $region50: #{gemma_forward.3} parent=11 // pred_check_branch
          %346 = sbr.rel (%p344) target = $region52
        $region51: #{gemma_forward.3} parent=11 // pred_region
          %s348 = ssub.s32 4096, 4096
          %349 = vsyncadd [#allocation6], %s348
          %s350 = sshll.u32 [#allocation7], 4
          %s351 = int_to_ptr.vmem [resolvable:$true] %s350
          %356 = dma.hbm_to_vmem [thread:$0]  %s10, 4096, %s351, [#allocation6], 128, 128, 8
        $region52: #{gemma_forward.3} parent=11 // pred_fallthru
          _
      $region12: #{gemma_forward.3} parent=5 // pred_fallthru
        _
      %p357 = scmp.lt.s32.totalorder %s20, 2
      // Predicated region
      $region53: #{gemma_forward.3} parent=5 // pred_check
        %p358 = pneg %p357
      $region54: #{gemma_forward.3} parent=5 // pred_check_branch
        %360 = sbr.rel (%p358) target = $region56
      $region55: #{gemma_forward.3} parent=5 // pred_region
        // Predicated region
        $region57: #{gemma_forward.3} parent=55 // pred_check
          %p361 = pneg %p40
        $region58: #{gemma_forward.3} parent=55 // pred_check_branch
          %363 = sbr.rel (%p361) target = $region60
        $region59: #{gemma_forward.3} parent=55 // pred_region
          %p364 = scmp.lt.s32.totalorder %s20, 1
          %s365 = scalar_select %p364, %s20, 1
          %s366 = smul.addr %s365, 8
          %s367 = scalar_lea.vmem %s0, %s366
        $region60: #{gemma_forward.3} parent=55 // pred_fallthru
          _
      $region56: #{gemma_forward.3} parent=5 // pred_fallthru
        _
      %p368 = scmp.le.s32.totalorder 1, %s20
      %p369 = scmp.lt.s32.totalorder %s20, 3
      %p370 = pnand %p368, %p369
      %p371 = pneg %p370
      // Predicated region
      $region61: #{gemma_forward.3} parent=5 // pred_check
        _
      $region62: #{gemma_forward.3} parent=5 // pred_check_branch
        %373 = sbr.rel (%p370) target = $region64
      $region63: #{gemma_forward.3} parent=5 // pred_region
        %s374 = ssub.s32 %s20, 1
        // Predicated region
        $region65: #{gemma_forward.3} parent=63 // pred_check
          %p375 = pneg %p109
        $region66: #{gemma_forward.3} parent=63 // pred_check_branch
          %377 = sbr.rel (%p375) target = $region68
        $region67: #{gemma_forward.3} parent=63 // pred_region
          %378 = dma.done [#allocation4], 8192
        $region68: #{gemma_forward.3} parent=63 // pred_fallthru
          _
        // Predicated region
        $region69: #{gemma_forward.3} parent=63 // pred_check
          %p379 = pneg %p235
        $region70: #{gemma_forward.3} parent=63 // pred_check_branch
          %381 = sbr.rel (%p379) target = $region72
        $region71: #{gemma_forward.3} parent=63 // pred_region
          %382 = dma.done [#allocation6], 8192
        $region72: #{gemma_forward.3} parent=63 // pred_fallthru
          _
        // Predicated region
        $region73: #{gemma_forward.3} parent=63 // pred_check
          %p383 = pneg %p256
        $region74: #{gemma_forward.3} parent=63 // pred_check_branch
          %385 = sbr.rel (%p383) target = $region76
        $region75: #{gemma_forward.3} parent=63 // pred_region
          %386 = dma.done [#allocation6], 4096
        $region76: #{gemma_forward.3} parent=63 // pred_fallthru
          _
        %p387 = scmp.lt.s32.totalorder %s25, 1
        %s388 = scalar_select %p387, %s25, 1
        %s389 = smul.addr %s388, 8
        %s390 = scalar_lea.vmem %s0, %s389
        %p391 = pneg %p46
        %p392 = pneg %p43
        %p393 = pneg %p67
        %p394 = pneg %p64
        %p395 = pneg %p88
        %p396 = pneg %p85
        %p397 = pneg %p109
        %p398 = pneg %p106
        %p399 = pneg %p130
        %p400 = pneg %p127
        %p401 = pneg %p151
        %p402 = pneg %p148
        %p403 = pneg %p172
        %p404 = pneg %p169
        %p405 = pneg %p193
        %p406 = pneg %p190
        %p407 = pneg %p214
        %p408 = pneg %p211
        %p409 = pneg %p235
        %p410 = pneg %p232
        %p411 = pneg %p256
        %p412 = pneg %p253
        %p413 = pneg %p282
        %p414 = pneg %p279
        %p415 = scmp.lt.s32.totalorder %s25, 1
        %s416 = scalar_select %p415, %s25, 1
        %s417 = smul.addr %s416, 8
        %s418 = scalar_lea.vmem %s11, %s417
        %p419 = scmp.lt.s32.totalorder %s25, 1
        %s420 = scalar_select %p419, %s25, 1
        %s421 = smul.addr %s420, 8
        %s422 = scalar_lea.vmem %s0, %s421
        %p423 = scmp.lt.s32.totalorder %s25, 1
        %s424 = scalar_select %p423, %s25, 1
        %s425 = smul.addr %s424, 8
        %s426 = scalar_lea.vmem %s11, %s425
        %v427 = vld [vmem:[%s422] sm:$0xff]
        %v428 = vmul.f32 %v427, 11.313708
        %v429 = vmul.f32 %v428, %v428
        %430 = vadd.xlane.f32.xlu0 %v429
        %v431 = vpop.xlane.xlu0 %430
        %v432 = vrcp.pop 128.0
        %v433 = vmul.f32 %v431, %v432
        %v434 = vadd.f32 %v433, 1e-06
        %v435 = vrsqrt.pop %v434
        %v436 = vmul.f32 %v428, %v435
        %v437 = vld [vmem:[%s2] sm:$0x1]
        %v438 = vadd.f32 %v437, 1.0
        %v440 = vlaneseq
        %v441 = vshrl.u32 %v440, 7
        %v442 = vsub.s32 0, %v441
        %v443 = vrot.slane %v438, %v442
        %v445 = vmul.f32 %v436, %v443
        %v446 = vld [vmem:[#allocation3] sm:$0xff]
        %v447 = vld [vmem:[#allocation3 + $0x8] sm:$0xff]
        %v448 = vld [vmem:[#allocation3 + $0x10] sm:$0xff]
        %v449 = vld [vmem:[#allocation3 + $0x18] sm:$0xff]
        %v450 = vld [vmem:[#allocation3 + $0x20] sm:$0xff]
        %v451 = vld [vmem:[#allocation3 + $0x28] sm:$0xff]
        %v452 = vld [vmem:[#allocation3 + $0x30] sm:$0xff]
        %v453 = vld [vmem:[#allocation3 + $0x38] sm:$0xff]
        %v454 = vld [vmem:[#allocation3 + $0x40] sm:$0xff]
        %v455 = vld [vmem:[#allocation3 + $0x48] sm:$0xff]
        %v456 = vld [vmem:[#allocation3 + $0x50] sm:$0xff]
        %v457 = vld [vmem:[#allocation3 + $0x58] sm:$0xff]
        %v458 = vld [vmem:[#allocation3 + $0x60] sm:$0xff]
        %v459 = vld [vmem:[#allocation3 + $0x68] sm:$0xff]
        %v460 = vld [vmem:[#allocation3 + $0x70] sm:$0xff]
        %v461 = vld [vmem:[#allocation3 + $0x78] sm:$0xff]
        %v462 = vld [vmem:[#allocation3 + $0x80] sm:$0xff]
        %v463 = vld [vmem:[#allocation3 + $0x88] sm:$0xff]
        %v464 = vld [vmem:[#allocation3 + $0x90] sm:$0xff]
        %v465 = vld [vmem:[#allocation3 + $0x98] sm:$0xff]
        %v466 = vld [vmem:[#allocation3 + $0xa0] sm:$0xff]
        %v467 = vld [vmem:[#allocation3 + $0xa8] sm:$0xff]
        %v468 = vld [vmem:[#allocation3 + $0xb0] sm:$0xff]
        %v469 = vld [vmem:[#allocation3 + $0xb8] sm:$0xff]
        %v470 = vld [vmem:[#allocation3 + $0xc0] sm:$0xff]
        %v471 = vld [vmem:[#allocation3 + $0xc8] sm:$0xff]
        %v472 = vld [vmem:[#allocation3 + $0xd0] sm:$0xff]
        %v473 = vld [vmem:[#allocation3 + $0xd8] sm:$0xff]
        %v474 = vld [vmem:[#allocation3 + $0xe0] sm:$0xff]
        %v475 = vld [vmem:[#allocation3 + $0xe8] sm:$0xff]
        %v476 = vld [vmem:[#allocation3 + $0xf0] sm:$0xff]
        %v477 = vld [vmem:[#allocation3 + $0xf8] sm:$0xff]
        %v478 = vld [vmem:[#allocation3 + $0x100] sm:$0xff]
        %v479 = vld [vmem:[#allocation3 + $0x108] sm:$0xff]
        %v480 = vld [vmem:[#allocation3 + $0x110] sm:$0xff]
        %v481 = vld [vmem:[#allocation3 + $0x118] sm:$0xff]
        %v482 = vld [vmem:[#allocation3 + $0x120] sm:$0xff]
        %v483 = vld [vmem:[#allocation3 + $0x128] sm:$0xff]
        %v484 = vld [vmem:[#allocation3 + $0x130] sm:$0xff]
        %v485 = vld [vmem:[#allocation3 + $0x138] sm:$0xff]
        %v486 = vld [vmem:[#allocation3 + $0x140] sm:$0xff]
        %v487 = vld [vmem:[#allocation3 + $0x148] sm:$0xff]
        %v488 = vld [vmem:[#allocation3 + $0x150] sm:$0xff]
        %v489 = vld [vmem:[#allocation3 + $0x158] sm:$0xff]
        %v490 = vld [vmem:[#allocation3 + $0x160] sm:$0xff]
        %v491 = vld [vmem:[#allocation3 + $0x168] sm:$0xff]
        %v492 = vld [vmem:[#allocation3 + $0x170] sm:$0xff]
        %v493 = vld [vmem:[#allocation3 + $0x178] sm:$0xff]
        %v494 = vld [vmem:[#allocation3 + $0x180] sm:$0xff]
        %v495 = vld [vmem:[#allocation3 + $0x188] sm:$0xff]
        %v496 = vld [vmem:[#allocation3 + $0x190] sm:$0xff]
        %v497 = vld [vmem:[#allocation3 + $0x198] sm:$0xff]
        %v498 = vld [vmem:[#allocation3 + $0x1a0] sm:$0xff]
        %v499 = vld [vmem:[#allocation3 + $0x1a8] sm:$0xff]
        %v500 = vld [vmem:[#allocation3 + $0x1b0] sm:$0xff]
        %v501 = vld [vmem:[#allocation3 + $0x1b8] sm:$0xff]
        %v502 = vld [vmem:[#allocation3 + $0x1c0] sm:$0xff]
        %v503 = vld [vmem:[#allocation3 + $0x1c8] sm:$0xff]
        %v504 = vld [vmem:[#allocation3 + $0x1d0] sm:$0xff]
        %v505 = vld [vmem:[#allocation3 + $0x1d8] sm:$0xff]
        %v506 = vld [vmem:[#allocation3 + $0x1e0] sm:$0xff]
        %v507 = vld [vmem:[#allocation3 + $0x1e8] sm:$0xff]
        %v508 = vld [vmem:[#allocation3 + $0x1f0] sm:$0xff]
        %v509 = vld [vmem:[#allocation3 + $0x1f8] sm:$0xff]
        %510 = vmatprep.subr.mxu0 %v447
        %511 = vmatpush1.msra.mxu0 %v446
        %512 = vmatprep.subr.mxu0 %v451
        %513 = vmatpush1.msra.mxu0 %v450
        %514 = vmatprep.subr.mxu0 %v455
        %515 = vmatpush1.msra.mxu0 %v454
        %516 = vmatprep.subr.mxu0 %v459
        %517 = vmatpush1.msra.mxu0 %v458
        %518 = vmatprep.subr.mxu0 %v463
        %519 = vmatpush1.msra.mxu0 %v462
        %520 = vmatprep.subr.mxu0 %v467
        %521 = vmatpush1.msra.mxu0 %v466
        %522 = vmatprep.subr.mxu0 %v471
        %523 = vmatpush1.msra.mxu0 %v470
        %524 = vmatprep.subr.mxu0 %v475
        %525 = vmatpush1.msra.mxu0 %v474
        %526 = vmatprep.subr.mxu0 %v479
        %527 = vmatpush1.msra.mxu0 %v478
        %528 = vmatprep.subr.mxu0 %v483
        %529 = vmatpush1.msra.mxu0 %v482
        %530 = vmatprep.subr.mxu0 %v487
        %531 = vmatpush1.msra.mxu0 %v486
        %532 = vmatprep.subr.mxu0 %v491
        %533 = vmatpush1.msra.mxu0 %v490
        %534 = vmatprep.subr.mxu0 %v495
        %535 = vmatpush1.msra.mxu0 %v494
        %536 = vmatprep.subr.mxu0 %v499
        %537 = vmatpush1.msra.mxu0 %v498
        %538 = vmatprep.subr.mxu0 %v503
        %539 = vmatpush1.msra.mxu0 %v502
        %540 = vmatprep.subr.mxu0 %v507
        %541 = vmatpush1.msra.mxu0 %v506
        %542 = vmatprep.subr.mxu0 0.0
        %543 = vmatpush1.msra.mxu0 0.0
        %544 = vmatprep.subr.mxu0 0.0
        %545 = vmatpush1.msra.mxu0 0.0
        %546 = vmatprep.subr.mxu0 0.0
        %547 = vmatpush1.msra.mxu0 0.0
        %548 = vmatprep.subr.mxu0 0.0
        %549 = vmatpush1.msra.mxu0 0.0
        %550 = vmatprep.subr.mxu0 0.0
        %551 = vmatpush1.msra.mxu0 0.0
        %552 = vmatprep.subr.mxu0 0.0
        %553 = vmatpush1.msra.mxu0 0.0
        %554 = vmatprep.subr.mxu0 0.0
        %555 = vmatpush1.msra.mxu0 0.0
        %556 = vmatprep.subr.mxu0 0.0
        %557 = vmatpush1.msra.mxu0 0.0
        %558 = vmatprep.subr.mxu0 0.0
        %559 = vmatpush1.msra.mxu0 0.0
        %560 = vmatprep.subr.mxu0 0.0
        %561 = vmatpush1.msra.mxu0 0.0
        %562 = vmatprep.subr.mxu0 0.0
        %563 = vmatpush1.msra.mxu0 0.0
        %564 = vmatprep.subr.mxu0 0.0
        %565 = vmatpush1.msra.mxu0 0.0
        %566 = vmatprep.subr.mxu0 0.0
        %567 = vmatpush1.msra.mxu0 0.0
        %568 = vmatprep.subr.mxu0 0.0
        %569 = vmatpush1.msra.mxu0 0.0
        %570 = vmatprep.subr.mxu0 0.0
        %571 = vmatpush1.msra.mxu0 0.0
        %572 = vmatprep.subr.mxu0 0.0
        %573 = vmatpush1.msra.mxu0 0.0
        %574 = vmatprep.mubr.f32.mxu0 0.0
        %575 = vmatmul.mubr.f32.gmra.mrb[0].mxu0 %v445
        %v576 = vpop.f32.mrb[0].mxu0
        %v577 = vadd.f32 0.0, %v576
        %v578 = vpop.f32.mrb[0].mxu0
        %v579 = vadd.f32 0.0, %v578
        %580 = vdwg.mxu0
        %581 = vmatprep.subr.mxu0 %v449
        %582 = vmatpush1.msra.mxu0 %v448
        %583 = vmatprep.subr.mxu0 %v453
        %584 = vmatpush1.msra.mxu0 %v452
        %585 = vmatprep.subr.mxu0 %v457
        %586 = vmatpush1.msra.mxu0 %v456
        %587 = vmatprep.subr.mxu0 %v461
        %588 = vmatpush1.msra.mxu0 %v460
        %589 = vmatprep.subr.mxu0 %v465
        %590 = vmatpush1.msra.mxu0 %v464
        %591 = vmatprep.subr.mxu0 %v469
        %592 = vmatpush1.msra.mxu0 %v468
        %593 = vmatprep.subr.mxu0 %v473
        %594 = vmatpush1.msra.mxu0 %v472
        %595 = vmatprep.subr.mxu0 %v477
        %596 = vmatpush1.msra.mxu0 %v476
        %597 = vmatprep.subr.mxu0 %v481
        %598 = vmatpush1.msra.mxu0 %v480
        %599 = vmatprep.subr.mxu0 %v485
        %600 = vmatpush1.msra.mxu0 %v484
        %601 = vmatprep.subr.mxu0 %v489
        %602 = vmatpush1.msra.mxu0 %v488
        %603 = vmatprep.subr.mxu0 %v493
        %604 = vmatpush1.msra.mxu0 %v492
        %605 = vmatprep.subr.mxu0 %v497
        %606 = vmatpush1.msra.mxu0 %v496
        %607 = vmatprep.subr.mxu0 %v501
        %608 = vmatpush1.msra.mxu0 %v500
        %609 = vmatprep.subr.mxu0 %v505
        %610 = vmatpush1.msra.mxu0 %v504
        %611 = vmatprep.subr.mxu0 %v509
        %612 = vmatpush1.msra.mxu0 %v508
        %613 = vmatprep.subr.mxu0 0.0
        %614 = vmatpush1.msra.mxu0 0.0
        %615 = vmatprep.subr.mxu0 0.0
        %616 = vmatpush1.msra.mxu0 0.0
        %617 = vmatprep.subr.mxu0 0.0
        %618 = vmatpush1.msra.mxu0 0.0
        %619 = vmatprep.subr.mxu0 0.0
        %620 = vmatpush1.msra.mxu0 0.0
        %621 = vmatprep.subr.mxu0 0.0
        %622 = vmatpush1.msra.mxu0 0.0
        %623 = vmatprep.subr.mxu0 0.0
        %624 = vmatpush1.msra.mxu0 0.0
        %625 = vmatprep.subr.mxu0 0.0
        %626 = vmatpush1.msra.mxu0 0.0
        %627 = vmatprep.subr.mxu0 0.0
        %628 = vmatpush1.msra.mxu0 0.0
        %629 = vmatprep.subr.mxu0 0.0
        %630 = vmatpush1.msra.mxu0 0.0
        %631 = vmatprep.subr.mxu0 0.0
        %632 = vmatpush1.msra.mxu0 0.0
        %633 = vmatprep.subr.mxu0 0.0
        %634 = vmatpush1.msra.mxu0 0.0
        %635 = vmatprep.subr.mxu0 0.0
        %636 = vmatpush1.msra.mxu0 0.0
        %637 = vmatprep.subr.mxu0 0.0
        %638 = vmatpush1.msra.mxu0 0.0
        %639 = vmatprep.subr.mxu0 0.0
        %640 = vmatpush1.msra.mxu0 0.0
        %641 = vmatprep.subr.mxu0 0.0
        %642 = vmatpush1.msra.mxu0 0.0
        %643 = vmatprep.subr.mxu0 0.0
        %644 = vmatpush1.msra.mxu0 0.0
        %645 = vmatprep.mubr.f32.mxu0 0.0
        %646 = vmatmul.mubr.f32.gmra.mrb[0].mxu0 %v445
        %v647 = vpop.f32.mrb[0].mxu0
        %v648 = vadd.f32 0.0, %v647
        %v649 = vpop.f32.mrb[0].mxu0
        %v650 = vadd.f32 0.0, %v649
        %651 = vdwg.mxu0
        %v652 = vld [vmem:[%s4] sm:$0xff]
        %v653 = vld [vmem:[%s5] sm:$0xff]
        %v654 = vmul.f32 %v577, %v652
        %v655 = vmul.f32 %v579, %v653
        %v656 = vadd.f32 %v654, %v655
        %v657 = vmul.f32 %v648, %v652
        %659 = vrot.lane.b32.xlu0 %v653, 64
        %v660 = vpop.permute.xlu0 %659
        %v662 = vmul.f32 %v648, %v660
        %664 = vrot.lane.b32.xlu0 %v662, 64
        %v665 = vpop.permute.xlu0 %664
        %v667 = vadd.f32 %v657, %v665
        %s668 = sld [smem:[#allocation2]]
        %s669 = ssub.f32 1.0, %s668
        %v670 = vld [vmem:[%s6] sm:$0x1]
        %v671 = vlaneseq
        %v672 = vshrl.u32 %v671, 7
        %v673 = vadd.s32 %v672, 8
        %vm674 = vcmp.lt.s32.totalorder %v672, 0
        %v675 = vsub.s32 0, %v672
        %v676 = vsel %vm674, %v675, %v672
        %v677 = vshrl.u32 %v676, 3
        %v678 = vand.u32 %v676, 7
        %v679 = vsub.s32 0, %v678
        %v680 = vsel %vm674, %v679, %v678
        %vm681 = vcmp.lt.s32.totalorder %v673, 0
        %v682 = vsub.s32 0, %v673
        %v683 = vsel %vm681, %v682, %v673
        %v684 = vshrl.u32 %v683, 3
        %v685 = vand.u32 %v683, 7
        %v686 = vsub.s32 0, %v685
        %v687 = vsel %vm681, %v686, %v685
        %vm688 = vcmp.ne.s32.totalorder %v680, 0
        %vm689 = vcmp.ne.s32.totalorder %v687, 0
        %vm690 = vcmp.lt.s32.totalorder %v680, 0
        %vm691 = vcmp.lt.s32.totalorder %v687, 0
        %vm692 = vmand %vm690, %vm688
        %vm693 = vmand %vm691, %vm689
        %v694 = vadd.s32 %v680, 8
        %v695 = vadd.s32 %v687, 8
        %v696 = vsel %vm692, %v694, %v680
        %v697 = vsel %vm693, %v695, %v687
        %v698 = vlaneseq
        %v699 = vand.u32 %v698, 127
        %vm700 = vcmp.ge.s32.totalorder %v696, %v699
        %vm701 = vcmp.ge.s32.totalorder %v697, %v699
        %v702 = vsel %vm700, 0.0, -1e+09
        %v703 = vsel %vm701, 0.0, -1e+09
        %705 = vrot.lane.b32.xlu0 %v656, 64
        %v706 = vpop.permute.xlu0 %705
        %vm707 = vcmask 523264
        %v708 = vsel %vm707, %v656, 0
        %v710 = vsel %vm707, %v706, 0
        %v713 = vsel %vm707, %v667, 0
        %715 = vmatprep.subr.mxu0 0.0
        %716 = vmatpush1.xpose.msra.mxu0 %v713
        %717 = vmatprep.subr.mxu0 0.0
        %718 = vmatpush1.xpose.msra.mxu0 0.0
        %719 = vmatprep.subr.mxu0 0.0
        %720 = vmatpush1.xpose.msra.mxu0 0.0
        %721 = vmatprep.subr.mxu0 0.0
        %722 = vmatpush1.xpose.msra.mxu0 0.0
        %723 = vmatprep.subr.mxu0 0.0
        %724 = vmatpush1.xpose.msra.mxu0 0.0
        %725 = vmatprep.subr.mxu0 0.0
        %726 = vmatpush1.xpose.msra.mxu0 0.0
        %727 = vmatprep.subr.mxu0 0.0
        %728 = vmatpush1.xpose.msra.mxu0 0.0
        %729 = vmatprep.subr.mxu0 0.0
        %730 = vmatpush1.xpose.msra.mxu0 0.0
        %731 = vmatprep.subr.mxu0 0.0
        %732 = vmatpush1.xpose.msra.mxu0 0.0
        %733 = vmatprep.subr.mxu0 0.0
        %734 = vmatpush1.xpose.msra.mxu0 0.0
        %735 = vmatprep.subr.mxu0 0.0
        %736 = vmatpush1.xpose.msra.mxu0 0.0
        %737 = vmatprep.subr.mxu0 0.0
        %738 = vmatpush1.xpose.msra.mxu0 0.0
        %739 = vmatprep.subr.mxu0 0.0
        %740 = vmatpush1.xpose.msra.mxu0 0.0
        %741 = vmatprep.subr.mxu0 0.0
        %742 = vmatpush1.xpose.msra.mxu0 0.0
        %743 = vmatprep.subr.mxu0 0.0
        %744 = vmatpush1.xpose.msra.mxu0 0.0
        %745 = vmatprep.subr.mxu0 0.0
        %746 = vmatpush1.xpose.msra.mxu0 0.0
        %747 = vmatprep.subr.mxu0 0.0
        %748 = vmatpush1.xpose.msra.mxu0 0.0
        %749 = vmatprep.subr.mxu0 0.0
        %750 = vmatpush1.xpose.msra.mxu0 0.0
        %751 = vmatprep.subr.mxu0 0.0
        %752 = vmatpush1.xpose.msra.mxu0 0.0
        %753 = vmatprep.subr.mxu0 0.0
        %754 = vmatpush1.xpose.msra.mxu0 0.0
        %755 = vmatprep.subr.mxu0 0.0
        %756 = vmatpush1.xpose.msra.mxu0 0.0
        %757 = vmatprep.subr.mxu0 0.0
        %758 = vmatpush1.xpose.msra.mxu0 0.0
        %759 = vmatprep.subr.mxu0 0.0
        %760 = vmatpush1.xpose.msra.mxu0 0.0
        %761 = vmatprep.subr.mxu0 0.0
        %762 = vmatpush1.xpose.msra.mxu0 0.0
        %763 = vmatprep.subr.mxu0 0.0
        %764 = vmatpush1.xpose.msra.mxu0 0.0
        %765 = vmatprep.subr.mxu0 0.0
        %766 = vmatpush1.xpose.msra.mxu0 0.0
        %767 = vmatprep.subr.mxu0 0.0
        %768 = vmatpush1.xpose.msra.mxu0 0.0
        %769 = vmatprep.subr.mxu0 0.0
        %770 = vmatpush1.xpose.msra.mxu0 0.0
        %771 = vmatprep.subr.mxu0 0.0
        %772 = vmatpush1.xpose.msra.mxu0 0.0
        %773 = vmatprep.subr.mxu0 0.0
        %774 = vmatpush1.xpose.msra.mxu0 0.0
        %775 = vmatprep.subr.mxu0 0.0
        %776 = vmatpush1.xpose.msra.mxu0 0.0
        %777 = vmatprep.subr.mxu0 0.0
        %778 = vmatpush1.xpose.msra.mxu0 0.0
        %779 = vmatprep.mubr.f32.mxu0 0.0
        %780 = vmatmul.mubr.f32.gmra.mrb[0].mxu0 %v708
        %v781 = vpop.f32.mrb[0].mxu0
        %v782 = vadd.f32 %v702, %v781
        %v783 = vpop.f32.mrb[0].mxu0
        %784 = vmatprep.mubr.f32.mxu0 0.0
        %785 = vmatmul.mubr.f32.gmra.mrb[0].mxu0 %v710
        %v786 = vpop.f32.mrb[0].mxu0
        %v787 = vadd.f32 %v703, %v786
        %v788 = vpop.f32.mrb[0].mxu0
        %789 = vdwg.mxu0
        %vm790 = vcmask 64512
        %v791 = vsel %vm790, %v782, -inf
        %792 = vmax.xlane.f32.xlu0 %v791
        %v793 = vpop.xlane.xlu0 %792
        %v794 = vsel %vm790, %v787, -inf
        %795 = vmax.xlane.f32.xlu0 %v794
        %v796 = vpop.xlane.xlu0 %795
        %v797 = vsub.f32 %v782, %v793
        %v798 = vsub.f32 %v787, %v796
        %v799 = vmul.f32 %v797, 1.442695
        %v800 = vpow.pop %v799
        %v801 = vmul.f32 %v798, 1.442695
        %v802 = vpow.pop %v801
        %v803 = vsel %vm790, %v800, 0.0
        %804 = vadd.xlane.f32.xlu0 %v803
        %v805 = vpop.xlane.xlu0 %804
        %v806 = vsel %vm790, %v802, 0.0
        %807 = vadd.xlane.f32.xlu0 %v806
        %v808 = vpop.xlane.xlu0 %807
        %v809 = vrcp.pop %v805
        %v810 = vmul.f32 %v800, %v809
        %v811 = vrcp.pop %v808
        %v812 = vmul.f32 %v802, %v811
        %v814 = vsel %vm790, %v810, 0
        %v817 = vsel %vm790, %v812, 0
        %819 = vmatprep.subr.mxu0 0.0
        %820 = vmatpush1.msra.mxu0 %v650
        %821 = vmatprep.subr.mxu0 0.0
        %822 = vmatpush1.msra.mxu0 0.0
        %823 = vmatprep.subr.mxu0 0.0
        %824 = vmatpush1.msra.mxu0 0.0
        %825 = vmatprep.subr.mxu0 0.0
        %826 = vmatpush1.msra.mxu0 0.0
        %827 = vmatprep.subr.mxu0 0.0
        %828 = vmatpush1.msra.mxu0 0.0
        %829 = vmatprep.subr.mxu0 0.0
        %830 = vmatpush1.msra.mxu0 0.0
        %831 = vmatprep.subr.mxu0 0.0
        %832 = vmatpush1.msra.mxu0 0.0
        %833 = vmatprep.subr.mxu0 0.0
        %834 = vmatpush1.msra.mxu0 0.0
        %835 = vmatprep.subr.mxu0 0.0
        %836 = vmatpush1.msra.mxu0 0.0
        %837 = vmatprep.subr.mxu0 0.0
        %838 = vmatpush1.msra.mxu0 0.0
        %839 = vmatprep.subr.mxu0 0.0
        %840 = vmatpush1.msra.mxu0 0.0
        %841 = vmatprep.subr.mxu0 0.0
        %842 = vmatpush1.msra.mxu0 0.0
        %843 = vmatprep.subr.mxu0 0.0
        %844 = vmatpush1.msra.mxu0 0.0
        %845 = vmatprep.subr.mxu0 0.0
        %846 = vmatpush1.msra.mxu0 0.0
        %847 = vmatprep.subr.mxu0 0.0
        %848 = vmatpush1.msra.mxu0 0.0
        %849 = vmatprep.subr.mxu0 0.0
        %850 = vmatpush1.msra.mxu0 0.0
        %851 = vmatprep.subr.mxu0 0.0
        %852 = vmatpush1.msra.mxu0 0.0
        %853 = vmatprep.subr.mxu0 0.0
        %854 = vmatpush1.msra.mxu0 0.0
        %855 = vmatprep.subr.mxu0 0.0
        %856 = vmatpush1.msra.mxu0 0.0
        %857 = vmatprep.subr.mxu0 0.0
        %858 = vmatpush1.msra.mxu0 0.0
        %859 = vmatprep.subr.mxu0 0.0
        %860 = vmatpush1.msra.mxu0 0.0
        %861 = vmatprep.subr.mxu0 0.0
        %862 = vmatpush1.msra.mxu0 0.0
        %863 = vmatprep.subr.mxu0 0.0
        %864 = vmatpush1.msra.mxu0 0.0
        %865 = vmatprep.subr.mxu0 0.0
        %866 = vmatpush1.msra.mxu0 0.0
        %867 = vmatprep.subr.mxu0 0.0
        %868 = vmatpush1.msra.mxu0 0.0
        %869 = vmatprep.subr.mxu0 0.0
        %870 = vmatpush1.msra.mxu0 0.0
        %871 = vmatprep.subr.mxu0 0.0
        %872 = vmatpush1.msra.mxu0 0.0
        %873 = vmatprep.subr.mxu0 0.0
        %874 = vmatpush1.msra.mxu0 0.0
        %875 = vmatprep.subr.mxu0 0.0
        %876 = vmatpush1.msra.mxu0 0.0
        %877 = vmatprep.subr.mxu0 0.0
        %878 = vmatpush1.msra.mxu0 0.0
        %879 = vmatprep.subr.mxu0 0.0
        %880 = vmatpush1.msra.mxu0 0.0
        %881 = vmatprep.subr.mxu0 0.0
        %882 = vmatpush1.msra.mxu0 0.0
        %883 = vmatprep.mubr.f32.mxu0 0.0
        %884 = vmatmul.mubr.f32.gmra.mrb[0].mxu0 %v814
        %v885 = vpop.f32.mrb[0].mxu0
        %v886 = vadd.f32 0.0, %v885
        %v887 = vpop.f32.mrb[0].mxu0
        %888 = vmatprep.mubr.f32.mxu0 0.0
        %889 = vmatmul.mubr.f32.gmra.mrb[0].mxu0 %v817
        %v890 = vpop.f32.mrb[0].mxu0
        %v891 = vadd.f32 0.0, %v890
        %v892 = vpop.f32.mrb[0].mxu0
        %893 = vdwg.mxu0
        %v894 = vstv %s669
        %v895 = vmul.f32 %v886, %v894
        %v896 = vmul.f32 %v891, %v894
        %v897 = vmul.f32 %v895, %v895
        %v898 = vmul.f32 %v896, %v896
        %v899 = vsel %vm707, %v897, 0.0
        %900 = vadd.xlane.f32.xlu0 %v899
        %v901 = vpop.xlane.xlu0 %900
        %v902 = vsel %vm707, %v898, 0.0
        %903 = vadd.xlane.f32.xlu0 %v902
        %v904 = vpop.xlane.xlu0 %903
        %v905 = vrcp.pop 64.0
        %v906 = vmul.f32 %v901, %v905
        %v907 = vmul.f32 %v904, %v905
        %v908 = vadd.f32 %v906, 1e-05
        %v909 = vadd.f32 %v907, 1e-05
        %v910 = vrsqrt.pop %v908
        %v911 = vrsqrt.pop %v909
        %v912 = vmul.f32 %v895, %v910
        %v913 = vmul.f32 %v896, %v911
        %v915 = vlaneseq
        %v916 = vshrl.u32 %v915, 7
        %v917 = vsub.s32 0, %v916
        %v918 = vrot.slane %v670, %v917
        %v920 = vmul.f32 %v912, %v918
        %v921 = vmul.f32 %v913, %v918
        %v922 = vld [vmem:[%s7] sm:$0xff]
        %v923 = vld [vmem:[%s7 + $0x8] sm:$0xff]
        %v924 = vld [vmem:[%s7 + $0x10] sm:$0xff]
        %v925 = vld [vmem:[%s7 + $0x18] sm:$0xff]
        %v926 = vld [vmem:[%s7 + $0x20] sm:$0xff]
        %v927 = vld [vmem:[%s7 + $0x28] sm:$0xff]
        %v928 = vld [vmem:[%s7 + $0x30] sm:$0xff]
        %v929 = vld [vmem:[%s7 + $0x38] sm:$0xff]
        %v930 = vld [vmem:[%s7 + $0x40] sm:$0xff]
        %v931 = vld [vmem:[%s7 + $0x48] sm:$0xff]
        %v932 = vld [vmem:[%s7 + $0x50] sm:$0xff]
        %v933 = vld [vmem:[%s7 + $0x58] sm:$0xff]
        %v934 = vld [vmem:[%s7 + $0x60] sm:$0xff]
        %v935 = vld [vmem:[%s7 + $0x68] sm:$0xff]
        %v936 = vld [vmem:[%s7 + $0x70] sm:$0xff]
        %v937 = vld [vmem:[%s7 + $0x78] sm:$0xff]
        %v939 = vsel %vm707, %v921, 0
        %941 = vmatprep.subr.mxu0 0.0
        %942 = vmatpush1.msra.mxu0 %v930
        %943 = vmatprep.subr.mxu0 0.0
        %944 = vmatpush1.msra.mxu0 %v931
        %945 = vmatprep.subr.mxu0 0.0
        %946 = vmatpush1.msra.mxu0 %v932
        %947 = vmatprep.subr.mxu0 0.0
        %948 = vmatpush1.msra.mxu0 %v933
        %949 = vmatprep.subr.mxu0 0.0
        %950 = vmatpush1.msra.mxu0 %v934
        %951 = vmatprep.subr.mxu0 0.0
        %952 = vmatpush1.msra.mxu0 %v935
        %953 = vmatprep.subr.mxu0 0.0
        %954 = vmatpush1.msra.mxu0 %v936
        %955 = vmatprep.subr.mxu0 0.0
        %956 = vmatpush1.msra.mxu0 %v937
        %957 = vmatprep.subr.mxu0 0.0
        %958 = vmatpush1.msra.mxu0 0.0
        %959 = vmatprep.subr.mxu0 0.0
        %960 = vmatpush1.msra.mxu0 0.0
        %961 = vmatprep.subr.mxu0 0.0
        %962 = vmatpush1.msra.mxu0 0.0
        %963 = vmatprep.subr.mxu0 0.0
        %964 = vmatpush1.msra.mxu0 0.0
        %965 = vmatprep.subr.mxu0 0.0
        %966 = vmatpush1.msra.mxu0 0.0
        %967 = vmatprep.subr.mxu0 0.0
        %968 = vmatpush1.msra.mxu0 0.0
        %969 = vmatprep.subr.mxu0 0.0
        %970 = vmatpush1.msra.mxu0 0.0
        %971 = vmatprep.subr.mxu0 0.0
        %972 = vmatpush1.msra.mxu0 0.0
        %973 = vmatprep.subr.mxu0 0.0
        %974 = vmatpush1.msra.mxu0 0.0
        %975 = vmatprep.subr.mxu0 0.0
        %976 = vmatpush1.msra.mxu0 0.0
        %977 = vmatprep.subr.mxu0 0.0
        %978 = vmatpush1.msra.mxu0 0.0
        %979 = vmatprep.subr.mxu0 0.0
        %980 = vmatpush1.msra.mxu0 0.0
        %981 = vmatprep.subr.mxu0 0.0
        %982 = vmatpush1.msra.mxu0 0.0
        %983 = vmatprep.subr.mxu0 0.0
        %984 = vmatpush1.msra.mxu0 0.0
        %985 = vmatprep.subr.mxu0 0.0
        %986 = vmatpush1.msra.mxu0 0.0
        %987 = vmatprep.subr.mxu0 0.0
        %988 = vmatpush1.msra.mxu0 0.0
        %989 = vmatprep.subr.mxu0 0.0
        %990 = vmatpush1.msra.mxu0 0.0
        %991 = vmatprep.subr.mxu0 0.0
        %992 = vmatpush1.msra.mxu0 0.0
        %993 = vmatprep.subr.mxu0 0.0
        %994 = vmatpush1.msra.mxu0 0.0
        %995 = vmatprep.subr.mxu0 0.0
        %996 = vmatpush1.msra.mxu0 0.0
        %997 = vmatprep.subr.mxu0 0.0
        %998 = vmatpush1.msra.mxu0 0.0
        %999 = vmatprep.subr.mxu0 0.0
        %1000 = vmatpush1.msra.mxu0 0.0
        %1001 = vmatprep.subr.mxu0 0.0
        %1002 = vmatpush1.msra.mxu0 0.0
        %1003 = vmatprep.subr.mxu0 0.0
        %1004 = vmatpush1.msra.mxu0 0.0
        %1005 = vmatprep.mubr.f32.mxu0 0.0
        %1006 = vmatmul.mubr.f32.gmra.mrb[0].mxu0 %v939
        %v1007 = vpop.f32.mrb[0].mxu0
        %v1008 = vadd.f32 0.0, %v1007
        %v1009 = vpop.f32.mrb[0].mxu0
        %1010 = vdwg.mxu0
        %v1012 = vsel %vm707, %v920, 0
        %1014 = vmatprep.subr.mxu0 0.0
        %1015 = vmatpush1.msra.mxu0 %v922
        %1016 = vmatprep.subr.mxu0 0.0
        %1017 = vmatpush1.msra.mxu0 %v923
        %1018 = vmatprep.subr.mxu0 0.0
        %1019 = vmatpush1.msra.mxu0 %v924
        %1020 = vmatprep.subr.mxu0 0.0
        %1021 = vmatpush1.msra.mxu0 %v925
        %1022 = vmatprep.subr.mxu0 0.0
        %1023 = vmatpush1.msra.mxu0 %v926
        %1024 = vmatprep.subr.mxu0 0.0
        %1025 = vmatpush1.msra.mxu0 %v927
        %1026 = vmatprep.subr.mxu0 0.0
        %1027 = vmatpush1.msra.mxu0 %v928
        %1028 = vmatprep.subr.mxu0 0.0
        %1029 = vmatpush1.msra.mxu0 %v929
        %1030 = vmatprep.subr.mxu0 0.0
        %1031 = vmatpush1.msra.mxu0 0.0
        %1032 = vmatprep.subr.mxu0 0.0
        %1033 = vmatpush1.msra.mxu0 0.0
        %1034 = vmatprep.subr.mxu0 0.0
        %1035 = vmatpush1.msra.mxu0 0.0
        %1036 = vmatprep.subr.mxu0 0.0
        %1037 = vmatpush1.msra.mxu0 0.0
        %1038 = vmatprep.subr.mxu0 0.0
        %1039 = vmatpush1.msra.mxu0 0.0
        %1040 = vmatprep.subr.mxu0 0.0
        %1041 = vmatpush1.msra.mxu0 0.0
        %1042 = vmatprep.subr.mxu0 0.0
        %1043 = vmatpush1.msra.mxu0 0.0
        %1044 = vmatprep.subr.mxu0 0.0
        %1045 = vmatpush1.msra.mxu0 0.0
        %1046 = vmatprep.subr.mxu0 0.0
        %1047 = vmatpush1.msra.mxu0 0.0
        %1048 = vmatprep.subr.mxu0 0.0
        %1049 = vmatpush1.msra.mxu0 0.0
        %1050 = vmatprep.subr.mxu0 0.0
        %1051 = vmatpush1.msra.mxu0 0.0
        %1052 = vmatprep.subr.mxu0 0.0
        %1053 = vmatpush1.msra.mxu0 0.0
        %1054 = vmatprep.subr.mxu0 0.0
        %1055 = vmatpush1.msra.mxu0 0.0
        %1056 = vmatprep.subr.mxu0 0.0
        %1057 = vmatpush1.msra.mxu0 0.0
        %1058 = vmatprep.subr.mxu0 0.0
        %1059 = vmatpush1.msra.mxu0 0.0
        %1060 = vmatprep.subr.mxu0 0.0
        %1061 = vmatpush1.msra.mxu0 0.0
        %1062 = vmatprep.subr.mxu0 0.0
        %1063 = vmatpush1.msra.mxu0 0.0
        %1064 = vmatprep.subr.mxu0 0.0
        %1065 = vmatpush1.msra.mxu0 0.0
        %1066 = vmatprep.subr.mxu0 0.0
        %1067 = vmatpush1.msra.mxu0 0.0
        %1068 = vmatprep.subr.mxu0 0.0
        %1069 = vmatpush1.msra.mxu0 0.0
        %1070 = vmatprep.subr.mxu0 0.0
        %1071 = vmatpush1.msra.mxu0 0.0
        %1072 = vmatprep.subr.mxu0 0.0
        %1073 = vmatpush1.msra.mxu0 0.0
        %1074 = vmatprep.subr.mxu0 0.0
        %1075 = vmatpush1.msra.mxu0 0.0
        %1076 = vmatprep.subr.mxu0 0.0
        %1077 = vmatpush1.msra.mxu0 0.0
        %1078 = vmatprep.mubr.f32.mxu0 0.0
        %1079 = vmatmul.mubr.f32.gmra.mrb[0].mxu0 %v1012
        %v1080 = vpop.f32.mrb[0].mxu0
        %v1081 = vadd.f32 %v1008, %v1080
        %v1082 = vpop.f32.mrb[0].mxu0
        %1083 = vdwg.mxu0
        %v1084 = vadd.f32 %v428, %v1081
        %v1085 = vmul.f32 %v1084, %v1084
        %1086 = vadd.xlane.f32.xlu0 %v1085
        %v1087 = vpop.xlane.xlu0 %1086
        %v1088 = vmul.f32 %v1087, %v432
        %v1089 = vadd.f32 %v1088, 1e-06
        %v1090 = vrsqrt.pop %v1089
        %v1091 = vmul.f32 %v1084, %v1090
        %v1092 = vld [vmem:[%s8] sm:$0x1]
        %v1093 = vadd.f32 %v1092, 1.0
        %v1095 = vlaneseq
        %v1096 = vshrl.u32 %v1095, 7
        %v1097 = vsub.s32 0, %v1096
        %v1098 = vrot.slane %v1093, %v1097
        %v1100 = vmul.f32 %v1091, %v1098
        %v1101 = vld [vmem:[#allocation5] sm:$0xff]
        %v1102 = vld [vmem:[#allocation5 + $0x8] sm:$0xff]
        %v1103 = vld [vmem:[#allocation5 + $0x10] sm:$0xff]
        %v1104 = vld [vmem:[#allocation5 + $0x18] sm:$0xff]
        %v1105 = vld [vmem:[#allocation5 + $0x20] sm:$0xff]
        %v1106 = vld [vmem:[#allocation5 + $0x28] sm:$0xff]
        %v1107 = vld [vmem:[#allocation5 + $0x30] sm:$0xff]
        %v1108 = vld [vmem:[#allocation5 + $0x38] sm:$0xff]
        %v1109 = vld [vmem:[#allocation5 + $0x40] sm:$0xff]
        %v1110 = vld [vmem:[#allocation5 + $0x48] sm:$0xff]
        %v1111 = vld [vmem:[#allocation5 + $0x50] sm:$0xff]
        %v1112 = vld [vmem:[#allocation5 + $0x58] sm:$0xff]
        %v1113 = vld [vmem:[#allocation5 + $0x60] sm:$0xff]
        %v1114 = vld [vmem:[#allocation5 + $0x68] sm:$0xff]
        %v1115 = vld [vmem:[#allocation5 + $0x70] sm:$0xff]
        %v1116 = vld [vmem:[#allocation5 + $0x78] sm:$0xff]
        %v1117 = vld [vmem:[#allocation5 + $0x80] sm:$0xff]
        %v1118 = vld [vmem:[#allocation5 + $0x88] sm:$0xff]
        %v1119 = vld [vmem:[#allocation5 + $0x90] sm:$0xff]
        %v1120 = vld [vmem:[#allocation5 + $0x98] sm:$0xff]
        %v1121 = vld [vmem:[#allocation5 + $0xa0] sm:$0xff]
        %v1122 = vld [vmem:[#allocation5 + $0xa8] sm:$0xff]
        %v1123 = vld [vmem:[#allocation5 + $0xb0] sm:$0xff]
        %v1124 = vld [vmem:[#allocation5 + $0xb8] sm:$0xff]
        %v1125 = vld [vmem:[#allocation5 + $0xc0] sm:$0xff]
        %v1126 = vld [vmem:[#allocation5 + $0xc8] sm:$0xff]
        %v1127 = vld [vmem:[#allocation5 + $0xd0] sm:$0xff]
        %v1128 = vld [vmem:[#allocation5 + $0xd8] sm:$0xff]
        %v1129 = vld [vmem:[#allocation5 + $0xe0] sm:$0xff]
        %v1130 = vld [vmem:[#allocation5 + $0xe8] sm:$0xff]
        %v1131 = vld [vmem:[#allocation5 + $0xf0] sm:$0xff]
        %v1132 = vld [vmem:[#allocation5 + $0xf8] sm:$0xff]
        %v1133 = vld [vmem:[#allocation5 + $0x100] sm:$0xff]
        %v1134 = vld [vmem:[#allocation5 + $0x108] sm:$0xff]
        %v1135 = vld [vmem:[#allocation5 + $0x110] sm:$0xff]
        %v1136 = vld [vmem:[#allocation5 + $0x118] sm:$0xff]
        %v1137 = vld [vmem:[#allocation5 + $0x120] sm:$0xff]
        %v1138 = vld [vmem:[#allocation5 + $0x128] sm:$0xff]
        %v1139 = vld [vmem:[#allocation5 + $0x130] sm:$0xff]
        %v1140 = vld [vmem:[#allocation5 + $0x138] sm:$0xff]
        %v1141 = vld [vmem:[#allocation5 + $0x140] sm:$0xff]
        %v1142 = vld [vmem:[#allocation5 + $0x148] sm:$0xff]
        %v1143 = vld [vmem:[#allocation5 + $0x150] sm:$0xff]
        %v1144 = vld [vmem:[#allocation5 + $0x158] sm:$0xff]
        %v1145 = vld [vmem:[#allocation5 + $0x160] sm:$0xff]
        %v1146 = vld [vmem:[#allocation5 + $0x168] sm:$0xff]
        %v1147 = vld [vmem:[#allocation5 + $0x170] sm:$0xff]
        %v1148 = vld [vmem:[#allocation5 + $0x178] sm:$0xff]
        %v1149 = vld [vmem:[#allocation5 + $0x180] sm:$0xff]
        %v1150 = vld [vmem:[#allocation5 + $0x188] sm:$0xff]
        %v1151 = vld [vmem:[#allocation5 + $0x190] sm:$0xff]
        %v1152 = vld [vmem:[#allocation5 + $0x198] sm:$0xff]
        %v1153 = vld [vmem:[#allocation5 + $0x1a0] sm:$0xff]
        %v1154 = vld [vmem:[#allocation5 + $0x1a8] sm:$0xff]
        %v1155 = vld [vmem:[#allocation5 + $0x1b0] sm:$0xff]
        %v1156 = vld [vmem:[#allocation5 + $0x1b8] sm:$0xff]
        %v1157 = vld [vmem:[#allocation5 + $0x1c0] sm:$0xff]
        %v1158 = vld [vmem:[#allocation5 + $0x1c8] sm:$0xff]
        %v1159 = vld [vmem:[#allocation5 + $0x1d0] sm:$0xff]
        %v1160 = vld [vmem:[#allocation5 + $0x1d8] sm:$0xff]
        %v1161 = vld [vmem:[#allocation5 + $0x1e0] sm:$0xff]
        %v1162 = vld [vmem:[#allocation5 + $0x1e8] sm:$0xff]
        %v1163 = vld [vmem:[#allocation5 + $0x1f0] sm:$0xff]
        %v1164 = vld [vmem:[#allocation5 + $0x1f8] sm:$0xff]
        %1165 = vmatprep.subr.mxu0 %v1102
        %1166 = vmatpush1.msra.mxu0 %v1101
        %1167 = vmatprep.subr.mxu0 %v1106
        %1168 = vmatpush1.msra.mxu0 %v1105
        %1169 = vmatprep.subr.mxu0 %v1110
        %1170 = vmatpush1.msra.mxu0 %v1109
        %1171 = vmatprep.subr.mxu0 %v1114
        %1172 = vmatpush1.msra.mxu0 %v1113
        %1173 = vmatprep.subr.mxu0 %v1118
        %1174 = vmatpush1.msra.mxu0 %v1117
        %1175 = vmatprep.subr.mxu0 %v1122
        %1176 = vmatpush1.msra.mxu0 %v1121
        %1177 = vmatprep.subr.mxu0 %v1126
        %1178 = vmatpush1.msra.mxu0 %v1125
        %1179 = vmatprep.subr.mxu0 %v1130
        %1180 = vmatpush1.msra.mxu0 %v1129
        %1181 = vmatprep.subr.mxu0 %v1134
        %1182 = vmatpush1.msra.mxu0 %v1133
        %1183 = vmatprep.subr.mxu0 %v1138
        %1184 = vmatpush1.msra.mxu0 %v1137
        %1185 = vmatprep.subr.mxu0 %v1142
        %1186 = vmatpush1.msra.mxu0 %v1141
        %1187 = vmatprep.subr.mxu0 %v1146
        %1188 = vmatpush1.msra.mxu0 %v1145
        %1189 = vmatprep.subr.mxu0 %v1150
        %1190 = vmatpush1.msra.mxu0 %v1149
        %1191 = vmatprep.subr.mxu0 %v1154
        %1192 = vmatpush1.msra.mxu0 %v1153
        %1193 = vmatprep.subr.mxu0 %v1158
        %1194 = vmatpush1.msra.mxu0 %v1157
        %1195 = vmatprep.subr.mxu0 %v1162
        %1196 = vmatpush1.msra.mxu0 %v1161
        %1197 = vmatprep.subr.mxu0 0.0
        %1198 = vmatpush1.msra.mxu0 0.0
        %1199 = vmatprep.subr.mxu0 0.0
        %1200 = vmatpush1.msra.mxu0 0.0
        %1201 = vmatprep.subr.mxu0 0.0
        %1202 = vmatpush1.msra.mxu0 0.0
        %1203 = vmatprep.subr.mxu0 0.0
        %1204 = vmatpush1.msra.mxu0 0.0
        %1205 = vmatprep.subr.mxu0 0.0
        %1206 = vmatpush1.msra.mxu0 0.0
        %1207 = vmatprep.subr.mxu0 0.0
        %1208 = vmatpush1.msra.mxu0 0.0
        %1209 = vmatprep.subr.mxu0 0.0
        %1210 = vmatpush1.msra.mxu0 0.0
        %1211 = vmatprep.subr.mxu0 0.0
        %1212 = vmatpush1.msra.mxu0 0.0
        %1213 = vmatprep.subr.mxu0 0.0
        %1214 = vmatpush1.msra.mxu0 0.0
        %1215 = vmatprep.subr.mxu0 0.0
        %1216 = vmatpush1.msra.mxu0 0.0
        %1217 = vmatprep.subr.mxu0 0.0
        %1218 = vmatpush1.msra.mxu0 0.0
        %1219 = vmatprep.subr.mxu0 0.0
        %1220 = vmatpush1.msra.mxu0 0.0
        %1221 = vmatprep.subr.mxu0 0.0
        %1222 = vmatpush1.msra.mxu0 0.0
        %1223 = vmatprep.subr.mxu0 0.0
        %1224 = vmatpush1.msra.mxu0 0.0
        %1225 = vmatprep.subr.mxu0 0.0
        %1226 = vmatpush1.msra.mxu0 0.0
        %1227 = vmatprep.subr.mxu0 0.0
        %1228 = vmatpush1.msra.mxu0 0.0
        %1229 = vmatprep.mubr.f32.mxu0 0.0
        %1230 = vmatmul.mubr.f32.gmra.mrb[0].mxu0 %v1100
        %v1231 = vpop.f32.mrb[0].mxu0
        %v1232 = vadd.f32 0.0, %v1231
        %v1233 = vpop.f32.mrb[0].mxu0
        %v1234 = vadd.f32 0.0, %v1233
        %1235 = vdwg.mxu0
        %1236 = vmatprep.subr.mxu0 %v1104
        %1237 = vmatpush1.msra.mxu0 %v1103
        %1238 = vmatprep.subr.mxu0 %v1108
        %1239 = vmatpush1.msra.mxu0 %v1107
        %1240 = vmatprep.subr.mxu0 %v1112
        %1241 = vmatpush1.msra.mxu0 %v1111
        %1242 = vmatprep.subr.mxu0 %v1116
        %1243 = vmatpush1.msra.mxu0 %v1115
        %1244 = vmatprep.subr.mxu0 %v1120
        %1245 = vmatpush1.msra.mxu0 %v1119
        %1246 = vmatprep.subr.mxu0 %v1124
        %1247 = vmatpush1.msra.mxu0 %v1123
        %1248 = vmatprep.subr.mxu0 %v1128
        %1249 = vmatpush1.msra.mxu0 %v1127
        %1250 = vmatprep.subr.mxu0 %v1132
        %1251 = vmatpush1.msra.mxu0 %v1131
        %1252 = vmatprep.subr.mxu0 %v1136
        %1253 = vmatpush1.msra.mxu0 %v1135
        %1254 = vmatprep.subr.mxu0 %v1140
        %1255 = vmatpush1.msra.mxu0 %v1139
        %1256 = vmatprep.subr.mxu0 %v1144
        %1257 = vmatpush1.msra.mxu0 %v1143
        %1258 = vmatprep.subr.mxu0 %v1148
        %1259 = vmatpush1.msra.mxu0 %v1147
        %1260 = vmatprep.subr.mxu0 %v1152
        %1261 = vmatpush1.msra.mxu0 %v1151
        %1262 = vmatprep.subr.mxu0 %v1156
        %1263 = vmatpush1.msra.mxu0 %v1155
        %1264 = vmatprep.subr.mxu0 %v1160
        %1265 = vmatpush1.msra.mxu0 %v1159
        %1266 = vmatprep.subr.mxu0 %v1164
        %1267 = vmatpush1.msra.mxu0 %v1163
        %1268 = vmatprep.subr.mxu0 0.0
        %1269 = vmatpush1.msra.mxu0 0.0
        %1270 = vmatprep.subr.mxu0 0.0
        %1271 = vmatpush1.msra.mxu0 0.0
        %1272 = vmatprep.subr.mxu0 0.0
        %1273 = vmatpush1.msra.mxu0 0.0
        %1274 = vmatprep.subr.mxu0 0.0
        %1275 = vmatpush1.msra.mxu0 0.0
        %1276 = vmatprep.subr.mxu0 0.0
        %1277 = vmatpush1.msra.mxu0 0.0
        %1278 = vmatprep.subr.mxu0 0.0
        %1279 = vmatpush1.msra.mxu0 0.0
        %1280 = vmatprep.subr.mxu0 0.0
        %1281 = vmatpush1.msra.mxu0 0.0
        %1282 = vmatprep.subr.mxu0 0.0
        %1283 = vmatpush1.msra.mxu0 0.0
        %1284 = vmatprep.subr.mxu0 0.0
        %1285 = vmatpush1.msra.mxu0 0.0
        %1286 = vmatprep.subr.mxu0 0.0
        %1287 = vmatpush1.msra.mxu0 0.0
        %1288 = vmatprep.subr.mxu0 0.0
        %1289 = vmatpush1.msra.mxu0 0.0
        %1290 = vmatprep.subr.mxu0 0.0
        %1291 = vmatpush1.msra.mxu0 0.0
        %1292 = vmatprep.subr.mxu0 0.0
        %1293 = vmatpush1.msra.mxu0 0.0
        %1294 = vmatprep.subr.mxu0 0.0
        %1295 = vmatpush1.msra.mxu0 0.0
        %1296 = vmatprep.subr.mxu0 0.0
        %1297 = vmatpush1.msra.mxu0 0.0
        %1298 = vmatprep.subr.mxu0 0.0
        %1299 = vmatpush1.msra.mxu0 0.0
        %1300 = vmatprep.mubr.f32.mxu0 0.0
        %1301 = vmatmul.mubr.f32.gmra.mrb[0].mxu0 %v1100
        %v1302 = vpop.f32.mrb[0].mxu0
        %v1303 = vadd.f32 0.0, %v1302
        %v1304 = vpop.f32.mrb[0].mxu0
        %v1305 = vadd.f32 0.0, %v1304
        %1306 = vdwg.mxu0
        %v1307 = vmul.f32 %v1232, 0.5
        %v1308 = vmul.f32 %v1234, 0.5
        %v1309 = vmul.f32 %v1232, 0.044715
        %v1310 = vmul.f32 %v1234, 0.044715
        %v1311 = vmul.f32 %v1309, %v1232
        %v1312 = vmul.f32 %v1310, %v1234
        %v1313 = vmul.f32 %v1311, %v1232
        %v1314 = vmul.f32 %v1312, %v1234
        %v1315 = vadd.f32 %v1232, %v1313
        %v1316 = vadd.f32 %v1234, %v1314
        %v1317 = vmul.f32 %v1315, 0.7978846
        %v1318 = vmul.f32 %v1316, 0.7978846
        %v1319 = vtanh.pop %v1317
        %v1320 = vtanh.pop %v1318
        %v1321 = vadd.f32 %v1319, 1.0
        %v1322 = vadd.f32 %v1320, 1.0
        %v1323 = vmul.f32 %v1307, %v1321
        %v1324 = vmul.f32 %v1308, %v1322
        %v1325 = vmul.f32 %v1323, %v1303
        %v1326 = vmul.f32 %v1324, %v1305
        %v1327 = vld [vmem:[#allocation7] sm:$0xff]
        %v1328 = vld [vmem:[#allocation7 + $0x8] sm:$0xff]
        %v1329 = vld [vmem:[#allocation7 + $0x10] sm:$0xff]
        %v1330 = vld [vmem:[#allocation7 + $0x18] sm:$0xff]
        %v1331 = vld [vmem:[#allocation7 + $0x20] sm:$0xff]
        %v1332 = vld [vmem:[#allocation7 + $0x28] sm:$0xff]
        %v1333 = vld [vmem:[#allocation7 + $0x30] sm:$0xff]
        %v1334 = vld [vmem:[#allocation7 + $0x38] sm:$0xff]
        %v1335 = vld [vmem:[#allocation7 + $0x40] sm:$0xff]
        %v1336 = vld [vmem:[#allocation7 + $0x48] sm:$0xff]
        %v1337 = vld [vmem:[#allocation7 + $0x50] sm:$0xff]
        %v1338 = vld [vmem:[#allocation7 + $0x58] sm:$0xff]
        %v1339 = vld [vmem:[#allocation7 + $0x60] sm:$0xff]
        %v1340 = vld [vmem:[#allocation7 + $0x68] sm:$0xff]
        %v1341 = vld [vmem:[#allocation7 + $0x70] sm:$0xff]
        %v1342 = vld [vmem:[#allocation7 + $0x78] sm:$0xff]
        %v1343 = vld [vmem:[#allocation7 + $0x80] sm:$0xff]
        %v1344 = vld [vmem:[#allocation7 + $0x88] sm:$0xff]
        %v1345 = vld [vmem:[#allocation7 + $0x90] sm:$0xff]
        %v1346 = vld [vmem:[#allocation7 + $0x98] sm:$0xff]
        %v1347 = vld [vmem:[#allocation7 + $0xa0] sm:$0xff]
        %v1348 = vld [vmem:[#allocation7 + $0xa8] sm:$0xff]
        %v1349 = vld [vmem:[#allocation7 + $0xb0] sm:$0xff]
        %v1350 = vld [vmem:[#allocation7 + $0xb8] sm:$0xff]
        %v1351 = vld [vmem:[#allocation7 + $0xc0] sm:$0xff]
        %v1352 = vld [vmem:[#allocation7 + $0xc8] sm:$0xff]
        %v1353 = vld [vmem:[#allocation7 + $0xd0] sm:$0xff]
        %v1354 = vld [vmem:[#allocation7 + $0xd8] sm:$0xff]
        %v1355 = vld [vmem:[#allocation7 + $0xe0] sm:$0xff]
        %v1356 = vld [vmem:[#allocation7 + $0xe8] sm:$0xff]
        %v1357 = vld [vmem:[#allocation7 + $0xf0] sm:$0xff]
        %v1358 = vld [vmem:[#allocation7 + $0xf8] sm:$0xff]
        %1359 = vmatprep.subr.mxu0 0.0
        %1360 = vmatpush1.msra.mxu0 %v1327
        %1361 = vmatprep.subr.mxu0 0.0
        %1362 = vmatpush1.msra.mxu0 %v1328
        %1363 = vmatprep.subr.mxu0 0.0
        %1364 = vmatpush1.msra.mxu0 %v1329
        %1365 = vmatprep.subr.mxu0 0.0
        %1366 = vmatpush1.msra.mxu0 %v1330
        %1367 = vmatprep.subr.mxu0 0.0
        %1368 = vmatpush1.msra.mxu0 %v1331
        %1369 = vmatprep.subr.mxu0 0.0
        %1370 = vmatpush1.msra.mxu0 %v1332
        %1371 = vmatprep.subr.mxu0 0.0
        %1372 = vmatpush1.msra.mxu0 %v1333
        %1373 = vmatprep.subr.mxu0 0.0
        %1374 = vmatpush1.msra.mxu0 %v1334
        %1375 = vmatprep.subr.mxu0 0.0
        %1376 = vmatpush1.msra.mxu0 %v1335
        %1377 = vmatprep.subr.mxu0 0.0
        %1378 = vmatpush1.msra.mxu0 %v1336
        %1379 = vmatprep.subr.mxu0 0.0
        %1380 = vmatpush1.msra.mxu0 %v1337
        %1381 = vmatprep.subr.mxu0 0.0
        %1382 = vmatpush1.msra.mxu0 %v1338
        %1383 = vmatprep.subr.mxu0 0.0
        %1384 = vmatpush1.msra.mxu0 %v1339
        %1385 = vmatprep.subr.mxu0 0.0
        %1386 = vmatpush1.msra.mxu0 %v1340
        %1387 = vmatprep.subr.mxu0 0.0
        %1388 = vmatpush1.msra.mxu0 %v1341
        %1389 = vmatprep.subr.mxu0 0.0
        %1390 = vmatpush1.msra.mxu0 %v1342
        %1391 = vmatprep.subr.mxu0 0.0
        %1392 = vmatpush1.msra.mxu0 %v1343
        %1393 = vmatprep.subr.mxu0 0.0
        %1394 = vmatpush1.msra.mxu0 %v1344
        %1395 = vmatprep.subr.mxu0 0.0
        %1396 = vmatpush1.msra.mxu0 %v1345
        %1397 = vmatprep.subr.mxu0 0.0
        %1398 = vmatpush1.msra.mxu0 %v1346
        %1399 = vmatprep.subr.mxu0 0.0
        %1400 = vmatpush1.msra.mxu0 %v1347
        %1401 = vmatprep.subr.mxu0 0.0
        %1402 = vmatpush1.msra.mxu0 %v1348
        %1403 = vmatprep.subr.mxu0 0.0
        %1404 = vmatpush1.msra.mxu0 %v1349
        %1405 = vmatprep.subr.mxu0 0.0
        %1406 = vmatpush1.msra.mxu0 %v1350
        %1407 = vmatprep.subr.mxu0 0.0
        %1408 = vmatpush1.msra.mxu0 %v1351
        %1409 = vmatprep.subr.mxu0 0.0
        %1410 = vmatpush1.msra.mxu0 %v1352
        %1411 = vmatprep.subr.mxu0 0.0
        %1412 = vmatpush1.msra.mxu0 %v1353
        %1413 = vmatprep.subr.mxu0 0.0
        %1414 = vmatpush1.msra.mxu0 %v1354
        %1415 = vmatprep.subr.mxu0 0.0
        %1416 = vmatpush1.msra.mxu0 %v1355
        %1417 = vmatprep.subr.mxu0 0.0
        %1418 = vmatpush1.msra.mxu0 %v1356
        %1419 = vmatprep.subr.mxu0 0.0
        %1420 = vmatpush1.msra.mxu0 %v1357
        %1421 = vmatprep.subr.mxu0 0.0
        %1422 = vmatpush1.msra.mxu0 %v1358
        %1423 = vmatprep.mubr.f32.mxu0 %v1326
        %1424 = vmatmul.mubr.f32.gmra.mrb[0].mxu0 %v1325
        %v1425 = vpop.f32.mrb[0].mxu0
        %v1426 = vadd.f32 0.0, %v1425
        %v1427 = vpop.f32.mrb[0].mxu0
        %1428 = vdwg.mxu0
        %v1429 = vadd.f32 %v1084, %v1426
        %1430 = vst [vmem:[%s426] sm:$0xff] %v1429
        %p1431 = scmp.lt.s32.totalorder %s25, 1
        %s1432 = scalar_select %p1431, %s25, 1
        %s1433 = smul.addr %s1432, 8
        %s1434 = scalar_lea.vmem %s11, %s1433
        // Predicated region
        $region77: #{gemma_forward.3} parent=63 // pred_check
          %p1435 = pneg %p279
        $region78: #{gemma_forward.3} parent=63 // pred_check_branch
          %1437 = sbr.rel (%p1435) target = $region80
        $region79: #{gemma_forward.3} parent=63 // pred_region
          _
        $region80: #{gemma_forward.3} parent=63 // pred_fallthru
          _
      $region64: #{gemma_forward.3} parent=5 // pred_fallthru
        _
      %p1438 = scmp.le.s32.totalorder 2, %s20
      // Predicated region
      $region81: #{gemma_forward.3} parent=5 // pred_check
        %p1439 = pneg %p1438
      $region82: #{gemma_forward.3} parent=5 // pred_check_branch
        %1441 = sbr.rel (%p1439) target = $region84
      $region83: #{gemma_forward.3} parent=5 // pred_region
        %s1442 = ssub.s32 %s20, 2
        // Predicated region
        $region85: #{gemma_forward.3} parent=83 // pred_check
          %p1443 = pneg %p285
        $region86: #{gemma_forward.3} parent=83 // pred_check_branch
          %1445 = sbr.rel (%p1443) target = $region88
        $region87: #{gemma_forward.3} parent=83 // pred_region
          %p1446 = scmp.lt.s32.totalorder %s26, 1
          %s1447 = scalar_select %p1446, %s26, 1
          %s1448 = smul.addr %s1447, 8
          %s1449 = scalar_lea.vmem %s11, %s1448
        $region88: #{gemma_forward.3} parent=83 // pred_fallthru
          _
      $region84: #{gemma_forward.3} parent=5 // pred_fallthru
        _
    $region6: #{gemma_forward.3} parent=1 // loop_footer
      %s24 = sadd.s32 1, %s20
    $region7: #{gemma_forward.3} parent=1 // loop_footer_branch
      %19 = sbr.rel target = $region3
    $region8: #{gemma_forward.3} parent=1 // loop_exit
      _
    %1450 = vsyncpa [#allocation4], 1
    %s1451 = scalar_lea.sflag [#allocation4], 1
    %1452 = vsyncpa %s1451, 1
    %1453 = vsyncpa [#allocation6], 1

</llo_original>
